<compile_context>
chip_gen: v7x
topology: tpu7x:2x2x1
jax: 0.10.0
libtpu: 0.0.40
codegen_flags: <defaults>
</compile_context>

<pallas_src>
import numpy as np
import jax
import jax.numpy as jnp
from jax.experimental import pallas as pl
from jax.experimental.pallas import tpu as pltpu

_SCAL_W = 128   # lane-dense width of the packed scalar output slab
_PG_PAD = 128   # pointgoal features zero-padded to one full MXU K tile


# ----------------------------------------------------------------------------
# Pallas kernel: both agents' forward passes + stage-based selection, fused.
# ----------------------------------------------------------------------------
def _two_agent_act_kernel(
    stage_ref,       # [T, 1]    int32  observations['episode_stage']
    masks_ref,       # [T, 1]    f32    not-done masks
    rgb_ref,         # [T, Drgb] f32    flattened rgb (0..255); /255 folded into weights
    pg_ref,          # [T, Dpg]  f32    zero-padded pointgoal
    h0_ref,          # [T, H]    f32    GRU hidden state (L=1, squeezed)
    w_enc_rgb_ref,   # [Drgb, 2H]       encoder weights, both agents fused on lanes
    w_enc_pg_ref,    # [Dpg, 2H]
    b_enc_ref,       # [1, 2H]   f32
    w_ih_ref,        # [2, H, 3H]
    b_ih_ref,        # [2, 1, 3H] f32
    w_hh_ref,        # [H, 6H]          both agents fused (masked h is shared)
    b_hh_ref,        # [1, 6H]   f32
    w_head_ref,      # [2, H, A+1]      actor|critic fused per agent
    b_head_ref,      # [2, 1, A+1] f32
    scal_out_ref,    # [T, 128]  f32    col0=value, col1=logp, col2=action
    hidden_out_ref,  # [T, H]    f32
):
    f32 = jnp.float32
    T, H = h0_ref.shape
    A = b_head_ref.shape[-1] - 1
    mx_dtype = w_hh_ref.dtype   # MXU input dtype (f32 or bf16); accumulation stays f32

    masks = masks_ref[...]                           # [T, 1]
    stage = stage_ref[...]                           # [T, 1]

    # --- fused observation encoder for BOTH agents (obs is shared) -----------
    x_all = (
        jnp.dot(rgb_ref[...].astype(mx_dtype), w_enc_rgb_ref[...],
                preferred_element_type=f32)
        + jnp.dot(pg_ref[...].astype(mx_dtype), w_enc_pg_ref[...],
                  preferred_element_type=f32)
        + b_enc_ref[...]
    )                                                # [T, 2H]
    x_all = jnp.maximum(x_all, 0.0)

    # --- masked hidden state (RNNStateEncoder: h = h * masks), shared --------
    h = h0_ref[...] * masks                          # [T, H] f32
    gh_all = (jnp.dot(h.astype(mx_dtype), w_hh_ref[...],
                      preferred_element_type=f32)
              + b_hh_ref[...])                       # [T, 6H], both agents

    per_agent = []
    for a in range(2):   # static unroll: agent1, agent2 (state1 == state2: 'trained')
        x_a = x_all[:, a * H:(a + 1) * H]            # lane-aligned (H % 128 == 0)
        gi = (jnp.dot(x_a.astype(mx_dtype), w_ih_ref[a],
                      preferred_element_type=f32)
              + b_ih_ref[a])                         # [T, 3H]
        gh = gh_all[:, a * 3 * H:(a + 1) * 3 * H]    # [T, 3H] lane-aligned

        # gate slices at lane offsets 0, H, 2H (all multiples of 128) — pure VPU/EUP
        r = jax.nn.sigmoid(gi[:, 0:H] + gh[:, 0:H])
        z = jax.nn.sigmoid(gi[:, H:2 * H] + gh[:, H:2 * H])
        n = jnp.tanh(gi[:, 2 * H:3 * H] + r * gh[:, 2 * H:3 * H])
        h_new = (1.0 - z) * n + z * h                # [T, H] f32

        # --- fused actor/critic head: [wact | wcrit] ---
        head = (jnp.dot(h_new.astype(mx_dtype), w_head_ref[a],
                        preferred_element_type=f32)
                + b_head_ref[a])                     # [T, A+1]
        logits = head[:, 0:A]                        # [T, A]
        value = head[:, A:A + 1]                     # [T, 1]

        # deterministic action: argmax (first max on ties, matches jnp.argmax)
        iota_a = jax.lax.broadcasted_iota(jnp.int32, logits.shape, 1)
        mx = jnp.max(logits, axis=-1, keepdims=True)
        cand = jnp.where(logits >= mx, iota_a, jnp.int32(A))
        action = jnp.min(cand, axis=-1, keepdims=True)              # [T, 1] int32

        # log-prob of the chosen action (log-softmax gather)
        lse = mx + jnp.log(jnp.sum(jnp.exp(logits - mx), axis=-1, keepdims=True))
        logp = jnp.sum(jnp.where(iota_a == action, logits - lse, 0.0),
                       axis=-1, keepdims=True)                      # [T, 1]

        per_agent.append((value, action.astype(f32), logp, h_new))

    # --- TwoAgentPolicy.act stage selection: torch.where(stage == 0, a1, a2) --
    is0 = stage == 0                                 # [T, 1], shared by all selects
    v1, a1f, lp1, h1 = per_agent[0]
    v2, a2f, lp2, h2 = per_agent[1]
    value = jnp.where(is0, v1, v2)
    act_f = jnp.where(is0, a1f, a2f)
    logp = jnp.where(is0, lp1, lp2)
    hidden_out_ref[...] = jnp.where(is0, h1, h2)     # [T, H]

    # lane-dense scalar slab: one unmasked full-vreg store instead of 3x [T,1]
    lane = jax.lax.broadcasted_iota(jnp.int32, (T, _SCAL_W), 1)
    scal_out_ref[...] = (value * (lane == 0).astype(f32)
                         + logp * (lane == 1).astype(f32)
                         + act_f * (lane == 2).astype(f32))


# ----------------------------------------------------------------------------
# Wrapper: batch-tiled grid, weights VMEM-resident via constant index_maps.
# ----------------------------------------------------------------------------
def two_agent_act(packed, observations, rnn_hidden_states, prev_actions, masks,
                  *, tile_n=8):
    """Equivalent of TwoAgentPolicy.act(..., deterministic=True),
    stage_2_state_type='trained'."""
    del prev_actions  # only used by build_hidden for 'random'/'zero' modes
    f32 = jnp.float32
    n = masks.shape[0]

    # rgb flatten is a metadata-only reshape; /255 is folded into w_enc_rgb.
    rgb_flat = observations["rgb"].reshape(n, -1).astype(f32)
    d_pg_pad = packed["w_enc_pg"].shape[0]
    pg = observations["pointgoal"].astype(f32)
    pg = jnp.pad(pg, ((0, 0), (0, d_pg_pad - pg.shape[1])))
    stage = observations["episode_stage"].astype(jnp.int32)
    masks = masks.astype(f32)

    L, _, H = rnn_hidden_states.shape
    assert L == 1  # TODO(synk): multi-layer recurrent state not modeled by the surrogate
    h0 = rnn_hidden_states[0].astype(f32)            # [N, H]  (L squeezed)

    # pad batch to a multiple of the tile
    n_pad = pl.cdiv(n, tile_n) * tile_n
    if n_pad != n:
        padn = lambda x: jnp.pad(x, ((0, n_pad - n),) + ((0, 0),) * (x.ndim - 1))
        stage, masks, rgb_flat, pg, h0 = map(padn, (stage, masks, rgb_flat, pg, h0))

    grid = (n_pad // tile_n,)

    def row_spec(width):                 # batch-tiled activations
        return pl.BlockSpec((tile_n, width), lambda i: (i, 0))

    def const_spec(shape):               # weights: same block every step -> VMEM-resident
        nd = len(shape)
        return pl.BlockSpec(shape, lambda i, _nd=nd: (0,) * _nd)

    in_specs = [
        row_spec(1), row_spec(1),
        row_spec(rgb_flat.shape[1]), row_spec(pg.shape[1]), row_spec(H),
        const_spec(packed["w_enc_rgb"].shape), const_spec(packed["w_enc_pg"].shape),
        const_spec(packed["b_enc"].shape),
        const_spec(packed["w_ih"].shape), const_spec(packed["b_ih"].shape),
        const_spec(packed["w_hh"].shape), const_spec(packed["b_hh"].shape),
        const_spec(packed["w_head"].shape), const_spec(packed["b_head"].shape),
    ]
    out_specs = (row_spec(_SCAL_W), row_spec(H))
    out_shape = (jax.ShapeDtypeStruct((n_pad, _SCAL_W), f32),
                 jax.ShapeDtypeStruct((n_pad, H), f32))

    slab, h_new = pl.pallas_call(
        _two_agent_act_kernel,
        grid=grid,
        in_specs=in_specs,
        out_specs=out_specs,
        out_shape=out_shape,
        compiler_params=pltpu.CompilerParams(
            dimension_semantics=("parallel",)),     # megacore on v7x; no-op on v5e/v6e
    )(stage, masks, rgb_flat, pg, h0,
      packed["w_enc_rgb"], packed["w_enc_pg"], packed["b_enc"],
      packed["w_ih"], packed["b_ih"], packed["w_hh"], packed["b_hh"],
      packed["w_head"], packed["b_head"])

    value = slab[:n, 0:1]
    logp = slab[:n, 1:2]
    action = slab[:n, 2:3].astype(jnp.int32)
    hidden = h_new[:n][None]                         # [1, N, H]
    return value, action, logp, hidden


# ----------------------------------------------------------------------------
# Parameter generation (per-agent, like the module) and fusion-friendly packing.
# ----------------------------------------------------------------------------
def init_raw_params(key, d_in, hidden, n_act, n_agents=2):
    ks = jax.random.split(key, 5)
    scl = lambda k, shape, s: jax.random.normal(k, shape, jnp.float32) * s
    return dict(
        we=scl(ks[0], (n_agents, d_in, hidden), 0.1),
        be=jnp.zeros((n_agents, hidden), jnp.float32),
        wih=scl(ks[1], (n_agents, hidden, 3 * hidden), 0.1),
        whh=scl(ks[2], (n_agents, hidden, 3 * hidden), 0.1),
        bih=jnp.zeros((n_agents, 3 * hidden), jnp.float32),
        bhh=jnp.zeros((n_agents, 3 * hidden), jnp.float32),
        wact=scl(ks[3], (n_agents, hidden, n_act), 0.2),
        bact=jnp.zeros((n_agents, n_act), jnp.float32),
        wcrit=scl(ks[4], (n_agents, hidden, 1), 0.2),
        bcrit=jnp.zeros((n_agents, 1), jnp.float32),
    )


def pack_params(raw, d_rgb, mxu_dtype=jnp.float32):
    """One-time fusion of shared-operand matmul weights + /255 fold + dtype cast."""
    f32 = jnp.float32
    d_in = raw["we"].shape[1]
    scale = jnp.concatenate([jnp.full((d_rgb, 1), 1.0 / 255.0, f32),
                             jnp.ones((d_in - d_rgb, 1), f32)], axis=0)
    we = raw["we"] * scale[None]                                   # fold /255 into rgb rows

    w_enc = jnp.concatenate([we[0], we[1]], axis=-1)               # [D, 2H]
    w_enc_rgb = w_enc[:d_rgb]
    w_enc_pg = w_enc[d_rgb:]
    w_enc_pg = jnp.pad(w_enc_pg, ((0, _PG_PAD - w_enc_pg.shape[0]), (0, 0)))

    cast = lambda w: w.astype(mxu_dtype)
    return dict(
        w_enc_rgb=cast(w_enc_rgb),
        w_enc_pg=cast(w_enc_pg),
        b_enc=jnp.concatenate([raw["be"][0], raw["be"][1]], -1)[None].astype(f32),
        w_ih=cast(raw["wih"]),                                     # [2, H, 3H]
        b_ih=raw["bih"][:, None, :].astype(f32),                   # [2, 1, 3H]
        w_hh=cast(jnp.concatenate([raw["whh"][0], raw["whh"][1]], -1)),   # [H, 6H]
        b_hh=jnp.concatenate([raw["bhh"][0], raw["bhh"][1]], -1)[None].astype(f32),
        w_head=cast(jnp.concatenate([raw["wact"], raw["wcrit"]], -1)),    # [2, H, A+1]
        b_head=jnp.concatenate([raw["bact"], raw["bcrit"]], -1)[:, None, :].astype(f32),
    )


# ----------------------------------------------------------------------------
# Pure-JAX reference (same packed weights, same math) for correctness checking.
# ----------------------------------------------------------------------------
def two_agent_act_ref(packed, observations, rnn_hidden_states, prev_actions, masks):
    del prev_actions
    f32 = jnp.float32
    n = masks.shape[0]
    mx_dtype = packed["w_hh"].dtype
    H = rnn_hidden_states.shape[-1]
    A = packed["b_head"].shape[-1] - 1

    rgb = observations["rgb"].reshape(n, -1).astype(f32).astype(mx_dtype)
    d_pg_pad = packed["w_enc_pg"].shape[0]
    pg = observations["pointgoal"].astype(f32)
    pg = jnp.pad(pg, ((0, 0), (0, d_pg_pad - pg.shape[1]))).astype(mx_dtype)
    stage = observations["episode_stage"].astype(jnp.int32)
    masks = masks.astype(f32)
    h0 = rnn_hidden_states[0].astype(f32)

    x_all = (jnp.dot(rgb, packed["w_enc_rgb"], preferred_element_type=f32)
             + jnp.dot(pg, packed["w_enc_pg"], preferred_element_type=f32)
             + packed["b_enc"])
    x_all = jnp.maximum(x_all, 0.0)
    h = h0 * masks
    gh_all = (jnp.dot(h.astype(mx_dtype), packed["w_hh"], preferred_element_type=f32)
              + packed["b_hh"])

    outs = []
    for a in range(2):
        x_a = x_all[:, a * H:(a + 1) * H]
        gi = (jnp.dot(x_a.astype(mx_dtype), packed["w_ih"][a], preferred_element_type=f32)
              + packed["b_ih"][a])
        gh = gh_all[:, a * 3 * H:(a + 1) * 3 * H]
        r = jax.nn.sigmoid(gi[:, :H] + gh[:, :H])
        z = jax.nn.sigmoid(gi[:, H:2 * H] + gh[:, H:2 * H])
        ncell = jnp.tanh(gi[:, 2 * H:] + r * gh[:, 2 * H:])
        h_new = (1.0 - z) * ncell + z * h
        head = (jnp.dot(h_new.astype(mx_dtype), packed["w_head"][a],
                        preferred_element_type=f32) + packed["b_head"][a])
        logits = head[:, :A]
        value = head[:, A:A + 1]
        action = jnp.argmax(logits, axis=-1).astype(jnp.int32)[:, None]
        logp = jnp.take_along_axis(jax.nn.log_softmax(logits, axis=-1), action, axis=-1)
        outs.append((value, action, logp, h_new))

    is0 = stage == 0
    value = jnp.where(is0, outs[0][0], outs[1][0])
    action = jnp.where(is0, outs[0][1], outs[1][1])
    logp = jnp.where(is0, outs[0][2], outs[1][2])
    hidden = jnp.where(is0[None], outs[0][3][None], outs[1][3][None])
    return value, action, logp, hidden


if __name__ == "__main__":
    N, C, S = 16, 3, 16                  # batch, channels, spatial
    HIDDEN, N_ACT, L = 128, 4, 1         # H multiple of 128 -> lane-aligned gate slices
    D_RGB = C * S * S                    # 768
    D_IN = D_RGB + 2                     # flattened rgb + pointgoal

    key = jax.random.PRNGKey(0)
    kp, k1, k2, k3, k4, k5 = jax.random.split(key, 6)
    raw = init_raw_params(kp, D_IN, HIDDEN, N_ACT)

    observations = {
        "rgb": jax.random.uniform(k1, (N, C, S, S), jnp.float32, 0.0, 255.0),  # NCHW
        "pointgoal": jax.random.normal(k2, (N, 2), jnp.float32),
        "episode_stage": (jax.random.uniform(k3, (N, 1)) > 0.5).astype(jnp.int32),
    }
    rnn_hidden_states = jax.random.normal(k4, (L, N, HIDDEN), jnp.float32)
    prev_actions = jax.random.randint(k5, (N, 1), 0, N_ACT, jnp.int32)
    masks = jnp.ones((N, 1), jnp.float32)

    # ---------------- float32 MXU path: strict correctness check -------------
    packed_f32 = pack_params(raw, D_RGB, mxu_dtype=jnp.float32)
    value, action, logp, hidden_out = jax.block_until_ready(
        two_agent_act(packed_f32, observations, rnn_hidden_states, prev_actions, masks))
    v_r, a_r, lp_r, h_r = jax.block_until_ready(
        two_agent_act_ref(packed_f32, observations, rnn_hidden_states, prev_actions, masks))

    assert value.shape == (N, 1) and action.shape == (N, 1)
    assert logp.shape == (N, 1) and hidden_out.shape == (L, N, HIDDEN)
    np.testing.assert_allclose(np.asarray(value), np.asarray(v_r), rtol=1e-5, atol=1e-5)
    np.testing.assert_array_equal(np.asarray(action), np.asarray(a_r))
    np.testing.assert_allclose(np.asarray(logp), np.asarray(lp_r), rtol=1e-5, atol=1e-5)
    np.testing.assert_allclose(np.asarray(hidden_out), np.asarray(h_r), rtol=1e-5, atol=1e-5)

    # ------- bf16 MXU path (v6e/v7x fast path): loose numerical check --------
    packed_bf16 = pack_params(raw, D_RGB, mxu_dtype=jnp.bfloat16)
    v_b, a_b, lp_b, h_b = jax.block_until_ready(
        two_agent_act(packed_bf16, observations, rnn_hidden_states, prev_actions, masks))
    v_br, a_br, lp_br, h_br = jax.block_until_ready(
        two_agent_act_ref(packed_bf16, observations, rnn_hidden_states, prev_actions, masks))
    assert a_b.shape == (N, 1)
    np.testing.assert_allclose(np.asarray(v_b), np.asarray(v_br), rtol=5e-2, atol=5e-2)
    np.testing.assert_allclose(np.asarray(lp_b), np.asarray(lp_br), rtol=5e-2, atol=5e-2)
    np.testing.assert_allclose(np.asarray(h_b), np.asarray(h_br), rtol=5e-2, atol=5e-2)
    # (bf16 actions not asserted bit-exact: argmax may flip on near-tied logits)

    print("KERNEL_OK")
</pallas_src>

<mosaic_0001>
module attributes {stable_mosaic.version = 11 : i64} {
  func.func @_two_agent_act_kernel(%arg0: i32, %arg1: memref<8x1xi32, #tpu.memory_space<vmem>>, %arg2: memref<8x1xf32, #tpu.memory_space<vmem>>, %arg3: memref<8x768xf32, #tpu.memory_space<vmem>>, %arg4: memref<8x128xf32, #tpu.memory_space<vmem>>, %arg5: memref<8x128xf32, #tpu.memory_space<vmem>>, %arg6: memref<768x256xf32, #tpu.memory_space<vmem>>, %arg7: memref<128x256xf32, #tpu.memory_space<vmem>>, %arg8: memref<1x256xf32, #tpu.memory_space<vmem>>, %arg9: memref<2x128x384xf32, #tpu.memory_space<vmem>>, %arg10: memref<2x1x384xf32, #tpu.memory_space<vmem>>, %arg11: memref<128x768xf32, #tpu.memory_space<vmem>>, %arg12: memref<1x768xf32, #tpu.memory_space<vmem>>, %arg13: memref<2x128x5xf32, #tpu.memory_space<vmem>>, %arg14: memref<2x1x5xf32, #tpu.memory_space<vmem>>, %arg15: memref<8x128xf32, #tpu.memory_space<vmem>>, %arg16: memref<8x128xf32, #tpu.memory_space<vmem>>) attributes {dimension_semantics = [#tpu.dimension_semantics<parallel>], iteration_bounds = array<i64: 2>, scalar_prefetch = 0 : i64, scratch_operands = 0 : i64, tpu.core_type = #tpu.core_type<tc>, window_params = [{transform_indices = @transform_0, window_bounds = array<i64: 8, 1>}, {transform_indices = @transform_1, window_bounds = array<i64: 8, 1>}, {transform_indices = @transform_2, window_bounds = array<i64: 8, 768>}, {transform_indices = @transform_3, window_bounds = array<i64: 8, 128>}, {transform_indices = @transform_4, window_bounds = array<i64: 8, 128>}, {pipeline_mode = #tpu.pipeline_mode<synchronous>, transform_indices = @transform_5, window_bounds = array<i64: 768, 256>}, {pipeline_mode = #tpu.pipeline_mode<synchronous>, transform_indices = @transform_6, window_bounds = array<i64: 128, 256>}, {pipeline_mode = #tpu.pipeline_mode<synchronous>, transform_indices = @transform_7, window_bounds = array<i64: 1, 256>}, {pipeline_mode = #tpu.pipeline_mode<synchronous>, transform_indices = @transform_8, window_bounds = array<i64: 2, 128, 384>}, {pipeline_mode = #tpu.pipeline_mode<synchronous>, transform_indices = @transform_9, window_bounds = array<i64: 2, 1, 384>}, {pipeline_mode = #tpu.pipeline_mode<synchronous>, transform_indices = @transform_10, window_bounds = array<i64: 128, 768>}, {pipeline_mode = #tpu.pipeline_mode<synchronous>, transform_indices = @transform_11, window_bounds = array<i64: 1, 768>}, {pipeline_mode = #tpu.pipeline_mode<synchronous>, transform_indices = @transform_12, window_bounds = array<i64: 2, 128, 5>}, {pipeline_mode = #tpu.pipeline_mode<synchronous>, transform_indices = @transform_13, window_bounds = array<i64: 2, 1, 5>}, {transform_indices = @transform_14, window_bounds = array<i64: 8, 128>}, {transform_indices = @transform_15, window_bounds = array<i64: 8, 128>}]} {
    %c0 = arith.constant 0 : index
    %c0_0 = arith.constant 0 : index
    %0 = vector.load %arg2[%c0, %c0_0] : memref<8x1xf32, #tpu.memory_space<vmem>>, vector<8x1xf32>
    %c0_1 = arith.constant 0 : index
    %c0_2 = arith.constant 0 : index
    %1 = vector.load %arg1[%c0_1, %c0_2] : memref<8x1xi32, #tpu.memory_space<vmem>>, vector<8x1xi32>
    %c0_3 = arith.constant 0 : index
    %c0_4 = arith.constant 0 : index
    %2 = vector.load %arg3[%c0_3, %c0_4] : memref<8x768xf32, #tpu.memory_space<vmem>>, vector<8x768xf32>
    %c0_5 = arith.constant 0 : index
    %c0_6 = arith.constant 0 : index
    %3 = vector.load %arg6[%c0_5, %c0_6] : memref<768x256xf32, #tpu.memory_space<vmem>>, vector<768x256xf32>
    %cst = arith.constant dense<0.000000e+00> : vector<8x256xf32>
    %4 = tpu.matmul %2, %3, %cst {dimension_numbers = #tpu.dot_dimension_numbers<[1], [0], [0], [1], [0, 0, 1, 1], [], []>} : vector<8x768xf32>, vector<768x256xf32>, vector<8x256xf32> -> vector<8x256xf32>
    %c0_7 = arith.constant 0 : index
    %c0_8 = arith.constant 0 : index
    %5 = vector.load %arg4[%c0_7, %c0_8] : memref<8x128xf32, #tpu.memory_space<vmem>>, vector<8x128xf32>
    %c0_9 = arith.constant 0 : index
    %c0_10 = arith.constant 0 : index
    %6 = vector.load %arg7[%c0_9, %c0_10] : memref<128x256xf32, #tpu.memory_space<vmem>>, vector<128x256xf32>
    %cst_11 = arith.constant dense<0.000000e+00> : vector<8x256xf32>
    %7 = tpu.matmul %5, %6, %cst_11 {dimension_numbers = #tpu.dot_dimension_numbers<[1], [0], [0], [1], [0, 0, 1, 1], [], []>} : vector<8x128xf32>, vector<128x256xf32>, vector<8x256xf32> -> vector<8x256xf32>
    %8 = arith.addf %4, %7 : vector<8x256xf32>
    %c0_12 = arith.constant 0 : index
    %c0_13 = arith.constant 0 : index
    %9 = vector.load %arg8[%c0_12, %c0_13] : memref<1x256xf32, #tpu.memory_space<vmem>>, vector<1x256xf32>
    %10 = vector.broadcast %9 : vector<1x256xf32> to vector<8x256xf32>
    %11 = arith.addf %8, %10 : vector<8x256xf32>
    %cst_14 = arith.constant 0.000000e+00 : f32
    %12 = vector.broadcast %cst_14 : f32 to vector<8x256xf32>
    %13 = arith.maximumf %11, %12 : vector<8x256xf32>
    %c0_15 = arith.constant 0 : index
    %c0_16 = arith.constant 0 : index
    %14 = vector.load %arg5[%c0_15, %c0_16] : memref<8x128xf32, #tpu.memory_space<vmem>>, vector<8x128xf32>
    %15 = vector.broadcast %0 : vector<8x1xf32> to vector<8x128xf32>
    %16 = arith.mulf %14, %15 : vector<8x128xf32>
    %c0_17 = arith.constant 0 : index
    %c0_18 = arith.constant 0 : index
    %17 = vector.load %arg11[%c0_17, %c0_18] : memref<128x768xf32, #tpu.memory_space<vmem>>, vector<128x768xf32>
    %cst_19 = arith.constant dense<0.000000e+00> : vector<8x768xf32>
    %18 = tpu.matmul %16, %17, %cst_19 {dimension_numbers = #tpu.dot_dimension_numbers<[1], [0], [0], [1], [0, 0, 1, 1], [], []>} : vector<8x128xf32>, vector<128x768xf32>, vector<8x768xf32> -> vector<8x768xf32>
    %c0_20 = arith.constant 0 : index
    %c0_21 = arith.constant 0 : index
    %19 = vector.load %arg12[%c0_20, %c0_21] : memref<1x768xf32, #tpu.memory_space<vmem>>, vector<1x768xf32>
    %20 = vector.broadcast %19 : vector<1x768xf32> to vector<8x768xf32>
    %21 = arith.addf %18, %20 : vector<8x768xf32>
    %22 = vector.extract_strided_slice %13 {offsets = [0, 0], sizes = [8, 128], strides = [1, 1]} : vector<8x256xf32> to vector<8x128xf32>
    %c0_22 = arith.constant 0 : index
    %c0_23 = arith.constant 0 : index
    %c0_24 = arith.constant 0 : index
    %23 = vector.load %arg9[%c0_22, %c0_23, %c0_24] : memref<2x128x384xf32, #tpu.memory_space<vmem>>, vector<1x128x384xf32>
    %24 = vector.shape_cast %23 : vector<1x128x384xf32> to vector<128x384xf32>
    %cst_25 = arith.constant dense<0.000000e+00> : vector<8x384xf32>
    %25 = tpu.matmul %22, %24, %cst_25 {dimension_numbers = #tpu.dot_dimension_numbers<[1], [0], [0], [1], [0, 0, 1, 1], [], []>} : vector<8x128xf32>, vector<128x384xf32>, vector<8x384xf32> -> vector<8x384xf32>
    %c0_26 = arith.constant 0 : index
    %c0_27 = arith.constant 0 : index
    %c0_28 = arith.constant 0 : index
    %26 = vector.load %arg10[%c0_26, %c0_27, %c0_28] : memref<2x1x384xf32, #tpu.memory_space<vmem>>, vector<1x1x384xf32>
    %27 = vector.shape_cast %26 : vector<1x1x384xf32> to vector<1x384xf32>
    %28 = vector.broadcast %27 : vector<1x384xf32> to vector<8x384xf32>
    %29 = arith.addf %25, %28 : vector<8x384xf32>
    %30 = vector.extract_strided_slice %21 {offsets = [0, 0], sizes = [8, 384], strides = [1, 1]} : vector<8x768xf32> to vector<8x384xf32>
    %31 = vector.extract_strided_slice %29 {offsets = [0, 0], sizes = [8, 128], strides = [1, 1]} : vector<8x384xf32> to vector<8x128xf32>
    %32 = vector.extract_strided_slice %30 {offsets = [0, 0], sizes = [8, 128], strides = [1, 1]} : vector<8x384xf32> to vector<8x128xf32>
    %33 = arith.addf %31, %32 : vector<8x128xf32>
    %34 = arith.negf %33 : vector<8x128xf32>
    %35 = math.exp %34 : vector<8x128xf32>
    %cst_29 = arith.constant 1.000000e+00 : f32
    %36 = vector.broadcast %cst_29 : f32 to vector<8x128xf32>
    %37 = arith.addf %36, %35 : vector<8x128xf32>
    %38 = arith.divf %36, %37 : vector<8x128xf32>
    %39 = vector.extract_strided_slice %29 {offsets = [0, 128], sizes = [8, 128], strides = [1, 1]} : vector<8x384xf32> to vector<8x128xf32>
    %40 = vector.extract_strided_slice %30 {offsets = [0, 128], sizes = [8, 128], strides = [1, 1]} : vector<8x384xf32> to vector<8x128xf32>
    %41 = arith.addf %39, %40 : vector<8x128xf32>
    %42 = arith.negf %41 : vector<8x128xf32>
    %43 = math.exp %42 : vector<8x128xf32>
    %cst_30 = arith.constant 1.000000e+00 : f32
    %44 = vector.broadcast %cst_30 : f32 to vector<8x128xf32>
    %45 = arith.addf %44, %43 : vector<8x128xf32>
    %46 = arith.divf %44, %45 : vector<8x128xf32>
    %47 = vector.extract_strided_slice %29 {offsets = [0, 256], sizes = [8, 128], strides = [1, 1]} : vector<8x384xf32> to vector<8x128xf32>
    %48 = vector.extract_strided_slice %30 {offsets = [0, 256], sizes = [8, 128], strides = [1, 1]} : vector<8x384xf32> to vector<8x128xf32>
    %49 = arith.mulf %38, %48 : vector<8x128xf32>
    %50 = arith.addf %47, %49 : vector<8x128xf32>
    %51 = math.tanh %50 : vector<8x128xf32>
    %cst_31 = arith.constant 1.000000e+00 : f32
    %52 = vector.broadcast %cst_31 : f32 to vector<8x128xf32>
    %53 = arith.subf %52, %46 : vector<8x128xf32>
    %54 = arith.mulf %53, %51 : vector<8x128xf32>
    %55 = arith.mulf %46, %16 : vector<8x128xf32>
    %56 = arith.addf %54, %55 : vector<8x128xf32>
    %c0_32 = arith.constant 0 : index
    %c0_33 = arith.constant 0 : index
    %c0_34 = arith.constant 0 : index
    %57 = vector.load %arg13[%c0_32, %c0_33, %c0_34] : memref<2x128x5xf32, #tpu.memory_space<vmem>>, vector<1x128x5xf32>
    %58 = vector.shape_cast %57 : vector<1x128x5xf32> to vector<128x5xf32>
    %cst_35 = arith.constant dense<0.000000e+00> : vector<8x5xf32>
    %59 = tpu.matmul %56, %58, %cst_35 {dimension_numbers = #tpu.dot_dimension_numbers<[1], [0], [0], [1], [0, 0, 1, 1], [], []>} : vector<8x128xf32>, vector<128x5xf32>, vector<8x5xf32> -> vector<8x5xf32>
    %c0_36 = arith.constant 0 : index
    %c0_37 = arith.constant 0 : index
    %c0_38 = arith.constant 0 : index
    %60 = vector.load %arg14[%c0_36, %c0_37, %c0_38] : memref<2x1x5xf32, #tpu.memory_space<vmem>>, vector<1x1x5xf32>
    %61 = vector.shape_cast %60 : vector<1x1x5xf32> to vector<1x5xf32>
    %62 = vector.broadcast %61 : vector<1x5xf32> to vector<8x5xf32>
    %63 = arith.addf %59, %62 : vector<8x5xf32>
    %64 = vector.extract_strided_slice %63 {offsets = [0, 0], sizes = [8, 4], strides = [1, 1]} : vector<8x5xf32> to vector<8x4xf32>
    %65 = vector.extract_strided_slice %63 {offsets = [0, 4], sizes = [8, 1], strides = [1, 1]} : vector<8x5xf32> to vector<8x1xf32>
    %66 = tpu.iota {dimensions = array<i32: 1>} : vector<8x4xi32>
    %cst_39 = arith.constant dense<0xFF800000> : vector<8xf32>
    %67 = vector.multi_reduction <maximumf>, %64, %cst_39 [1] : vector<8x4xf32> to vector<8xf32>
    %68 = vector.shape_cast %67 : vector<8xf32> to vector<8x1xf32>
    %69 = vector.broadcast %68 : vector<8x1xf32> to vector<8x4xf32>
    %70 = arith.cmpf oge, %64, %69 : vector<8x4xf32>
    %c4_i32 = arith.constant 4 : i32
    %71 = vector.broadcast %c4_i32 : i32 to vector<8x4xi32>
    %72 = arith.select %70, %66, %71 : vector<8x4xi1>, vector<8x4xi32>
    %cst_40 = arith.constant dense<2147483647> : vector<8xi32>
    %73 = vector.multi_reduction <minsi>, %72, %cst_40 [1] : vector<8x4xi32> to vector<8xi32>
    %74 = vector.shape_cast %73 : vector<8xi32> to vector<8x1xi32>
    %75 = vector.broadcast %68 : vector<8x1xf32> to vector<8x4xf32>
    %76 = arith.subf %64, %75 : vector<8x4xf32>
    %77 = math.exp %76 : vector<8x4xf32>
    %cst_41 = arith.constant dense<0.000000e+00> : vector<8xf32>
    %78 = vector.multi_reduction <add>, %77, %cst_41 [1] : vector<8x4xf32> to vector<8xf32>
    %79 = vector.shape_cast %78 : vector<8xf32> to vector<8x1xf32>
    %80 = math.log %79 : vector<8x1xf32>
    %81 = arith.addf %68, %80 : vector<8x1xf32>
    %82 = vector.broadcast %74 : vector<8x1xi32> to vector<8x4xi32>
    %83 = arith.cmpi eq, %66, %82 : vector<8x4xi32>
    %84 = vector.broadcast %81 : vector<8x1xf32> to vector<8x4xf32>
    %85 = arith.subf %64, %84 : vector<8x4xf32>
    %cst_42 = arith.constant 0.000000e+00 : f32
    %86 = vector.broadcast %cst_42 : f32 to vector<8x4xf32>
    %87 = arith.select %83, %85, %86 : vector<8x4xi1>, vector<8x4xf32>
    %cst_43 = arith.constant dense<0.000000e+00> : vector<8xf32>
    %88 = vector.multi_reduction <add>, %87, %cst_43 [1] : vector<8x4xf32> to vector<8xf32>
    %89 = vector.shape_cast %88 : vector<8xf32> to vector<8x1xf32>
    %90 = arith.sitofp %74 : vector<8x1xi32> to vector<8x1xf32>
    %91 = vector.extract_strided_slice %13 {offsets = [0, 128], sizes = [8, 128], strides = [1, 1]} : vector<8x256xf32> to vector<8x128xf32>
    %c1 = arith.constant 1 : index
    %c0_44 = arith.constant 0 : index
    %c0_45 = arith.constant 0 : index
    %92 = vector.load %arg9[%c1, %c0_44, %c0_45] : memref<2x128x384xf32, #tpu.memory_space<vmem>>, vector<1x128x384xf32>
    %93 = vector.shape_cast %92 : vector<1x128x384xf32> to vector<128x384xf32>
    %cst_46 = arith.constant dense<0.000000e+00> : vector<8x384xf32>
    %94 = tpu.matmul %91, %93, %cst_46 {dimension_numbers = #tpu.dot_dimension_numbers<[1], [0], [0], [1], [0, 0, 1, 1], [], []>} : vector<8x128xf32>, vector<128x384xf32>, vector<8x384xf32> -> vector<8x384xf32>
    %c1_47 = arith.constant 1 : index
    %c0_48 = arith.constant 0 : index
    %c0_49 = arith.constant 0 : index
    %95 = vector.load %arg10[%c1_47, %c0_48, %c0_49] : memref<2x1x384xf32, #tpu.memory_space<vmem>>, vector<1x1x384xf32>
    %96 = vector.shape_cast %95 : vector<1x1x384xf32> to vector<1x384xf32>
    %97 = vector.broadcast %96 : vector<1x384xf32> to vector<8x384xf32>
    %98 = arith.addf %94, %97 : vector<8x384xf32>
    %99 = vector.extract_strided_slice %21 {offsets = [0, 384], sizes = [8, 384], strides = [1, 1]} : vector<8x768xf32> to vector<8x384xf32>
    %100 = vector.extract_strided_slice %98 {offsets = [0, 0], sizes = [8, 128], strides = [1, 1]} : vector<8x384xf32> to vector<8x128xf32>
    %101 = vector.extract_strided_slice %99 {offsets = [0, 0], sizes = [8, 128], strides = [1, 1]} : vector<8x384xf32> to vector<8x128xf32>
    %102 = arith.addf %100, %101 : vector<8x128xf32>
    %103 = arith.negf %102 : vector<8x128xf32>
    %104 = math.exp %103 : vector<8x128xf32>
    %cst_50 = arith.constant 1.000000e+00 : f32
    %105 = vector.broadcast %cst_50 : f32 to vector<8x128xf32>
    %106 = arith.addf %105, %104 : vector<8x128xf32>
    %107 = arith.divf %105, %106 : vector<8x128xf32>
    %108 = vector.extract_strided_slice %98 {offsets = [0, 128], sizes = [8, 128], strides = [1, 1]} : vector<8x384xf32> to vector<8x128xf32>
    %109 = vector.extract_strided_slice %99 {offsets = [0, 128], sizes = [8, 128], strides = [1, 1]} : vector<8x384xf32> to vector<8x128xf32>
    %110 = arith.addf %108, %109 : vector<8x128xf32>
    %111 = arith.negf %110 : vector<8x128xf32>
    %112 = math.exp %111 : vector<8x128xf32>
    %cst_51 = arith.constant 1.000000e+00 : f32
    %113 = vector.broadcast %cst_51 : f32 to vector<8x128xf32>
    %114 = arith.addf %113, %112 : vector<8x128xf32>
    %115 = arith.divf %113, %114 : vector<8x128xf32>
    %116 = vector.extract_strided_slice %98 {offsets = [0, 256], sizes = [8, 128], strides = [1, 1]} : vector<8x384xf32> to vector<8x128xf32>
    %117 = vector.extract_strided_slice %99 {offsets = [0, 256], sizes = [8, 128], strides = [1, 1]} : vector<8x384xf32> to vector<8x128xf32>
    %118 = arith.mulf %107, %117 : vector<8x128xf32>
    %119 = arith.addf %116, %118 : vector<8x128xf32>
    %120 = math.tanh %119 : vector<8x128xf32>
    %cst_52 = arith.constant 1.000000e+00 : f32
    %121 = vector.broadcast %cst_52 : f32 to vector<8x128xf32>
    %122 = arith.subf %121, %115 : vector<8x128xf32>
    %123 = arith.mulf %122, %120 : vector<8x128xf32>
    %124 = arith.mulf %115, %16 : vector<8x128xf32>
    %125 = arith.addf %123, %124 : vector<8x128xf32>
    %c1_53 = arith.constant 1 : index
    %c0_54 = arith.constant 0 : index
    %c0_55 = arith.constant 0 : index
    %126 = vector.load %arg13[%c1_53, %c0_54, %c0_55] : memref<2x128x5xf32, #tpu.memory_space<vmem>>, vector<1x128x5xf32>
    %127 = vector.shape_cast %126 : vector<1x128x5xf32> to vector<128x5xf32>
    %cst_56 = arith.constant dense<0.000000e+00> : vector<8x5xf32>
    %128 = tpu.matmul %125, %127, %cst_56 {dimension_numbers = #tpu.dot_dimension_numbers<[1], [0], [0], [1], [0, 0, 1, 1], [], []>} : vector<8x128xf32>, vector<128x5xf32>, vector<8x5xf32> -> vector<8x5xf32>
    %c1_57 = arith.constant 1 : index
    %c0_58 = arith.constant 0 : index
    %c0_59 = arith.constant 0 : index
    %129 = vector.load %arg14[%c1_57, %c0_58, %c0_59] : memref<2x1x5xf32, #tpu.memory_space<vmem>>, vector<1x1x5xf32>
    %130 = vector.shape_cast %129 : vector<1x1x5xf32> to vector<1x5xf32>
    %131 = vector.broadcast %130 : vector<1x5xf32> to vector<8x5xf32>
    %132 = arith.addf %128, %131 : vector<8x5xf32>
    %133 = vector.extract_strided_slice %132 {offsets = [0, 0], sizes = [8, 4], strides = [1, 1]} : vector<8x5xf32> to vector<8x4xf32>
    %134 = vector.extract_strided_slice %132 {offsets = [0, 4], sizes = [8, 1], strides = [1, 1]} : vector<8x5xf32> to vector<8x1xf32>
    %135 = tpu.iota {dimensions = array<i32: 1>} : vector<8x4xi32>
    %cst_60 = arith.constant dense<0xFF800000> : vector<8xf32>
    %136 = vector.multi_reduction <maximumf>, %133, %cst_60 [1] : vector<8x4xf32> to vector<8xf32>
    %137 = vector.shape_cast %136 : vector<8xf32> to vector<8x1xf32>
    %138 = vector.broadcast %137 : vector<8x1xf32> to vector<8x4xf32>
    %139 = arith.cmpf oge, %133, %138 : vector<8x4xf32>
    %c4_i32_61 = arith.constant 4 : i32
    %140 = vector.broadcast %c4_i32_61 : i32 to vector<8x4xi32>
    %141 = arith.select %139, %135, %140 : vector<8x4xi1>, vector<8x4xi32>
    %cst_62 = arith.constant dense<2147483647> : vector<8xi32>
    %142 = vector.multi_reduction <minsi>, %141, %cst_62 [1] : vector<8x4xi32> to vector<8xi32>
    %143 = vector.shape_cast %142 : vector<8xi32> to vector<8x1xi32>
    %144 = vector.broadcast %137 : vector<8x1xf32> to vector<8x4xf32>
    %145 = arith.subf %133, %144 : vector<8x4xf32>
    %146 = math.exp %145 : vector<8x4xf32>
    %cst_63 = arith.constant dense<0.000000e+00> : vector<8xf32>
    %147 = vector.multi_reduction <add>, %146, %cst_63 [1] : vector<8x4xf32> to vector<8xf32>
    %148 = vector.shape_cast %147 : vector<8xf32> to vector<8x1xf32>
    %149 = math.log %148 : vector<8x1xf32>
    %150 = arith.addf %137, %149 : vector<8x1xf32>
    %151 = vector.broadcast %143 : vector<8x1xi32> to vector<8x4xi32>
    %152 = arith.cmpi eq, %135, %151 : vector<8x4xi32>
    %153 = vector.broadcast %150 : vector<8x1xf32> to vector<8x4xf32>
    %154 = arith.subf %133, %153 : vector<8x4xf32>
    %cst_64 = arith.constant 0.000000e+00 : f32
    %155 = vector.broadcast %cst_64 : f32 to vector<8x4xf32>
    %156 = arith.select %152, %154, %155 : vector<8x4xi1>, vector<8x4xf32>
    %cst_65 = arith.constant dense<0.000000e+00> : vector<8xf32>
    %157 = vector.multi_reduction <add>, %156, %cst_65 [1] : vector<8x4xf32> to vector<8xf32>
    %158 = vector.shape_cast %157 : vector<8xf32> to vector<8x1xf32>
    %159 = arith.sitofp %143 : vector<8x1xi32> to vector<8x1xf32>
    %c0_i32 = arith.constant 0 : i32
    %160 = vector.broadcast %c0_i32 : i32 to vector<8x1xi32>
    %161 = arith.cmpi eq, %1, %160 : vector<8x1xi32>
    %162 = arith.select %161, %65, %134 : vector<8x1xi1>, vector<8x1xf32>
    %163 = arith.select %161, %90, %159 : vector<8x1xi1>, vector<8x1xf32>
    %164 = arith.select %161, %89, %158 : vector<8x1xi1>, vector<8x1xf32>
    %165 = vector.shape_cast %161 : vector<8x1xi1> to vector<8x1xi1>
    %166 = vector.broadcast %165 : vector<8x1xi1> to vector<8x128xi1>
    %167 = arith.select %166, %56, %125 : vector<8x128xi1>, vector<8x128xf32>
    %c0_66 = arith.constant 0 : index
    %c0_67 = arith.constant 0 : index
    %168 = vector.load %arg16[%c0_66, %c0_67] : memref<8x128xf32, #tpu.memory_space<vmem>>, vector<8x128xf32>
    tpu.vector_store %arg16[%c0_66, %c0_67], %167 {strides = array<i32>} : memref<8x128xf32, #tpu.memory_space<vmem>>, vector<8x128xf32>,
    %169 = tpu.iota {dimensions = array<i32: 1>} : vector<8x128xi32>
    %c0_i32_68 = arith.constant 0 : i32
    %170 = vector.broadcast %c0_i32_68 : i32 to vector<8x128xi32>
    %171 = arith.cmpi eq, %169, %170 : vector<8x128xi32>
    %172 = arith.extui %171 : vector<8x128xi1> to vector<8x128xi32>
    %173 = arith.sitofp %172 : vector<8x128xi32> to vector<8x128xf32>
    %174 = vector.broadcast %162 : vector<8x1xf32> to vector<8x128xf32>
    %175 = arith.mulf %174, %173 : vector<8x128xf32>
    %c1_i32 = arith.constant 1 : i32
    %176 = vector.broadcast %c1_i32 : i32 to vector<8x128xi32>
    %177 = arith.cmpi eq, %169, %176 : vector<8x128xi32>
    %178 = arith.extui %177 : vector<8x128xi1> to vector<8x128xi32>
    %179 = arith.sitofp %178 : vector<8x128xi32> to vector<8x128xf32>
    %180 = vector.broadcast %164 : vector<8x1xf32> to vector<8x128xf32>
    %181 = arith.mulf %180, %179 : vector<8x128xf32>
    %182 = arith.addf %175, %181 : vector<8x128xf32>
    %c2_i32 = arith.constant 2 : i32
    %183 = vector.broadcast %c2_i32 : i32 to vector<8x128xi32>
    %184 = arith.cmpi eq, %169, %183 : vector<8x128xi32>
    %185 = arith.extui %184 : vector<8x128xi1> to vector<8x128xi32>
    %186 = arith.sitofp %185 : vector<8x128xi32> to vector<8x128xf32>
    %187 = vector.broadcast %163 : vector<8x1xf32> to vector<8x128xf32>
    %188 = arith.mulf %187, %186 : vector<8x128xf32>
    %189 = arith.addf %182, %188 : vector<8x128xf32>
    %c0_69 = arith.constant 0 : index
    %c0_70 = arith.constant 0 : index
    %190 = vector.load %arg15[%c0_69, %c0_70] : memref<8x128xf32, #tpu.memory_space<vmem>>, vector<8x128xf32>
    tpu.vector_store %arg15[%c0_69, %c0_70], %189 {strides = array<i32>} : memref<8x128xf32, #tpu.memory_space<vmem>>, vector<8x128xf32>,
    return
  }
  func.func @transform_0(%arg0: i32) -> (i32, i32) {
    %c0_i32 = arith.constant 0 : i32
    %c0_i32_0 = arith.constant 0 : i32
    return %arg0, %c0_i32 : i32, i32
  }
  func.func @transform_1(%arg0: i32) -> (i32, i32) {
    %c0_i32 = arith.constant 0 : i32
    %c0_i32_0 = arith.constant 0 : i32
    return %arg0, %c0_i32 : i32, i32
  }
  func.func @transform_2(%arg0: i32) -> (i32, i32) {
    %c0_i32 = arith.constant 0 : i32
    %c0_i32_0 = arith.constant 0 : i32
    return %arg0, %c0_i32 : i32, i32
  }
  func.func @transform_3(%arg0: i32) -> (i32, i32) {
    %c0_i32 = arith.constant 0 : i32
    %c0_i32_0 = arith.constant 0 : i32
    return %arg0, %c0_i32 : i32, i32
  }
  func.func @transform_4(%arg0: i32) -> (i32, i32) {
    %c0_i32 = arith.constant 0 : i32
    %c0_i32_0 = arith.constant 0 : i32
    return %arg0, %c0_i32 : i32, i32
  }
  func.func @transform_5(%arg0: i32) -> (i32, i32) {
    %c0_i32 = arith.constant 0 : i32
    %c0_i32_0 = arith.constant 0 : i32
    %c0_i32_1 = arith.constant 0 : i32
    return %c0_i32, %c0_i32_0 : i32, i32
  }
  func.func @transform_6(%arg0: i32) -> (i32, i32) {
    %c0_i32 = arith.constant 0 : i32
    %c0_i32_0 = arith.constant 0 : i32
    %c0_i32_1 = arith.constant 0 : i32
    return %c0_i32, %c0_i32_0 : i32, i32
  }
  func.func @transform_7(%arg0: i32) -> (i32, i32) {
    %c0_i32 = arith.constant 0 : i32
    %c0_i32_0 = arith.constant 0 : i32
    %c0_i32_1 = arith.constant 0 : i32
    return %c0_i32, %c0_i32_0 : i32, i32
  }
  func.func @transform_8(%arg0: i32) -> (i32, i32, i32) {
    %c0_i32 = arith.constant 0 : i32
    %c0_i32_0 = arith.constant 0 : i32
    %c0_i32_1 = arith.constant 0 : i32
    %c0_i32_2 = arith.constant 0 : i32
    return %c0_i32, %c0_i32_0, %c0_i32_1 : i32, i32, i32
  }
  func.func @transform_9(%arg0: i32) -> (i32, i32, i32) {
    %c0_i32 = arith.constant 0 : i32
    %c0_i32_0 = arith.constant 0 : i32
    %c0_i32_1 = arith.constant 0 : i32
    %c0_i32_2 = arith.constant 0 : i32
    return %c0_i32, %c0_i32_0, %c0_i32_1 : i32, i32, i32
  }
  func.func @transform_10(%arg0: i32) -> (i32, i32) {
    %c0_i32 = arith.constant 0 : i32
    %c0_i32_0 = arith.constant 0 : i32
    %c0_i32_1 = arith.constant 0 : i32
    return %c0_i32, %c0_i32_0 : i32, i32
  }
  func.func @transform_11(%arg0: i32) -> (i32, i32) {
    %c0_i32 = arith.constant 0 : i32
    %c0_i32_0 = arith.constant 0 : i32
    %c0_i32_1 = arith.constant 0 : i32
    return %c0_i32, %c0_i32_0 : i32, i32
  }
  func.func @transform_12(%arg0: i32) -> (i32, i32, i32) {
    %c0_i32 = arith.constant 0 : i32
    %c0_i32_0 = arith.constant 0 : i32
    %c0_i32_1 = arith.constant 0 : i32
    %c0_i32_2 = arith.constant 0 : i32
    return %c0_i32, %c0_i32_0, %c0_i32_1 : i32, i32, i32
  }
  func.func @transform_13(%arg0: i32) -> (i32, i32, i32) {
    %c0_i32 = arith.constant 0 : i32
    %c0_i32_0 = arith.constant 0 : i32
    %c0_i32_1 = arith.constant 0 : i32
    %c0_i32_2 = arith.constant 0 : i32
    return %c0_i32, %c0_i32_0, %c0_i32_1 : i32, i32, i32
  }
  func.func @transform_14(%arg0: i32) -> (i32, i32) {
    %c0_i32 = arith.constant 0 : i32
    %c0_i32_0 = arith.constant 0 : i32
    return %arg0, %c0_i32 : i32, i32
  }
  func.func @transform_15(%arg0: i32) -> (i32, i32) {
    %c0_i32 = arith.constant 0 : i32
    %c0_i32_0 = arith.constant 0 : i32
    return %arg0, %c0_i32 : i32, i32
  }
}

</mosaic_0001>

<llo_original>
// kernel: tpu_custom_call.1
$region0: #{tpu_custom_call.1}
  #allocation0 [shape = 'u32[]', space=smem, size = 0x4, offset = 0x4, fixed_abs, tag = 'smem constant byte address 0x4 - core index']
  #allocation1 [shape = 'u32[144,128]{1,0:T(1,128)}', space=vmem, size = 0x12000, scoped, tag = 'internal scratch']
  %s0 = inlined_call_operand.vmem [shape: s32[16,1], index: 0, kind: input, shape index: {}]
  %s1 = inlined_call_operand.vmem [shape: f32[16,1], index: 1, kind: input, shape index: {}]
  %s2 = inlined_call_operand.hbm [shape: f32[16,768], index: 2, kind: input, shape index: {}]
  %s3 = inlined_call_operand.vmem [shape: f32[16,128], index: 3, kind: input, shape index: {}]
  %s4 = inlined_call_operand.vmem [shape: f32[16,128], index: 4, kind: input, shape index: {}]
  %s5 = inlined_call_operand.hbm [shape: f32[768,256], index: 5, kind: input, shape index: {}]
  %s6 = inlined_call_operand.vmem [shape: f32[128,256], index: 6, kind: input, shape index: {}]
  %s7 = inlined_call_operand.vmem [shape: f32[1,256], index: 7, kind: input, shape index: {}]
  %s8 = inlined_call_operand.hbm [shape: f32[2,128,384], index: 8, kind: input, shape index: {}]
  %s9 = inlined_call_operand.vmem [shape: f32[2,1,384], index: 9, kind: input, shape index: {}]
  %s10 = inlined_call_operand.hbm [shape: f32[128,768], index: 10, kind: input, shape index: {}]
  %s11 = inlined_call_operand.vmem [shape: f32[1,768], index: 11, kind: input, shape index: {}]
  %s12 = inlined_call_operand.vmem [shape: f32[2,128,5], index: 12, kind: input, shape index: {}]
  %s13 = inlined_call_operand.vmem [shape: f32[2,1,5], index: 13, kind: input, shape index: {}]
  %s14 = inlined_call_operand.hbm [shape: f32[16,128], index: 14, kind: output, shape index: {0}]
  %s15 = inlined_call_operand.hbm [shape: f32[16,128], index: 15, kind: output, shape index: {1}]
  %16 = xla_tuple %s14, %s15
  %s17 = sld [smem:[#allocation0]]
  $region113: #{tpu_custom_call.1} parent=0
    _
  %s19 = ssub.s32 1, %s17
  %s20 = scalar_select 0, %s19, %s17
  $region1: #{tpu_custom_call.1} parent=0
    #allocation2 [shape = 'u8[49152]{0}', space=vmem, size = 0xc000, scoped, tag = 'input window, operand 2']
    #allocation3 [shape = 's32[2]{0}', space=sflag, size = 0x8, scoped, tag = 'scoped memory for tpu_custom_call.1']
    #allocation4 [shape = 's32[2]{0}', space=sflag, size = 0x8, scoped, tag = 'scoped memory for tpu_custom_call.1']
    #allocation5 [shape = 'u8[786432]{0}', space=vmem, size = 0xc0000, scoped, tag = 'input window, operand 5, single buffered']
    #allocation6 [shape = 's32[1]{0}', space=sflag, size = 0x4, scoped, tag = 'scoped memory for tpu_custom_call.1']
    #allocation7 [shape = 'u8[393216]{0}', space=vmem, size = 0x60000, scoped, tag = 'input window, operand 8, single buffered']
    #allocation8 [shape = 'u8[393216]{0}', space=vmem, size = 0x60000, scoped, tag = 'input window, operand 10, single buffered']
    #allocation9 [shape = 's32[1]{0}', space=sflag, size = 0x4, scoped, tag = 'scoped memory for tpu_custom_call.1']
    #allocation10 [shape = 'u8[8192]{0}', space=vmem, size = 0x2000, scoped, tag = 'output window, operand 0']
    #allocation11 [shape = 'u8[8192]{0}', space=vmem, size = 0x2000, scoped, tag = 'output window, operand 1']
    #allocation12 [shape = 's32[2]{0}', space=sflag, size = 0x8, scoped, tag = 'scoped memory for tpu_custom_call.1']
    %21 = vsyncpa [#allocation3], 0
    %s22 = scalar_lea.sflag [#allocation3], 1
    %23 = vsyncpa %s22, 0
    %24 = vsyncpa [#allocation6], 0
    %25 = vsyncpa [#allocation9], 0
    %26 = vsyncpa [#allocation4], 0
    %s27 = scalar_lea.sflag [#allocation4], 1
    %28 = vsyncpa %s27, 0
    %29 = vsyncpa [#allocation12], 0
    %s30 = scalar_lea.sflag [#allocation12], 1
    %31 = vsyncpa %s30, 0
    loop: start=0, step=1, limit=4
    $region2: #{tpu_custom_call.1} parent=1 // loop_pre_header
      _
    $region3: #{tpu_custom_call.1} parent=1 // loop_header
      %s33 = sphi 0, %s37
      %p34 = scmp.ge.s32.totalorder %s33, 4
      %s43 = sphi 0, %s45
      %s46 = sphi 0, %s43
      %s47 = sphi 0, %s46
      %s63 = sphi 0, %s47
      %s69 = sphi 0, %s71
      %s72 = sphi 0, %s69
      %s73 = sphi 0, %s72
      %s89 = sphi 0, %s73
      %s95 = sphi 0, %s97
      %s98 = sphi 0, %s95
      %s99 = sphi 0, %s98
      %s115 = sphi 0, %s99
      %s121 = sphi 0, %s123
      %s124 = sphi 0, %s121
      %s125 = sphi 0, %s124
      %s141 = sphi 0, %s125
      %s147 = sphi 0, %s149
      %s150 = sphi 0, %s147
      %s151 = sphi 0, %s150
      %s167 = sphi 0, %s151
      %s171 = sphi 0, %s171
      %s173 = sphi 0, %s171
      %s174 = sphi 0, %s173
      %s188 = sphi 0, %s174
      %s192 = sphi 0, %s192
      %s194 = sphi 0, %s192
      %s195 = sphi 0, %s194
      %s209 = sphi 0, %s195
      %s213 = sphi 0, %s213
      %s215 = sphi 0, %s213
      %s216 = sphi 0, %s215
      %s230 = sphi 0, %s216
      %s234 = sphi 0, %s234
      %s236 = sphi 0, %s234
      %s237 = sphi 0, %s236
      %s251 = sphi 0, %s237
      %s255 = sphi 0, %s255
      %s257 = sphi 0, %s255
      %s258 = sphi 0, %s257
      %s272 = sphi 0, %s258
      %s276 = sphi 0, %s276
      %s278 = sphi 0, %s276
      %s279 = sphi 0, %s278
      %s293 = sphi 0, %s279
      %s297 = sphi 0, %s297
      %s299 = sphi 0, %s297
      %s300 = sphi 0, %s299
      %s314 = sphi 0, %s300
      %s318 = sphi 0, %s318
      %s320 = sphi 0, %s318
      %s321 = sphi 0, %s320
      %s335 = sphi 0, %s321
      %s339 = sphi 0, %s339
      %s341 = sphi 0, %s339
      %s342 = sphi 0, %s341
      %s356 = sphi 0, %s342
      %s362 = sphi 0, %s364
      %s365 = sphi 0, %s362
      %s366 = sphi 0, %s365
      %s382 = sphi 0, %s366
      %s388 = sphi 0, %s390
      %s391 = sphi 0, %s388
      %s392 = sphi 0, %s391
      %s408 = sphi 0, %s392
    $region4: #{tpu_custom_call.1} parent=1 // loop_header_branch
      %36 = sbr.rel (%p34) target = $region8
    $region5: #{tpu_custom_call.1} parent=1 // loop_body
      %s38 = ssub.s32 %s33, 1
      %s39 = ssub.s32 %s33, 2
      %s40 = sadd.s32 %s33, 1
      %s41 = ssub.s32 %s33, %s40
      %p42 = scmp.eq.s32.totalorder %s41, 0
      %s44 = sadd.s32 %s43, 1
      %s45 = scalar_select %p42, %s43, %s44
      %p48 = pneg %p42
      %p49 = scmp.eq.s32.totalorder %s33, 1
      %p50 = por %p48, %p49
      %p51 = scmp.ne.s32.totalorder %s43, %s46
      %p52 = scmp.eq.s32.totalorder %s33, 0
      %p53 = por %p51, %p52
      %p54 = scmp.ne.s32.totalorder %s43, %s46
      %p55 = scmp.eq.s32.totalorder %s38, 1
      %p56 = por %p54, %p55
      %p57 = scmp.ne.s32.totalorder %s46, %s47
      %p58 = scmp.eq.s32.totalorder %s38, 0
      %p59 = por %p57, %p58
      %p60 = scmp.ne.s32.totalorder %s46, %s47
      %p61 = scmp.eq.s32.totalorder %s39, 1
      %p62 = por %p60, %p61
      %p64 = scmp.ne.s32.totalorder %s47, %s63
      %p65 = scmp.eq.s32.totalorder %s39, 0
      %p66 = por %p64, %p65
      %s67 = ssub.s32 %s33, %s40
      %p68 = scmp.eq.s32.totalorder %s67, 0
      %s70 = sadd.s32 %s69, 1
      %s71 = scalar_select %p68, %s69, %s70
      %p74 = pneg %p68
      %p75 = scmp.eq.s32.totalorder %s33, 1
      %p76 = por %p74, %p75
      %p77 = scmp.ne.s32.totalorder %s69, %s72
      %p78 = scmp.eq.s32.totalorder %s33, 0
      %p79 = por %p77, %p78
      %p80 = scmp.ne.s32.totalorder %s69, %s72
      %p81 = scmp.eq.s32.totalorder %s38, 1
      %p82 = por %p80, %p81
      %p83 = scmp.ne.s32.totalorder %s72, %s73
      %p84 = scmp.eq.s32.totalorder %s38, 0
      %p85 = por %p83, %p84
      %p86 = scmp.ne.s32.totalorder %s72, %s73
      %p87 = scmp.eq.s32.totalorder %s39, 1
      %p88 = por %p86, %p87
      %p90 = scmp.ne.s32.totalorder %s73, %s89
      %p91 = scmp.eq.s32.totalorder %s39, 0
      %p92 = por %p90, %p91
      %s93 = ssub.s32 %s33, %s40
      %p94 = scmp.eq.s32.totalorder %s93, 0
      %s96 = sadd.s32 %s95, 1
      %s97 = scalar_select %p94, %s95, %s96
      %p100 = pneg %p94
      %p101 = scmp.eq.s32.totalorder %s33, 1
      %p102 = por %p100, %p101
      %p103 = scmp.ne.s32.totalorder %s95, %s98
      %p104 = scmp.eq.s32.totalorder %s33, 0
      %p105 = por %p103, %p104
      %p106 = scmp.ne.s32.totalorder %s95, %s98
      %p107 = scmp.eq.s32.totalorder %s38, 1
      %p108 = por %p106, %p107
      %p109 = scmp.ne.s32.totalorder %s98, %s99
      %p110 = scmp.eq.s32.totalorder %s38, 0
      %p111 = por %p109, %p110
      %p112 = scmp.ne.s32.totalorder %s98, %s99
      %p113 = scmp.eq.s32.totalorder %s39, 1
      %p114 = por %p112, %p113
      %p116 = scmp.ne.s32.totalorder %s99, %s115
      %p117 = scmp.eq.s32.totalorder %s39, 0
      %p118 = por %p116, %p117
      %s119 = ssub.s32 %s33, %s40
      %p120 = scmp.eq.s32.totalorder %s119, 0
      %s122 = sadd.s32 %s121, 1
      %s123 = scalar_select %p120, %s121, %s122
      %p126 = pneg %p120
      %p127 = scmp.eq.s32.totalorder %s33, 1
      %p128 = por %p126, %p127
      %p129 = scmp.ne.s32.totalorder %s121, %s124
      %p130 = scmp.eq.s32.totalorder %s33, 0
      %p131 = por %p129, %p130
      %p132 = scmp.ne.s32.totalorder %s121, %s124
      %p133 = scmp.eq.s32.totalorder %s38, 1
      %p134 = por %p132, %p133
      %p135 = scmp.ne.s32.totalorder %s124, %s125
      %p136 = scmp.eq.s32.totalorder %s38, 0
      %p137 = por %p135, %p136
      %p138 = scmp.ne.s32.totalorder %s124, %s125
      %p139 = scmp.eq.s32.totalorder %s39, 1
      %p140 = por %p138, %p139
      %p142 = scmp.ne.s32.totalorder %s125, %s141
      %p143 = scmp.eq.s32.totalorder %s39, 0
      %p144 = por %p142, %p143
      %s145 = ssub.s32 %s33, %s40
      %p146 = scmp.eq.s32.totalorder %s145, 0
      %s148 = sadd.s32 %s147, 1
      %s149 = scalar_select %p146, %s147, %s148
      %p152 = pneg %p146
      %p153 = scmp.eq.s32.totalorder %s33, 1
      %p154 = por %p152, %p153
      %p155 = scmp.ne.s32.totalorder %s147, %s150
      %p156 = scmp.eq.s32.totalorder %s33, 0
      %p157 = por %p155, %p156
      %p158 = scmp.ne.s32.totalorder %s147, %s150
      %p159 = scmp.eq.s32.totalorder %s38, 1
      %p160 = por %p158, %p159
      %p161 = scmp.ne.s32.totalorder %s150, %s151
      %p162 = scmp.eq.s32.totalorder %s38, 0
      %p163 = por %p161, %p162
      %p164 = scmp.ne.s32.totalorder %s150, %s151
      %p165 = scmp.eq.s32.totalorder %s39, 1
      %p166 = por %p164, %p165
      %p168 = scmp.ne.s32.totalorder %s151, %s167
      %p169 = scmp.eq.s32.totalorder %s39, 0
      %p170 = por %p168, %p169
      %s172 = sadd.s32 %s171, 1
      %p175 = scmp.eq.s32.totalorder %s33, 1
      %p176 = scmp.ne.s32.totalorder %s171, %s173
      %p177 = scmp.eq.s32.totalorder %s33, 0
      %p178 = por %p176, %p177
      %p179 = scmp.ne.s32.totalorder %s171, %s173
      %p180 = scmp.eq.s32.totalorder %s38, 1
      %p181 = por %p179, %p180
      %p182 = scmp.ne.s32.totalorder %s173, %s174
      %p183 = scmp.eq.s32.totalorder %s38, 0
      %p184 = por %p182, %p183
      %p185 = scmp.ne.s32.totalorder %s173, %s174
      %p186 = scmp.eq.s32.totalorder %s39, 1
      %p187 = por %p185, %p186
      %p189 = scmp.ne.s32.totalorder %s174, %s188
      %p190 = scmp.eq.s32.totalorder %s39, 0
      %p191 = por %p189, %p190
      %s193 = sadd.s32 %s192, 1
      %p196 = scmp.eq.s32.totalorder %s33, 1
      %p197 = scmp.ne.s32.totalorder %s192, %s194
      %p198 = scmp.eq.s32.totalorder %s33, 0
      %p199 = por %p197, %p198
      %p200 = scmp.ne.s32.totalorder %s192, %s194
      %p201 = scmp.eq.s32.totalorder %s38, 1
      %p202 = por %p200, %p201
      %p203 = scmp.ne.s32.totalorder %s194, %s195
      %p204 = scmp.eq.s32.totalorder %s38, 0
      %p205 = por %p203, %p204
      %p206 = scmp.ne.s32.totalorder %s194, %s195
      %p207 = scmp.eq.s32.totalorder %s39, 1
      %p208 = por %p206, %p207
      %p210 = scmp.ne.s32.totalorder %s195, %s209
      %p211 = scmp.eq.s32.totalorder %s39, 0
      %p212 = por %p210, %p211
      %s214 = sadd.s32 %s213, 1
      %p217 = scmp.eq.s32.totalorder %s33, 1
      %p218 = scmp.ne.s32.totalorder %s213, %s215
      %p219 = scmp.eq.s32.totalorder %s33, 0
      %p220 = por %p218, %p219
      %p221 = scmp.ne.s32.totalorder %s213, %s215
      %p222 = scmp.eq.s32.totalorder %s38, 1
      %p223 = por %p221, %p222
      %p224 = scmp.ne.s32.totalorder %s215, %s216
      %p225 = scmp.eq.s32.totalorder %s38, 0
      %p226 = por %p224, %p225
      %p227 = scmp.ne.s32.totalorder %s215, %s216
      %p228 = scmp.eq.s32.totalorder %s39, 1
      %p229 = por %p227, %p228
      %p231 = scmp.ne.s32.totalorder %s216, %s230
      %p232 = scmp.eq.s32.totalorder %s39, 0
      %p233 = por %p231, %p232
      %s235 = sadd.s32 %s234, 1
      %p238 = scmp.eq.s32.totalorder %s33, 1
      %p239 = scmp.ne.s32.totalorder %s234, %s236
      %p240 = scmp.eq.s32.totalorder %s33, 0
      %p241 = por %p239, %p240
      %p242 = scmp.ne.s32.totalorder %s234, %s236
      %p243 = scmp.eq.s32.totalorder %s38, 1
      %p244 = por %p242, %p243
      %p245 = scmp.ne.s32.totalorder %s236, %s237
      %p246 = scmp.eq.s32.totalorder %s38, 0
      %p247 = por %p245, %p246
      %p248 = scmp.ne.s32.totalorder %s236, %s237
      %p249 = scmp.eq.s32.totalorder %s39, 1
      %p250 = por %p248, %p249
      %p252 = scmp.ne.s32.totalorder %s237, %s251
      %p253 = scmp.eq.s32.totalorder %s39, 0
      %p254 = por %p252, %p253
      %s256 = sadd.s32 %s255, 1
      %p259 = scmp.eq.s32.totalorder %s33, 1
      %p260 = scmp.ne.s32.totalorder %s255, %s257
      %p261 = scmp.eq.s32.totalorder %s33, 0
      %p262 = por %p260, %p261
      %p263 = scmp.ne.s32.totalorder %s255, %s257
      %p264 = scmp.eq.s32.totalorder %s38, 1
      %p265 = por %p263, %p264
      %p266 = scmp.ne.s32.totalorder %s257, %s258
      %p267 = scmp.eq.s32.totalorder %s38, 0
      %p268 = por %p266, %p267
      %p269 = scmp.ne.s32.totalorder %s257, %s258
      %p270 = scmp.eq.s32.totalorder %s39, 1
      %p271 = por %p269, %p270
      %p273 = scmp.ne.s32.totalorder %s258, %s272
      %p274 = scmp.eq.s32.totalorder %s39, 0
      %p275 = por %p273, %p274
      %s277 = sadd.s32 %s276, 1
      %p280 = scmp.eq.s32.totalorder %s33, 1
      %p281 = scmp.ne.s32.totalorder %s276, %s278
      %p282 = scmp.eq.s32.totalorder %s33, 0
      %p283 = por %p281, %p282
      %p284 = scmp.ne.s32.totalorder %s276, %s278
      %p285 = scmp.eq.s32.totalorder %s38, 1
      %p286 = por %p284, %p285
      %p287 = scmp.ne.s32.totalorder %s278, %s279
      %p288 = scmp.eq.s32.totalorder %s38, 0
      %p289 = por %p287, %p288
      %p290 = scmp.ne.s32.totalorder %s278, %s279
      %p291 = scmp.eq.s32.totalorder %s39, 1
      %p292 = por %p290, %p291
      %p294 = scmp.ne.s32.totalorder %s279, %s293
      %p295 = scmp.eq.s32.totalorder %s39, 0
      %p296 = por %p294, %p295
      %s298 = sadd.s32 %s297, 1
      %p301 = scmp.eq.s32.totalorder %s33, 1
      %p302 = scmp.ne.s32.totalorder %s297, %s299
      %p303 = scmp.eq.s32.totalorder %s33, 0
      %p304 = por %p302, %p303
      %p305 = scmp.ne.s32.totalorder %s297, %s299
      %p306 = scmp.eq.s32.totalorder %s38, 1
      %p307 = por %p305, %p306
      %p308 = scmp.ne.s32.totalorder %s299, %s300
      %p309 = scmp.eq.s32.totalorder %s38, 0
      %p310 = por %p308, %p309
      %p311 = scmp.ne.s32.totalorder %s299, %s300
      %p312 = scmp.eq.s32.totalorder %s39, 1
      %p313 = por %p311, %p312
      %p315 = scmp.ne.s32.totalorder %s300, %s314
      %p316 = scmp.eq.s32.totalorder %s39, 0
      %p317 = por %p315, %p316
      %s319 = sadd.s32 %s318, 1
      %p322 = scmp.eq.s32.totalorder %s33, 1
      %p323 = scmp.ne.s32.totalorder %s318, %s320
      %p324 = scmp.eq.s32.totalorder %s33, 0
      %p325 = por %p323, %p324
      %p326 = scmp.ne.s32.totalorder %s318, %s320
      %p327 = scmp.eq.s32.totalorder %s38, 1
      %p328 = por %p326, %p327
      %p329 = scmp.ne.s32.totalorder %s320, %s321
      %p330 = scmp.eq.s32.totalorder %s38, 0
      %p331 = por %p329, %p330
      %p332 = scmp.ne.s32.totalorder %s320, %s321
      %p333 = scmp.eq.s32.totalorder %s39, 1
      %p334 = por %p332, %p333
      %p336 = scmp.ne.s32.totalorder %s321, %s335
      %p337 = scmp.eq.s32.totalorder %s39, 0
      %p338 = por %p336, %p337
      %s340 = sadd.s32 %s339, 1
      %p343 = scmp.eq.s32.totalorder %s33, 1
      %p344 = scmp.ne.s32.totalorder %s339, %s341
      %p345 = scmp.eq.s32.totalorder %s33, 0
      %p346 = por %p344, %p345
      %p347 = scmp.ne.s32.totalorder %s339, %s341
      %p348 = scmp.eq.s32.totalorder %s38, 1
      %p349 = por %p347, %p348
      %p350 = scmp.ne.s32.totalorder %s341, %s342
      %p351 = scmp.eq.s32.totalorder %s38, 0
      %p352 = por %p350, %p351
      %p353 = scmp.ne.s32.totalorder %s341, %s342
      %p354 = scmp.eq.s32.totalorder %s39, 1
      %p355 = por %p353, %p354
      %p357 = scmp.ne.s32.totalorder %s342, %s356
      %p358 = scmp.eq.s32.totalorder %s39, 0
      %p359 = por %p357, %p358
      %s360 = ssub.s32 %s33, %s40
      %p361 = scmp.eq.s32.totalorder %s360, 0
      %s363 = sadd.s32 %s362, 1
      %s364 = scalar_select %p361, %s362, %s363
      %p367 = pneg %p361
      %p368 = scmp.eq.s32.totalorder %s33, 1
      %p369 = por %p367, %p368
      %p370 = scmp.ne.s32.totalorder %s362, %s365
      %p371 = scmp.eq.s32.totalorder %s33, 0
      %p372 = por %p370, %p371
      %p373 = scmp.ne.s32.totalorder %s362, %s365
      %p374 = scmp.eq.s32.totalorder %s38, 1
      %p375 = por %p373, %p374
      %p376 = scmp.ne.s32.totalorder %s365, %s366
      %p377 = scmp.eq.s32.totalorder %s38, 0
      %p378 = por %p376, %p377
      %p379 = scmp.ne.s32.totalorder %s365, %s366
      %p380 = scmp.eq.s32.totalorder %s39, 1
      %p381 = por %p379, %p380
      %p383 = scmp.ne.s32.totalorder %s366, %s382
      %p384 = scmp.eq.s32.totalorder %s39, 0
      %p385 = por %p383, %p384
      %s386 = ssub.s32 %s33, %s40
      %p387 = scmp.eq.s32.totalorder %s386, 0
      %s389 = sadd.s32 %s388, 1
      %s390 = scalar_select %p387, %s388, %s389
      %p393 = pneg %p387
      %p394 = scmp.eq.s32.totalorder %s33, 1
      %p395 = por %p393, %p394
      %p396 = scmp.ne.s32.totalorder %s388, %s391
      %p397 = scmp.eq.s32.totalorder %s33, 0
      %p398 = por %p396, %p397
      %p399 = scmp.ne.s32.totalorder %s388, %s391
      %p400 = scmp.eq.s32.totalorder %s38, 1
      %p401 = por %p399, %p400
      %p402 = scmp.ne.s32.totalorder %s391, %s392
      %p403 = scmp.eq.s32.totalorder %s38, 0
      %p404 = por %p402, %p403
      %p405 = scmp.ne.s32.totalorder %s391, %s392
      %p406 = scmp.eq.s32.totalorder %s39, 1
      %p407 = por %p405, %p406
      %p409 = scmp.ne.s32.totalorder %s392, %s408
      %p410 = scmp.eq.s32.totalorder %s39, 0
      %p411 = por %p409, %p410
      %p412 = scmp.le.s32.totalorder 1, %s33
      %p413 = scmp.lt.s32.totalorder %s33, 3
      %p414 = pnand %p412, %p413
      %p415 = pneg %p414
      // Predicated region
      $region9: #{tpu_custom_call.1} parent=5 // pred_check
        _
      $region10: #{tpu_custom_call.1} parent=5 // pred_check_branch
        %417 = sbr.rel (%p414) target = $region12
      $region11: #{tpu_custom_call.1} parent=5 // pred_region
        %s418 = ssub.s32 %s33, 1
        // Predicated region
        $region13: #{tpu_custom_call.1} parent=11 // pred_check
          %p419 = pneg %p184
        $region14: #{tpu_custom_call.1} parent=11 // pred_check_branch
          %421 = sbr.rel (%p419) target = $region16
        $region15: #{tpu_custom_call.1} parent=11 // pred_region
          %s423 = ssub.s32 24576, 24576
          %424 = vsyncadd [#allocation6], %s423
          %s425 = sshll.u32 [#allocation5], 4
          %s426 = int_to_ptr.vmem [resolvable:$true] %s425
          %431 = dma.hbm_to_vmem [thread:$0]  %s5, 24576, %s426, [#allocation6], 256, 256, 16
        $region16: #{tpu_custom_call.1} parent=11 // pred_fallthru
          _
        // Predicated region
        $region17: #{tpu_custom_call.1} parent=11 // pred_check
          %p432 = pneg %p205
        $region18: #{tpu_custom_call.1} parent=11 // pred_check_branch
          %434 = sbr.rel (%p432) target = $region20
        $region19: #{tpu_custom_call.1} parent=11 // pred_region
          _
        $region20: #{tpu_custom_call.1} parent=11 // pred_fallthru
          _
        // Predicated region
        $region21: #{tpu_custom_call.1} parent=11 // pred_check
          %p435 = pneg %p226
        $region22: #{tpu_custom_call.1} parent=11 // pred_check_branch
          %437 = sbr.rel (%p435) target = $region24
        $region23: #{tpu_custom_call.1} parent=11 // pred_region
          _
        $region24: #{tpu_custom_call.1} parent=11 // pred_fallthru
          _
        // Predicated region
        $region25: #{tpu_custom_call.1} parent=11 // pred_check
          %p438 = pneg %p247
        $region26: #{tpu_custom_call.1} parent=11 // pred_check_branch
          %440 = sbr.rel (%p438) target = $region28
        $region27: #{tpu_custom_call.1} parent=11 // pred_region
          %s442 = ssub.s32 12288, 12288
          %443 = vsyncadd [#allocation6], %s442
          %s444 = sshll.u32 [#allocation7], 4
          %s445 = int_to_ptr.vmem [resolvable:$true] %s444
          %450 = dma.hbm_to_vmem [thread:$0]  %s8, 12288, %s445, [#allocation6], 384, 384, 24
        $region28: #{tpu_custom_call.1} parent=11 // pred_fallthru
          _
        // Predicated region
        $region29: #{tpu_custom_call.1} parent=11 // pred_check
          %p451 = pneg %p268
        $region30: #{tpu_custom_call.1} parent=11 // pred_check_branch
          %453 = sbr.rel (%p451) target = $region32
        $region31: #{tpu_custom_call.1} parent=11 // pred_region
          _
        $region32: #{tpu_custom_call.1} parent=11 // pred_fallthru
          _
        // Predicated region
        $region33: #{tpu_custom_call.1} parent=11 // pred_check
          %p454 = pneg %p289
        $region34: #{tpu_custom_call.1} parent=11 // pred_check_branch
          %456 = sbr.rel (%p454) target = $region36
        $region35: #{tpu_custom_call.1} parent=11 // pred_region
          %s458 = ssub.s32 12288, 12288
          %459 = vsyncadd [#allocation9], %s458
          %s460 = sshll.u32 [#allocation8], 4
          %s461 = int_to_ptr.vmem [resolvable:$true] %s460
          %466 = dma.hbm_to_vmem [thread:$0]  %s10, 12288, %s461, [#allocation9], 768, 768, 48
        $region36: #{tpu_custom_call.1} parent=11 // pred_fallthru
          _
        // Predicated region
        $region37: #{tpu_custom_call.1} parent=11 // pred_check
          %p467 = pneg %p310
        $region38: #{tpu_custom_call.1} parent=11 // pred_check_branch
          %469 = sbr.rel (%p467) target = $region40
        $region39: #{tpu_custom_call.1} parent=11 // pred_region
          _
        $region40: #{tpu_custom_call.1} parent=11 // pred_fallthru
          _
        // Predicated region
        $region41: #{tpu_custom_call.1} parent=11 // pred_check
          %p470 = pneg %p331
        $region42: #{tpu_custom_call.1} parent=11 // pred_check_branch
          %472 = sbr.rel (%p470) target = $region44
        $region43: #{tpu_custom_call.1} parent=11 // pred_region
          _
        $region44: #{tpu_custom_call.1} parent=11 // pred_fallthru
          _
        // Predicated region
        $region45: #{tpu_custom_call.1} parent=11 // pred_check
          %p473 = pneg %p352
        $region46: #{tpu_custom_call.1} parent=11 // pred_check_branch
          %475 = sbr.rel (%p473) target = $region48
        $region47: #{tpu_custom_call.1} parent=11 // pred_region
          _
        $region48: #{tpu_custom_call.1} parent=11 // pred_fallthru
          _
      $region12: #{tpu_custom_call.1} parent=5 // pred_fallthru
        _
      %p476 = scmp.lt.s32.totalorder %s33, 2
      // Predicated region
      $region49: #{tpu_custom_call.1} parent=5 // pred_check
        %p477 = pneg %p476
      $region50: #{tpu_custom_call.1} parent=5 // pred_check_branch
        %479 = sbr.rel (%p477) target = $region52
      $region51: #{tpu_custom_call.1} parent=5 // pred_region
        // Predicated region
        $region53: #{tpu_custom_call.1} parent=51 // pred_check
          %p480 = pneg %p53
        $region54: #{tpu_custom_call.1} parent=51 // pred_check_branch
          %482 = sbr.rel (%p480) target = $region56
        $region55: #{tpu_custom_call.1} parent=51 // pred_region
          %p483 = scmp.lt.s32.totalorder %s33, 1
          %s484 = scalar_select %p483, %s33, 1
          %s485 = smul.addr %s484, 8
          %s486 = scalar_lea.vmem %s0, %s485
        $region56: #{tpu_custom_call.1} parent=51 // pred_fallthru
          _
        // Predicated region
        $region57: #{tpu_custom_call.1} parent=51 // pred_check
          %p487 = pneg %p79
        $region58: #{tpu_custom_call.1} parent=51 // pred_check_branch
          %489 = sbr.rel (%p487) target = $region60
        $region59: #{tpu_custom_call.1} parent=51 // pred_region
          %p490 = scmp.lt.s32.totalorder %s33, 1
          %s491 = scalar_select %p490, %s33, 1
          %s492 = smul.addr %s491, 8
          %s493 = scalar_lea.vmem %s1, %s492
        $region60: #{tpu_custom_call.1} parent=51 // pred_fallthru
          _
        // Predicated region
        $region61: #{tpu_custom_call.1} parent=51 // pred_check
          %p494 = pneg %p105
        $region62: #{tpu_custom_call.1} parent=51 // pred_check_branch
          %496 = sbr.rel (%p494) target = $region64
        $region63: #{tpu_custom_call.1} parent=51 // pred_region
          %s497 = sand.u32 %s95, 1
          %s498 = scalar_lea.sflag [#allocation3], %s497
          %s499 = sand.u32 %s95, 1
          %s500 = smul.addr %s499, 48
          %s501 = scalar_lea.vmem [#allocation2], %s500
          %s503 = ssub.s32 768, 768
          %504 = vsyncadd %s498, %s503
          %s505 = smul.addr %s33, 6
          %s506 = smul.addr %s505, 128
          %s507 = scalar_lea.hbm %s2, %s506
          %s509 = sshll.u32 %s501, 4
          %s510 = int_to_ptr.vmem [resolvable:$true] %s509
          %512 = dma.hbm_to_vmem [thread:$0]  %s507, 768, %s510, %s498
        $region64: #{tpu_custom_call.1} parent=51 // pred_fallthru
          _
        // Predicated region
        $region65: #{tpu_custom_call.1} parent=51 // pred_check
          %p513 = pneg %p131
        $region66: #{tpu_custom_call.1} parent=51 // pred_check_branch
          %515 = sbr.rel (%p513) target = $region68
        $region67: #{tpu_custom_call.1} parent=51 // pred_region
          %p516 = scmp.lt.s32.totalorder %s33, 1
          %s517 = scalar_select %p516, %s33, 1
          %s518 = smul.addr %s517, 8
          %s519 = scalar_lea.vmem %s3, %s518
        $region68: #{tpu_custom_call.1} parent=51 // pred_fallthru
          _
        // Predicated region
        $region69: #{tpu_custom_call.1} parent=51 // pred_check
          %p520 = pneg %p157
        $region70: #{tpu_custom_call.1} parent=51 // pred_check_branch
          %522 = sbr.rel (%p520) target = $region72
        $region71: #{tpu_custom_call.1} parent=51 // pred_region
          %p523 = scmp.lt.s32.totalorder %s33, 1
          %s524 = scalar_select %p523, %s33, 1
          %s525 = smul.addr %s524, 8
          %s526 = scalar_lea.vmem %s4, %s525
        $region72: #{tpu_custom_call.1} parent=51 // pred_fallthru
          _
      $region52: #{tpu_custom_call.1} parent=5 // pred_fallthru
        _
      %p527 = scmp.le.s32.totalorder 1, %s33
      %p528 = scmp.lt.s32.totalorder %s33, 3
      %p529 = pnand %p527, %p528
      %p530 = pneg %p529
      // Predicated region
      $region73: #{tpu_custom_call.1} parent=5 // pred_check
        _
      $region74: #{tpu_custom_call.1} parent=5 // pred_check_branch
        %532 = sbr.rel (%p529) target = $region76
      $region75: #{tpu_custom_call.1} parent=5 // pred_region
        %s533 = ssub.s32 %s33, 1
        %s534 = sand.u32 %s98, 1
        %s535 = scalar_lea.sflag [#allocation3], %s534
        %s536 = sand.u32 %s98, 1
        %s537 = smul.addr %s536, 48
        %s538 = scalar_lea.vmem [#allocation2], %s537
        // Predicated region
        $region77: #{tpu_custom_call.1} parent=75 // pred_check
          %p539 = pneg %p111
        $region78: #{tpu_custom_call.1} parent=75 // pred_check_branch
          %541 = sbr.rel (%p539) target = $region80
        $region79: #{tpu_custom_call.1} parent=75 // pred_region
          %542 = dma.done %s535, 768
        $region80: #{tpu_custom_call.1} parent=75 // pred_fallthru
          _
        // Predicated region
        $region81: #{tpu_custom_call.1} parent=75 // pred_check
          %p543 = pneg %p184
        $region82: #{tpu_custom_call.1} parent=75 // pred_check_branch
          %545 = sbr.rel (%p543) target = $region84
        $region83: #{tpu_custom_call.1} parent=75 // pred_region
          %546 = dma.done [#allocation6], 24576
        $region84: #{tpu_custom_call.1} parent=75 // pred_fallthru
          _
        // Predicated region
        $region85: #{tpu_custom_call.1} parent=75 // pred_check
          %p547 = pneg %p247
        $region86: #{tpu_custom_call.1} parent=75 // pred_check_branch
          %549 = sbr.rel (%p547) target = $region88
        $region87: #{tpu_custom_call.1} parent=75 // pred_region
          %550 = dma.done [#allocation6], 12288
        $region88: #{tpu_custom_call.1} parent=75 // pred_fallthru
          _
        // Predicated region
        $region89: #{tpu_custom_call.1} parent=75 // pred_check
          %p551 = pneg %p289
        $region90: #{tpu_custom_call.1} parent=75 // pred_check_branch
          %553 = sbr.rel (%p551) target = $region92
        $region91: #{tpu_custom_call.1} parent=75 // pred_region
          %554 = dma.done [#allocation9], 12288
        $region92: #{tpu_custom_call.1} parent=75 // pred_fallthru
          _
        %p555 = scmp.lt.s32.totalorder %s38, 1
        %s556 = scalar_select %p555, %s38, 1
        %s557 = smul.addr %s556, 8
        %s558 = scalar_lea.vmem %s0, %s557
        %p559 = pneg %p59
        %p560 = pneg %p56
        %p561 = scmp.lt.s32.totalorder %s38, 1
        %s562 = scalar_select %p561, %s38, 1
        %s563 = smul.addr %s562, 8
        %s564 = scalar_lea.vmem %s1, %s563
        %p565 = pneg %p85
        %p566 = pneg %p82
        %s567 = sand.u32 %s98, 1
        %s568 = scalar_lea.sflag [#allocation3], %s567
        %s569 = sand.u32 %s98, 1
        %s570 = smul.addr %s569, 48
        %s571 = scalar_lea.vmem [#allocation2], %s570
        %p572 = pneg %p111
        %p573 = pneg %p108
        %p574 = scmp.lt.s32.totalorder %s38, 1
        %s575 = scalar_select %p574, %s38, 1
        %s576 = smul.addr %s575, 8
        %s577 = scalar_lea.vmem %s3, %s576
        %p578 = pneg %p137
        %p579 = pneg %p134
        %p580 = scmp.lt.s32.totalorder %s38, 1
        %s581 = scalar_select %p580, %s38, 1
        %s582 = smul.addr %s581, 8
        %s583 = scalar_lea.vmem %s4, %s582
        %p584 = pneg %p163
        %p585 = pneg %p160
        %p586 = pneg %p184
        %p587 = pneg %p181
        %p588 = pneg %p205
        %p589 = pneg %p202
        %p590 = pneg %p226
        %p591 = pneg %p223
        %p592 = pneg %p247
        %p593 = pneg %p244
        %p594 = pneg %p268
        %p595 = pneg %p265
        %p596 = pneg %p289
        %p597 = pneg %p286
        %p598 = pneg %p310
        %p599 = pneg %p307
        %p600 = pneg %p331
        %p601 = pneg %p328
        %p602 = pneg %p352
        %p603 = pneg %p349
        %p604 = pneg %p378
        %p605 = pneg %p375
        %s606 = sand.u32 %s365, 1
        %s607 = scalar_lea.sflag [#allocation4], %s606
        %s608 = sand.u32 %s365, 1
        %s609 = smul.addr %s608, 8
        %s610 = scalar_lea.vmem [#allocation10], %s609
        %p611 = pneg %p404
        %p612 = pneg %p401
        %s613 = sand.u32 %s391, 1
        %s614 = scalar_lea.sflag [#allocation12], %s613
        %s615 = sand.u32 %s391, 1
        %s616 = smul.addr %s615, 8
        %s617 = scalar_lea.vmem [#allocation11], %s616
        %p618 = scmp.lt.s32.totalorder %s38, 1
        %s619 = scalar_select %p618, %s38, 1
        %s620 = smul.addr %s619, 8
        %s621 = scalar_lea.vmem %s0, %s620
        %p622 = scmp.lt.s32.totalorder %s38, 1
        %s623 = scalar_select %p622, %s38, 1
        %s624 = smul.addr %s623, 8
        %s625 = scalar_lea.vmem %s1, %s624
        %p626 = scmp.lt.s32.totalorder %s38, 1
        %s627 = scalar_select %p626, %s38, 1
        %s628 = smul.addr %s627, 8
        %s629 = scalar_lea.vmem %s3, %s628
        %p630 = scmp.lt.s32.totalorder %s38, 1
        %s631 = scalar_select %p630, %s38, 1
        %s632 = smul.addr %s631, 8
        %s633 = scalar_lea.vmem %s4, %s632
        %v634 = vld [vmem:[%s625] sm:$0xff]
        %v635 = vld [vmem:[%s621] sm:$0xff]
        %v636 = vld [vmem:[%s538] sm:$0xff]
        %v637 = vld [vmem:[%s538 + $0x8] sm:$0xff]
        %v638 = vld [vmem:[%s538 + $0x10] sm:$0xff]
        %v639 = vld [vmem:[%s538 + $0x18] sm:$0xff]
        %v640 = vld [vmem:[%s538 + $0x20] sm:$0xff]
        %v641 = vld [vmem:[%s538 + $0x28] sm:$0xff]
        %v642 = vld [vmem:[#allocation5] sm:$0xff]
        %v643 = vld [vmem:[#allocation5 + $0x8] sm:$0xff]
        %v644 = vld [vmem:[#allocation5 + $0x10] sm:$0xff]
        %v645 = vld [vmem:[#allocation5 + $0x18] sm:$0xff]
        %v646 = vld [vmem:[#allocation5 + $0x20] sm:$0xff]
        %v647 = vld [vmem:[#allocation5 + $0x28] sm:$0xff]
        %v648 = vld [vmem:[#allocation5 + $0x30] sm:$0xff]
        %v649 = vld [vmem:[#allocation5 + $0x38] sm:$0xff]
        %v650 = vld [vmem:[#allocation5 + $0x40] sm:$0xff]
        %v651 = vld [vmem:[#allocation5 + $0x48] sm:$0xff]
        %v652 = vld [vmem:[#allocation5 + $0x50] sm:$0xff]
        %v653 = vld [vmem:[#allocation5 + $0x58] sm:$0xff]
        %v654 = vld [vmem:[#allocation5 + $0x60] sm:$0xff]
        %v655 = vld [vmem:[#allocation5 + $0x68] sm:$0xff]
        %v656 = vld [vmem:[#allocation5 + $0x70] sm:$0xff]
        %v657 = vld [vmem:[#allocation5 + $0x78] sm:$0xff]
        %v658 = vld [vmem:[#allocation5 + $0x80] sm:$0xff]
        %v659 = vld [vmem:[#allocation5 + $0x88] sm:$0xff]
        %v660 = vld [vmem:[#allocation5 + $0x90] sm:$0xff]
        %v661 = vld [vmem:[#allocation5 + $0x98] sm:$0xff]
        %v662 = vld [vmem:[#allocation5 + $0xa0] sm:$0xff]
        %v663 = vld [vmem:[#allocation5 + $0xa8] sm:$0xff]
        %v664 = vld [vmem:[#allocation5 + $0xb0] sm:$0xff]
        %v665 = vld [vmem:[#allocation5 + $0xb8] sm:$0xff]
        %v666 = vld [vmem:[#allocation5 + $0xc0] sm:$0xff]
        %v667 = vld [vmem:[#allocation5 + $0xc8] sm:$0xff]
        %v668 = vld [vmem:[#allocation5 + $0xd0] sm:$0xff]
        %v669 = vld [vmem:[#allocation5 + $0xd8] sm:$0xff]
        %v670 = vld [vmem:[#allocation5 + $0xe0] sm:$0xff]
        %v671 = vld [vmem:[#allocation5 + $0xe8] sm:$0xff]
        %v672 = vld [vmem:[#allocation5 + $0xf0] sm:$0xff]
        %v673 = vld [vmem:[#allocation5 + $0xf8] sm:$0xff]
        %v674 = vld [vmem:[#allocation5 + $0x100] sm:$0xff]
        %v675 = vld [vmem:[#allocation5 + $0x108] sm:$0xff]
        %v676 = vld [vmem:[#allocation5 + $0x110] sm:$0xff]
        %v677 = vld [vmem:[#allocation5 + $0x118] sm:$0xff]
        %v678 = vld [vmem:[#allocation5 + $0x120] sm:$0xff]
        %v679 = vld [vmem:[#allocation5 + $0x128] sm:$0xff]
        %v680 = vld [vmem:[#allocation5 + $0x130] sm:$0xff]
        %v681 = vld [vmem:[#allocation5 + $0x138] sm:$0xff]
        %v682 = vld [vmem:[#allocation5 + $0x140] sm:$0xff]
        %v683 = vld [vmem:[#allocation5 + $0x148] sm:$0xff]
        %v684 = vld [vmem:[#allocation5 + $0x150] sm:$0xff]
        %v685 = vld [vmem:[#allocation5 + $0x158] sm:$0xff]
        %v686 = vld [vmem:[#allocation5 + $0x160] sm:$0xff]
        %v687 = vld [vmem:[#allocation5 + $0x168] sm:$0xff]
        %v688 = vld [vmem:[#allocation5 + $0x170] sm:$0xff]
        %v689 = vld [vmem:[#allocation5 + $0x178] sm:$0xff]
        %v690 = vld [vmem:[#allocation5 + $0x180] sm:$0xff]
        %v691 = vld [vmem:[#allocation5 + $0x188] sm:$0xff]
        %v692 = vld [vmem:[#allocation5 + $0x190] sm:$0xff]
        %v693 = vld [vmem:[#allocation5 + $0x198] sm:$0xff]
        %v694 = vld [vmem:[#allocation5 + $0x1a0] sm:$0xff]
        %v695 = vld [vmem:[#allocation5 + $0x1a8] sm:$0xff]
        %v696 = vld [vmem:[#allocation5 + $0x1b0] sm:$0xff]
        %v697 = vld [vmem:[#allocation5 + $0x1b8] sm:$0xff]
        %v698 = vld [vmem:[#allocation5 + $0x1c0] sm:$0xff]
        %v699 = vld [vmem:[#allocation5 + $0x1c8] sm:$0xff]
        %v700 = vld [vmem:[#allocation5 + $0x1d0] sm:$0xff]
        %v701 = vld [vmem:[#allocation5 + $0x1d8] sm:$0xff]
        %v702 = vld [vmem:[#allocation5 + $0x1e0] sm:$0xff]
        %v703 = vld [vmem:[#allocation5 + $0x1e8] sm:$0xff]
        %v704 = vld [vmem:[#allocation5 + $0x1f0] sm:$0xff]
        %v705 = vld [vmem:[#allocation5 + $0x1f8] sm:$0xff]
        %v706 = vld [vmem:[#allocation5 + $0x200] sm:$0xff]
        %v707 = vld [vmem:[#allocation5 + $0x208] sm:$0xff]
        %v708 = vld [vmem:[#allocation5 + $0x210] sm:$0xff]
        %v709 = vld [vmem:[#allocation5 + $0x218] sm:$0xff]
        %v710 = vld [vmem:[#allocation5 + $0x220] sm:$0xff]
        %v711 = vld [vmem:[#allocation5 + $0x228] sm:$0xff]
        %v712 = vld [vmem:[#allocation5 + $0x230] sm:$0xff]
        %v713 = vld [vmem:[#allocation5 + $0x238] sm:$0xff]
        %v714 = vld [vmem:[#allocation5 + $0x240] sm:$0xff]
        %v715 = vld [vmem:[#allocation5 + $0x248] sm:$0xff]
        %v716 = vld [vmem:[#allocation5 + $0x250] sm:$0xff]
        %v717 = vld [vmem:[#allocation5 + $0x258] sm:$0xff]
        %v718 = vld [vmem:[#allocation5 + $0x260] sm:$0xff]
        %v719 = vld [vmem:[#allocation5 + $0x268] sm:$0xff]
        %v720 = vld [vmem:[#allocation5 + $0x270] sm:$0xff]
        %v721 = vld [vmem:[#allocation5 + $0x278] sm:$0xff]
        %v722 = vld [vmem:[#allocation5 + $0x280] sm:$0xff]
        %v723 = vld [vmem:[#allocation5 + $0x288] sm:$0xff]
        %v724 = vld [vmem:[#allocation5 + $0x290] sm:$0xff]
        %v725 = vld [vmem:[#allocation5 + $0x298] sm:$0xff]
        %v726 = vld [vmem:[#allocation5 + $0x2a0] sm:$0xff]
        %v727 = vld [vmem:[#allocation5 + $0x2a8] sm:$0xff]
        %v728 = vld [vmem:[#allocation5 + $0x2b0] sm:$0xff]
        %v729 = vld [vmem:[#allocation5 + $0x2b8] sm:$0xff]
        %v730 = vld [vmem:[#allocation5 + $0x2c0] sm:$0xff]
        %v731 = vld [vmem:[#allocation5 + $0x2c8] sm:$0xff]
        %v732 = vld [vmem:[#allocation5 + $0x2d0] sm:$0xff]
        %v733 = vld [vmem:[#allocation5 + $0x2d8] sm:$0xff]
        %v734 = vld [vmem:[#allocation5 + $0x2e0] sm:$0xff]
        %v735 = vld [vmem:[#allocation5 + $0x2e8] sm:$0xff]
        %v736 = vld [vmem:[#allocation5 + $0x2f0] sm:$0xff]
        %v737 = vld [vmem:[#allocation5 + $0x2f8] sm:$0xff]
        %v738 = vld [vmem:[#allocation5 + $0x300] sm:$0xff]
        %v739 = vld [vmem:[#allocation5 + $0x308] sm:$0xff]
        %v740 = vld [vmem:[#allocation5 + $0x310] sm:$0xff]
        %v741 = vld [vmem:[#allocation5 + $0x318] sm:$0xff]
        %v742 = vld [vmem:[#allocation5 + $0x320] sm:$0xff]
        %v743 = vld [vmem:[#allocation5 + $0x328] sm:$0xff]
        %v744 = vld [vmem:[#allocation5 + $0x330] sm:$0xff]
        %v745 = vld [vmem:[#allocation5 + $0x338] sm:$0xff]
        %v746 = vld [vmem:[#allocation5 + $0x340] sm:$0xff]
        %v747 = vld [vmem:[#allocation5 + $0x348] sm:$0xff]
        %v748 = vld [vmem:[#allocation5 + $0x350] sm:$0xff]
        %v749 = vld [vmem:[#allocation5 + $0x358] sm:$0xff]
        %v750 = vld [vmem:[#allocation5 + $0x360] sm:$0xff]
        %v751 = vld [vmem:[#allocation5 + $0x368] sm:$0xff]
        %v752 = vld [vmem:[#allocation5 + $0x370] sm:$0xff]
        %v753 = vld [vmem:[#allocation5 + $0x378] sm:$0xff]
        %v754 = vld [vmem:[#allocation5 + $0x380] sm:$0xff]
        %v755 = vld [vmem:[#allocation5 + $0x388] sm:$0xff]
        %v756 = vld [vmem:[#allocation5 + $0x390] sm:$0xff]
        %v757 = vld [vmem:[#allocation5 + $0x398] sm:$0xff]
        %v758 = vld [vmem:[#allocation5 + $0x3a0] sm:$0xff]
        %v759 = vld [vmem:[#allocation5 + $0x3a8] sm:$0xff]
        %v760 = vld [vmem:[#allocation5 + $0x3b0] sm:$0xff]
        %v761 = vld [vmem:[#allocation5 + $0x3b8] sm:$0xff]
        %v762 = vld [vmem:[#allocation5 + $0x3c0] sm:$0xff]
        %v763 = vld [vmem:[#allocation5 + $0x3c8] sm:$0xff]
        %v764 = vld [vmem:[#allocation5 + $0x3d0] sm:$0xff]
        %v765 = vld [vmem:[#allocation5 + $0x3d8] sm:$0xff]
        %v766 = vld [vmem:[#allocation5 + $0x3e0] sm:$0xff]
        %v767 = vld [vmem:[#allocation5 + $0x3e8] sm:$0xff]
        %v768 = vld [vmem:[#allocation5 + $0x3f0] sm:$0xff]
        %v769 = vld [vmem:[#allocation5 + $0x3f8] sm:$0xff]
        %v770 = vld [vmem:[#allocation5 + $0x400] sm:$0xff]
        %v771 = vld [vmem:[#allocation5 + $0x408] sm:$0xff]
        %v772 = vld [vmem:[#allocation5 + $0x410] sm:$0xff]
        %v773 = vld [vmem:[#allocation5 + $0x418] sm:$0xff]
        %v774 = vld [vmem:[#allocation5 + $0x420] sm:$0xff]
        %v775 = vld [vmem:[#allocation5 + $0x428] sm:$0xff]
        %v776 = vld [vmem:[#allocation5 + $0x430] sm:$0xff]
        %v777 = vld [vmem:[#allocation5 + $0x438] sm:$0xff]
        %v778 = vld [vmem:[#allocation5 + $0x440] sm:$0xff]
        %v779 = vld [vmem:[#allocation5 + $0x448] sm:$0xff]
        %v780 = vld [vmem:[#allocation5 + $0x450] sm:$0xff]
        %v781 = vld [vmem:[#allocation5 + $0x458] sm:$0xff]
        %v782 = vld [vmem:[#allocation5 + $0x460] sm:$0xff]
        %v783 = vld [vmem:[#allocation5 + $0x468] sm:$0xff]
        %v784 = vld [vmem:[#allocation5 + $0x470] sm:$0xff]
        %v785 = vld [vmem:[#allocation5 + $0x478] sm:$0xff]
        %v786 = vld [vmem:[#allocation5 + $0x480] sm:$0xff]
        %v787 = vld [vmem:[#allocation5 + $0x488] sm:$0xff]
        %v788 = vld [vmem:[#allocation5 + $0x490] sm:$0xff]
        %v789 = vld [vmem:[#allocation5 + $0x498] sm:$0xff]
        %v790 = vld [vmem:[#allocation5 + $0x4a0] sm:$0xff]
        %v791 = vld [vmem:[#allocation5 + $0x4a8] sm:$0xff]
        %v792 = vld [vmem:[#allocation5 + $0x4b0] sm:$0xff]
        %v793 = vld [vmem:[#allocation5 + $0x4b8] sm:$0xff]
        %v794 = vld [vmem:[#allocation5 + $0x4c0] sm:$0xff]
        %v795 = vld [vmem:[#allocation5 + $0x4c8] sm:$0xff]
        %v796 = vld [vmem:[#allocation5 + $0x4d0] sm:$0xff]
        %v797 = vld [vmem:[#allocation5 + $0x4d8] sm:$0xff]
        %v798 = vld [vmem:[#allocation5 + $0x4e0] sm:$0xff]
        %v799 = vld [vmem:[#allocation5 + $0x4e8] sm:$0xff]
        %v800 = vld [vmem:[#allocation5 + $0x4f0] sm:$0xff]
        %v801 = vld [vmem:[#allocation5 + $0x4f8] sm:$0xff]
        %v802 = vld [vmem:[#allocation5 + $0x500] sm:$0xff]
        %v803 = vld [vmem:[#allocation5 + $0x508] sm:$0xff]
        %v804 = vld [vmem:[#allocation5 + $0x510] sm:$0xff]
        %v805 = vld [vmem:[#allocation5 + $0x518] sm:$0xff]
        %v806 = vld [vmem:[#allocation5 + $0x520] sm:$0xff]
        %v807 = vld [vmem:[#allocation5 + $0x528] sm:$0xff]
        %v808 = vld [vmem:[#allocation5 + $0x530] sm:$0xff]
        %v809 = vld [vmem:[#allocation5 + $0x538] sm:$0xff]
        %v810 = vld [vmem:[#allocation5 + $0x540] sm:$0xff]
        %v811 = vld [vmem:[#allocation5 + $0x548] sm:$0xff]
        %v812 = vld [vmem:[#allocation5 + $0x550] sm:$0xff]
        %v813 = vld [vmem:[#allocation5 + $0x558] sm:$0xff]
        %v814 = vld [vmem:[#allocation5 + $0x560] sm:$0xff]
        %v815 = vld [vmem:[#allocation5 + $0x568] sm:$0xff]
        %v816 = vld [vmem:[#allocation5 + $0x570] sm:$0xff]
        %v817 = vld [vmem:[#allocation5 + $0x578] sm:$0xff]
        %v818 = vld [vmem:[#allocation5 + $0x580] sm:$0xff]
        %v819 = vld [vmem:[#allocation5 + $0x588] sm:$0xff]
        %v820 = vld [vmem:[#allocation5 + $0x590] sm:$0xff]
        %v821 = vld [vmem:[#allocation5 + $0x598] sm:$0xff]
        %v822 = vld [vmem:[#allocation5 + $0x5a0] sm:$0xff]
        %v823 = vld [vmem:[#allocation5 + $0x5a8] sm:$0xff]
        %v824 = vld [vmem:[#allocation5 + $0x5b0] sm:$0xff]
        %v825 = vld [vmem:[#allocation5 + $0x5b8] sm:$0xff]
        %v826 = vld [vmem:[#allocation5 + $0x5c0] sm:$0xff]
        %v827 = vld [vmem:[#allocation5 + $0x5c8] sm:$0xff]
        %v828 = vld [vmem:[#allocation5 + $0x5d0] sm:$0xff]
        %v829 = vld [vmem:[#allocation5 + $0x5d8] sm:$0xff]
        %v830 = vld [vmem:[#allocation5 + $0x5e0] sm:$0xff]
        %v831 = vld [vmem:[#allocation5 + $0x5e8] sm:$0xff]
        %v832 = vld [vmem:[#allocation5 + $0x5f0] sm:$0xff]
        %v833 = vld [vmem:[#allocation5 + $0x5f8] sm:$0xff]
        %v834 = vld [vmem:[%s629] sm:$0xff]
        %v835 = vld [vmem:[%s6] sm:$0xff]
        %v836 = vld [vmem:[%s6 + $0x8] sm:$0xff]
        %v837 = vld [vmem:[%s6 + $0x10] sm:$0xff]
        %v838 = vld [vmem:[%s6 + $0x18] sm:$0xff]
        %v839 = vld [vmem:[%s6 + $0x20] sm:$0xff]
        %v840 = vld [vmem:[%s6 + $0x28] sm:$0xff]
        %v841 = vld [vmem:[%s6 + $0x30] sm:$0xff]
        %v842 = vld [vmem:[%s6 + $0x38] sm:$0xff]
        %v843 = vld [vmem:[%s6 + $0x40] sm:$0xff]
        %v844 = vld [vmem:[%s6 + $0x48] sm:$0xff]
        %v845 = vld [vmem:[%s6 + $0x50] sm:$0xff]
        %v846 = vld [vmem:[%s6 + $0x58] sm:$0xff]
        %v847 = vld [vmem:[%s6 + $0x60] sm:$0xff]
        %v848 = vld [vmem:[%s6 + $0x68] sm:$0xff]
        %v849 = vld [vmem:[%s6 + $0x70] sm:$0xff]
        %v850 = vld [vmem:[%s6 + $0x78] sm:$0xff]
        %v851 = vld [vmem:[%s6 + $0x80] sm:$0xff]
        %v852 = vld [vmem:[%s6 + $0x88] sm:$0xff]
        %v853 = vld [vmem:[%s6 + $0x90] sm:$0xff]
        %v854 = vld [vmem:[%s6 + $0x98] sm:$0xff]
        %v855 = vld [vmem:[%s6 + $0xa0] sm:$0xff]
        %v856 = vld [vmem:[%s6 + $0xa8] sm:$0xff]
        %v857 = vld [vmem:[%s6 + $0xb0] sm:$0xff]
        %v858 = vld [vmem:[%s6 + $0xb8] sm:$0xff]
        %v859 = vld [vmem:[%s6 + $0xc0] sm:$0xff]
        %v860 = vld [vmem:[%s6 + $0xc8] sm:$0xff]
        %v861 = vld [vmem:[%s6 + $0xd0] sm:$0xff]
        %v862 = vld [vmem:[%s6 + $0xd8] sm:$0xff]
        %v863 = vld [vmem:[%s6 + $0xe0] sm:$0xff]
        %v864 = vld [vmem:[%s6 + $0xe8] sm:$0xff]
        %v865 = vld [vmem:[%s6 + $0xf0] sm:$0xff]
        %v866 = vld [vmem:[%s6 + $0xf8] sm:$0xff]
        %867 = vmatprep.subr.mxu0 %v836
        %868 = vmatpush1.msra.mxu0 %v835
        %869 = vmatprep.subr.mxu0 %v838
        %870 = vmatpush1.msra.mxu0 %v837
        %871 = vmatprep.subr.mxu0 %v840
        %872 = vmatpush1.msra.mxu0 %v839
        %873 = vmatprep.subr.mxu0 %v842
        %874 = vmatpush1.msra.mxu0 %v841
        %875 = vmatprep.subr.mxu0 %v844
        %876 = vmatpush1.msra.mxu0 %v843
        %877 = vmatprep.subr.mxu0 %v846
        %878 = vmatpush1.msra.mxu0 %v845
        %879 = vmatprep.subr.mxu0 %v848
        %880 = vmatpush1.msra.mxu0 %v847
        %881 = vmatprep.subr.mxu0 %v850
        %882 = vmatpush1.msra.mxu0 %v849
        %883 = vmatprep.subr.mxu0 %v852
        %884 = vmatpush1.msra.mxu0 %v851
        %885 = vmatprep.subr.mxu0 %v854
        %886 = vmatpush1.msra.mxu0 %v853
        %887 = vmatprep.subr.mxu0 %v856
        %888 = vmatpush1.msra.mxu0 %v855
        %889 = vmatprep.subr.mxu0 %v858
        %890 = vmatpush1.msra.mxu0 %v857
        %891 = vmatprep.subr.mxu0 %v860
        %892 = vmatpush1.msra.mxu0 %v859
        %893 = vmatprep.subr.mxu0 %v862
        %894 = vmatpush1.msra.mxu0 %v861
        %895 = vmatprep.subr.mxu0 %v864
        %896 = vmatpush1.msra.mxu0 %v863
        %897 = vmatprep.subr.mxu0 %v866
        %898 = vmatpush1.msra.mxu0 %v865
        %899 = vmatprep.subr.mxu0 0.0
        %900 = vmatpush1.msra.mxu0 0.0
        %901 = vmatprep.subr.mxu0 0.0
        %902 = vmatpush1.msra.mxu0 0.0
        %903 = vmatprep.subr.mxu0 0.0
        %904 = vmatpush1.msra.mxu0 0.0
        %905 = vmatprep.subr.mxu0 0.0
        %906 = vmatpush1.msra.mxu0 0.0
        %907 = vmatprep.subr.mxu0 0.0
        %908 = vmatpush1.msra.mxu0 0.0
        %909 = vmatprep.subr.mxu0 0.0
        %910 = vmatpush1.msra.mxu0 0.0
        %911 = vmatprep.subr.mxu0 0.0
        %912 = vmatpush1.msra.mxu0 0.0
        %913 = vmatprep.subr.mxu0 0.0
        %914 = vmatpush1.msra.mxu0 0.0
        %915 = vmatprep.subr.mxu0 0.0
        %916 = vmatpush1.msra.mxu0 0.0
        %917 = vmatprep.subr.mxu0 0.0
        %918 = vmatpush1.msra.mxu0 0.0
        %919 = vmatprep.subr.mxu0 0.0
        %920 = vmatpush1.msra.mxu0 0.0
        %921 = vmatprep.subr.mxu0 0.0
        %922 = vmatpush1.msra.mxu0 0.0
        %923 = vmatprep.subr.mxu0 0.0
        %924 = vmatpush1.msra.mxu0 0.0
        %925 = vmatprep.subr.mxu0 0.0
        %926 = vmatpush1.msra.mxu0 0.0
        %927 = vmatprep.subr.mxu0 0.0
        %928 = vmatpush1.msra.mxu0 0.0
        %929 = vmatprep.subr.mxu0 0.0
        %930 = vmatpush1.msra.mxu0 0.0
        %931 = vmatprep.mubr.f32.mxu0 0.0
        %932 = vmatmul.mubr.f32.gmra.mrb[0].mxu0 %v834
        %v933 = vpop.f32.mrb[0].mxu0
        %v934 = vadd.f32 0.0, %v933
        %v935 = vpop.f32.mrb[0].mxu0
        %v936 = vadd.f32 0.0, %v935
        %937 = vdwg.mxu0
        %938 = vmatprep.subr.mxu0 %v643
        %939 = vmatpush1.msra.mxu0 %v642
        %940 = vmatprep.subr.mxu0 %v645
        %941 = vmatpush1.msra.mxu0 %v644
        %942 = vmatprep.subr.mxu0 %v647
        %943 = vmatpush1.msra.mxu0 %v646
        %944 = vmatprep.subr.mxu0 %v649
        %945 = vmatpush1.msra.mxu0 %v648
        %946 = vmatprep.subr.mxu0 %v651
        %947 = vmatpush1.msra.mxu0 %v650
        %948 = vmatprep.subr.mxu0 %v653
        %949 = vmatpush1.msra.mxu0 %v652
        %950 = vmatprep.subr.mxu0 %v655
        %951 = vmatpush1.msra.mxu0 %v654
        %952 = vmatprep.subr.mxu0 %v657
        %953 = vmatpush1.msra.mxu0 %v656
        %954 = vmatprep.subr.mxu0 %v659
        %955 = vmatpush1.msra.mxu0 %v658
        %956 = vmatprep.subr.mxu0 %v661
        %957 = vmatpush1.msra.mxu0 %v660
        %958 = vmatprep.subr.mxu0 %v663
        %959 = vmatpush1.msra.mxu0 %v662
        %960 = vmatprep.subr.mxu0 %v665
        %961 = vmatpush1.msra.mxu0 %v664
        %962 = vmatprep.subr.mxu0 %v667
        %963 = vmatpush1.msra.mxu0 %v666
        %964 = vmatprep.subr.mxu0 %v669
        %965 = vmatpush1.msra.mxu0 %v668
        %966 = vmatprep.subr.mxu0 %v671
        %967 = vmatpush1.msra.mxu0 %v670
        %968 = vmatprep.subr.mxu0 %v673
        %969 = vmatpush1.msra.mxu0 %v672
        %970 = vmatprep.subr.mxu0 %v675
        %971 = vmatpush1.msra.mxu0 %v674
        %972 = vmatprep.subr.mxu0 %v677
        %973 = vmatpush1.msra.mxu0 %v676
        %974 = vmatprep.subr.mxu0 %v679
        %975 = vmatpush1.msra.mxu0 %v678
        %976 = vmatprep.subr.mxu0 %v681
        %977 = vmatpush1.msra.mxu0 %v680
        %978 = vmatprep.subr.mxu0 %v683
        %979 = vmatpush1.msra.mxu0 %v682
        %980 = vmatprep.subr.mxu0 %v685
        %981 = vmatpush1.msra.mxu0 %v684
        %982 = vmatprep.subr.mxu0 %v687
        %983 = vmatpush1.msra.mxu0 %v686
        %984 = vmatprep.subr.mxu0 %v689
        %985 = vmatpush1.msra.mxu0 %v688
        %986 = vmatprep.subr.mxu0 %v691
        %987 = vmatpush1.msra.mxu0 %v690
        %988 = vmatprep.subr.mxu0 %v693
        %989 = vmatpush1.msra.mxu0 %v692
        %990 = vmatprep.subr.mxu0 %v695
        %991 = vmatpush1.msra.mxu0 %v694
        %992 = vmatprep.subr.mxu0 %v697
        %993 = vmatpush1.msra.mxu0 %v696
        %994 = vmatprep.subr.mxu0 %v699
        %995 = vmatpush1.msra.mxu0 %v698
        %996 = vmatprep.subr.mxu0 %v701
        %997 = vmatpush1.msra.mxu0 %v700
        %998 = vmatprep.subr.mxu0 %v703
        %999 = vmatpush1.msra.mxu0 %v702
        %1000 = vmatprep.subr.mxu0 %v705
        %1001 = vmatpush1.msra.mxu0 %v704
        %1002 = vmatprep.mubr.f32.mxu0 %v637
        %1003 = vmatmul.mubr.f32.gmra.mrb[0].mxu0 %v636
        %v1004 = vpop.f32.mrb[0].mxu0
        %v1005 = vadd.f32 %v934, %v1004
        %v1006 = vpop.f32.mrb[0].mxu0
        %v1007 = vadd.f32 %v936, %v1006
        %1008 = vdwg.mxu0
        %1009 = vmatprep.subr.mxu0 %v707
        %1010 = vmatpush1.msra.mxu0 %v706
        %1011 = vmatprep.subr.mxu0 %v709
        %1012 = vmatpush1.msra.mxu0 %v708
        %1013 = vmatprep.subr.mxu0 %v711
        %1014 = vmatpush1.msra.mxu0 %v710
        %1015 = vmatprep.subr.mxu0 %v713
        %1016 = vmatpush1.msra.mxu0 %v712
        %1017 = vmatprep.subr.mxu0 %v715
        %1018 = vmatpush1.msra.mxu0 %v714
        %1019 = vmatprep.subr.mxu0 %v717
        %1020 = vmatpush1.msra.mxu0 %v716
        %1021 = vmatprep.subr.mxu0 %v719
        %1022 = vmatpush1.msra.mxu0 %v718
        %1023 = vmatprep.subr.mxu0 %v721
        %1024 = vmatpush1.msra.mxu0 %v720
        %1025 = vmatprep.subr.mxu0 %v723
        %1026 = vmatpush1.msra.mxu0 %v722
        %1027 = vmatprep.subr.mxu0 %v725
        %1028 = vmatpush1.msra.mxu0 %v724
        %1029 = vmatprep.subr.mxu0 %v727
        %1030 = vmatpush1.msra.mxu0 %v726
        %1031 = vmatprep.subr.mxu0 %v729
        %1032 = vmatpush1.msra.mxu0 %v728
        %1033 = vmatprep.subr.mxu0 %v731
        %1034 = vmatpush1.msra.mxu0 %v730
        %1035 = vmatprep.subr.mxu0 %v733
        %1036 = vmatpush1.msra.mxu0 %v732
        %1037 = vmatprep.subr.mxu0 %v735
        %1038 = vmatpush1.msra.mxu0 %v734
        %1039 = vmatprep.subr.mxu0 %v737
        %1040 = vmatpush1.msra.mxu0 %v736
        %1041 = vmatprep.subr.mxu0 %v739
        %1042 = vmatpush1.msra.mxu0 %v738
        %1043 = vmatprep.subr.mxu0 %v741
        %1044 = vmatpush1.msra.mxu0 %v740
        %1045 = vmatprep.subr.mxu0 %v743
        %1046 = vmatpush1.msra.mxu0 %v742
        %1047 = vmatprep.subr.mxu0 %v745
        %1048 = vmatpush1.msra.mxu0 %v744
        %1049 = vmatprep.subr.mxu0 %v747
        %1050 = vmatpush1.msra.mxu0 %v746
        %1051 = vmatprep.subr.mxu0 %v749
        %1052 = vmatpush1.msra.mxu0 %v748
        %1053 = vmatprep.subr.mxu0 %v751
        %1054 = vmatpush1.msra.mxu0 %v750
        %1055 = vmatprep.subr.mxu0 %v753
        %1056 = vmatpush1.msra.mxu0 %v752
        %1057 = vmatprep.subr.mxu0 %v755
        %1058 = vmatpush1.msra.mxu0 %v754
        %1059 = vmatprep.subr.mxu0 %v757
        %1060 = vmatpush1.msra.mxu0 %v756
        %1061 = vmatprep.subr.mxu0 %v759
        %1062 = vmatpush1.msra.mxu0 %v758
        %1063 = vmatprep.subr.mxu0 %v761
        %1064 = vmatpush1.msra.mxu0 %v760
        %1065 = vmatprep.subr.mxu0 %v763
        %1066 = vmatpush1.msra.mxu0 %v762
        %1067 = vmatprep.subr.mxu0 %v765
        %1068 = vmatpush1.msra.mxu0 %v764
        %1069 = vmatprep.subr.mxu0 %v767
        %1070 = vmatpush1.msra.mxu0 %v766
        %1071 = vmatprep.subr.mxu0 %v769
        %1072 = vmatpush1.msra.mxu0 %v768
        %1073 = vmatprep.mubr.f32.mxu0 %v639
        %1074 = vmatmul.mubr.f32.gmra.mrb[0].mxu0 %v638
        %v1075 = vpop.f32.mrb[0].mxu0
        %v1076 = vadd.f32 %v1005, %v1075
        %v1077 = vpop.f32.mrb[0].mxu0
        %v1078 = vadd.f32 %v1007, %v1077
        %1079 = vdwg.mxu0
        %1080 = vmatprep.subr.mxu0 %v771
        %1081 = vmatpush1.msra.mxu0 %v770
        %1082 = vmatprep.subr.mxu0 %v773
        %1083 = vmatpush1.msra.mxu0 %v772
        %1084 = vmatprep.subr.mxu0 %v775
        %1085 = vmatpush1.msra.mxu0 %v774
        %1086 = vmatprep.subr.mxu0 %v777
        %1087 = vmatpush1.msra.mxu0 %v776
        %1088 = vmatprep.subr.mxu0 %v779
        %1089 = vmatpush1.msra.mxu0 %v778
        %1090 = vmatprep.subr.mxu0 %v781
        %1091 = vmatpush1.msra.mxu0 %v780
        %1092 = vmatprep.subr.mxu0 %v783
        %1093 = vmatpush1.msra.mxu0 %v782
        %1094 = vmatprep.subr.mxu0 %v785
        %1095 = vmatpush1.msra.mxu0 %v784
        %1096 = vmatprep.subr.mxu0 %v787
        %1097 = vmatpush1.msra.mxu0 %v786
        %1098 = vmatprep.subr.mxu0 %v789
        %1099 = vmatpush1.msra.mxu0 %v788
        %1100 = vmatprep.subr.mxu0 %v791
        %1101 = vmatpush1.msra.mxu0 %v790
        %1102 = vmatprep.subr.mxu0 %v793
        %1103 = vmatpush1.msra.mxu0 %v792
        %1104 = vmatprep.subr.mxu0 %v795
        %1105 = vmatpush1.msra.mxu0 %v794
        %1106 = vmatprep.subr.mxu0 %v797
        %1107 = vmatpush1.msra.mxu0 %v796
        %1108 = vmatprep.subr.mxu0 %v799
        %1109 = vmatpush1.msra.mxu0 %v798
        %1110 = vmatprep.subr.mxu0 %v801
        %1111 = vmatpush1.msra.mxu0 %v800
        %1112 = vmatprep.subr.mxu0 %v803
        %1113 = vmatpush1.msra.mxu0 %v802
        %1114 = vmatprep.subr.mxu0 %v805
        %1115 = vmatpush1.msra.mxu0 %v804
        %1116 = vmatprep.subr.mxu0 %v807
        %1117 = vmatpush1.msra.mxu0 %v806
        %1118 = vmatprep.subr.mxu0 %v809
        %1119 = vmatpush1.msra.mxu0 %v808
        %1120 = vmatprep.subr.mxu0 %v811
        %1121 = vmatpush1.msra.mxu0 %v810
        %1122 = vmatprep.subr.mxu0 %v813
        %1123 = vmatpush1.msra.mxu0 %v812
        %1124 = vmatprep.subr.mxu0 %v815
        %1125 = vmatpush1.msra.mxu0 %v814
        %1126 = vmatprep.subr.mxu0 %v817
        %1127 = vmatpush1.msra.mxu0 %v816
        %1128 = vmatprep.subr.mxu0 %v819
        %1129 = vmatpush1.msra.mxu0 %v818
        %1130 = vmatprep.subr.mxu0 %v821
        %1131 = vmatpush1.msra.mxu0 %v820
        %1132 = vmatprep.subr.mxu0 %v823
        %1133 = vmatpush1.msra.mxu0 %v822
        %1134 = vmatprep.subr.mxu0 %v825
        %1135 = vmatpush1.msra.mxu0 %v824
        %1136 = vmatprep.subr.mxu0 %v827
        %1137 = vmatpush1.msra.mxu0 %v826
        %1138 = vmatprep.subr.mxu0 %v829
        %1139 = vmatpush1.msra.mxu0 %v828
        %1140 = vmatprep.subr.mxu0 %v831
        %1141 = vmatpush1.msra.mxu0 %v830
        %1142 = vmatprep.subr.mxu0 %v833
        %1143 = vmatpush1.msra.mxu0 %v832
        %1144 = vmatprep.mubr.f32.mxu0 %v641
        %1145 = vmatmul.mubr.f32.gmra.mrb[0].mxu0 %v640
        %v1146 = vpop.f32.mrb[0].mxu0
        %v1147 = vadd.f32 %v1076, %v1146
        %v1148 = vpop.f32.mrb[0].mxu0
        %v1149 = vadd.f32 %v1078, %v1148
        %1150 = vdwg.mxu0
        %v1151 = vld [vmem:[%s7] sm:$0x3]
        %v1153 = vlaneseq
        %v1154 = vshrl.u32 %v1153, 7
        %v1155 = vsub.s32 0, %v1154
        %v1156 = vrot.slane %v1151, %v1155
        %v1157 = vlaneseq
        %v1158 = vshrl.u32 %v1157, 7
        %v1159 = vsub.s32 1, %v1158
        %v1160 = vrot.slane %v1151, %v1159
        %v1163 = vadd.f32 %v1147, %v1156
        %v1164 = vadd.f32 %v1149, %v1160
        %v1165 = vmax.f32 %v1163, 0.0
        %v1166 = vmax.f32 %v1164, 0.0
        %v1167 = vld [vmem:[%s633] sm:$0xff]
        %1169 = vset.pattern.permute.xlu0 0
        %1170 = vperm.xlu0 %1169, %v634
        %v1171 = vpop.permute.xlu0 %1170
        %v1173 = vmul.f32 %v1167, %v1171
        %v1174 = vld [vmem:[#allocation8] sm:$0xff]
        %v1175 = vld [vmem:[#allocation8 + $0x8] sm:$0xff]
        %v1176 = vld [vmem:[#allocation8 + $0x10] sm:$0xff]
        %v1177 = vld [vmem:[#allocation8 + $0x18] sm:$0xff]
        %v1178 = vld [vmem:[#allocation8 + $0x20] sm:$0xff]
        %v1179 = vld [vmem:[#allocation8 + $0x28] sm:$0xff]
        %v1180 = vld [vmem:[#allocation8 + $0x30] sm:$0xff]
        %v1181 = vld [vmem:[#allocation8 + $0x38] sm:$0xff]
        %v1182 = vld [vmem:[#allocation8 + $0x40] sm:$0xff]
        %v1183 = vld [vmem:[#allocation8 + $0x48] sm:$0xff]
        %v1184 = vld [vmem:[#allocation8 + $0x50] sm:$0xff]
        %v1185 = vld [vmem:[#allocation8 + $0x58] sm:$0xff]
        %v1186 = vld [vmem:[#allocation8 + $0x60] sm:$0xff]
        %v1187 = vld [vmem:[#allocation8 + $0x68] sm:$0xff]
        %v1188 = vld [vmem:[#allocation8 + $0x70] sm:$0xff]
        %v1189 = vld [vmem:[#allocation8 + $0x78] sm:$0xff]
        %v1190 = vld [vmem:[#allocation8 + $0x80] sm:$0xff]
        %v1191 = vld [vmem:[#allocation8 + $0x88] sm:$0xff]
        %v1192 = vld [vmem:[#allocation8 + $0x90] sm:$0xff]
        %v1193 = vld [vmem:[#allocation8 + $0x98] sm:$0xff]
        %v1194 = vld [vmem:[#allocation8 + $0xa0] sm:$0xff]
        %v1195 = vld [vmem:[#allocation8 + $0xa8] sm:$0xff]
        %v1196 = vld [vmem:[#allocation8 + $0xb0] sm:$0xff]
        %v1197 = vld [vmem:[#allocation8 + $0xb8] sm:$0xff]
        %v1198 = vld [vmem:[#allocation8 + $0xc0] sm:$0xff]
        %v1199 = vld [vmem:[#allocation8 + $0xc8] sm:$0xff]
        %v1200 = vld [vmem:[#allocation8 + $0xd0] sm:$0xff]
        %v1201 = vld [vmem:[#allocation8 + $0xd8] sm:$0xff]
        %v1202 = vld [vmem:[#allocation8 + $0xe0] sm:$0xff]
        %v1203 = vld [vmem:[#allocation8 + $0xe8] sm:$0xff]
        %v1204 = vld [vmem:[#allocation8 + $0xf0] sm:$0xff]
        %v1205 = vld [vmem:[#allocation8 + $0xf8] sm:$0xff]
        %v1206 = vld [vmem:[#allocation8 + $0x100] sm:$0xff]
        %v1207 = vld [vmem:[#allocation8 + $0x108] sm:$0xff]
        %v1208 = vld [vmem:[#allocation8 + $0x110] sm:$0xff]
        %v1209 = vld [vmem:[#allocation8 + $0x118] sm:$0xff]
        %v1210 = vld [vmem:[#allocation8 + $0x120] sm:$0xff]
        %v1211 = vld [vmem:[#allocation8 + $0x128] sm:$0xff]
        %v1212 = vld [vmem:[#allocation8 + $0x130] sm:$0xff]
        %v1213 = vld [vmem:[#allocation8 + $0x138] sm:$0xff]
        %v1214 = vld [vmem:[#allocation8 + $0x140] sm:$0xff]
        %v1215 = vld [vmem:[#allocation8 + $0x148] sm:$0xff]
        %v1216 = vld [vmem:[#allocation8 + $0x150] sm:$0xff]
        %v1217 = vld [vmem:[#allocation8 + $0x158] sm:$0xff]
        %v1218 = vld [vmem:[#allocation8 + $0x160] sm:$0xff]
        %v1219 = vld [vmem:[#allocation8 + $0x168] sm:$0xff]
        %v1220 = vld [vmem:[#allocation8 + $0x170] sm:$0xff]
        %v1221 = vld [vmem:[#allocation8 + $0x178] sm:$0xff]
        %v1222 = vld [vmem:[#allocation8 + $0x180] sm:$0xff]
        %v1223 = vld [vmem:[#allocation8 + $0x188] sm:$0xff]
        %v1224 = vld [vmem:[#allocation8 + $0x190] sm:$0xff]
        %v1225 = vld [vmem:[#allocation8 + $0x198] sm:$0xff]
        %v1226 = vld [vmem:[#allocation8 + $0x1a0] sm:$0xff]
        %v1227 = vld [vmem:[#allocation8 + $0x1a8] sm:$0xff]
        %v1228 = vld [vmem:[#allocation8 + $0x1b0] sm:$0xff]
        %v1229 = vld [vmem:[#allocation8 + $0x1b8] sm:$0xff]
        %v1230 = vld [vmem:[#allocation8 + $0x1c0] sm:$0xff]
        %v1231 = vld [vmem:[#allocation8 + $0x1c8] sm:$0xff]
        %v1232 = vld [vmem:[#allocation8 + $0x1d0] sm:$0xff]
        %v1233 = vld [vmem:[#allocation8 + $0x1d8] sm:$0xff]
        %v1234 = vld [vmem:[#allocation8 + $0x1e0] sm:$0xff]
        %v1235 = vld [vmem:[#allocation8 + $0x1e8] sm:$0xff]
        %v1236 = vld [vmem:[#allocation8 + $0x1f0] sm:$0xff]
        %v1237 = vld [vmem:[#allocation8 + $0x1f8] sm:$0xff]
        %v1238 = vld [vmem:[#allocation8 + $0x200] sm:$0xff]
        %v1239 = vld [vmem:[#allocation8 + $0x208] sm:$0xff]
        %v1240 = vld [vmem:[#allocation8 + $0x210] sm:$0xff]
        %v1241 = vld [vmem:[#allocation8 + $0x218] sm:$0xff]
        %v1242 = vld [vmem:[#allocation8 + $0x220] sm:$0xff]
        %v1243 = vld [vmem:[#allocation8 + $0x228] sm:$0xff]
        %v1244 = vld [vmem:[#allocation8 + $0x230] sm:$0xff]
        %v1245 = vld [vmem:[#allocation8 + $0x238] sm:$0xff]
        %v1246 = vld [vmem:[#allocation8 + $0x240] sm:$0xff]
        %v1247 = vld [vmem:[#allocation8 + $0x248] sm:$0xff]
        %v1248 = vld [vmem:[#allocation8 + $0x250] sm:$0xff]
        %v1249 = vld [vmem:[#allocation8 + $0x258] sm:$0xff]
        %v1250 = vld [vmem:[#allocation8 + $0x260] sm:$0xff]
        %v1251 = vld [vmem:[#allocation8 + $0x268] sm:$0xff]
        %v1252 = vld [vmem:[#allocation8 + $0x270] sm:$0xff]
        %v1253 = vld [vmem:[#allocation8 + $0x278] sm:$0xff]
        %v1254 = vld [vmem:[#allocation8 + $0x280] sm:$0xff]
        %v1255 = vld [vmem:[#allocation8 + $0x288] sm:$0xff]
        %v1256 = vld [vmem:[#allocation8 + $0x290] sm:$0xff]
        %v1257 = vld [vmem:[#allocation8 + $0x298] sm:$0xff]
        %v1258 = vld [vmem:[#allocation8 + $0x2a0] sm:$0xff]
        %v1259 = vld [vmem:[#allocation8 + $0x2a8] sm:$0xff]
        %v1260 = vld [vmem:[#allocation8 + $0x2b0] sm:$0xff]
        %v1261 = vld [vmem:[#allocation8 + $0x2b8] sm:$0xff]
        %v1262 = vld [vmem:[#allocation8 + $0x2c0] sm:$0xff]
        %v1263 = vld [vmem:[#allocation8 + $0x2c8] sm:$0xff]
        %v1264 = vld [vmem:[#allocation8 + $0x2d0] sm:$0xff]
        %v1265 = vld [vmem:[#allocation8 + $0x2d8] sm:$0xff]
        %v1266 = vld [vmem:[#allocation8 + $0x2e0] sm:$0xff]
        %v1267 = vld [vmem:[#allocation8 + $0x2e8] sm:$0xff]
        %v1268 = vld [vmem:[#allocation8 + $0x2f0] sm:$0xff]
        %v1269 = vld [vmem:[#allocation8 + $0x2f8] sm:$0xff]
        %v1270 = vld [vmem:[%s11] sm:$0x3f]
        %v1272 = vlaneseq
        %v1273 = vshrl.u32 %v1272, 7
        %v1274 = vsub.s32 0, %v1273
        %v1275 = vrot.slane %v1270, %v1274
        %v1276 = vlaneseq
        %v1277 = vshrl.u32 %v1276, 7
        %v1278 = vsub.s32 1, %v1277
        %v1279 = vrot.slane %v1270, %v1278
        %v1280 = vlaneseq
        %v1281 = vshrl.u32 %v1280, 7
        %v1282 = vsub.s32 2, %v1281
        %v1283 = vrot.slane %v1270, %v1282
        %v1284 = vlaneseq
        %v1285 = vshrl.u32 %v1284, 7
        %v1286 = vsub.s32 3, %v1285
        %v1287 = vrot.slane %v1270, %v1286
        %v1288 = vlaneseq
        %v1289 = vshrl.u32 %v1288, 7
        %v1290 = vsub.s32 4, %v1289
        %v1291 = vrot.slane %v1270, %v1290
        %v1292 = vlaneseq
        %v1293 = vshrl.u32 %v1292, 7
        %v1294 = vsub.s32 5, %v1293
        %v1295 = vrot.slane %v1270, %v1294
        %1302 = vmatprep.subr.mxu0 %v1175
        %1303 = vmatpush1.msra.mxu0 %v1174
        %1304 = vmatprep.subr.mxu0 %v1181
        %1305 = vmatpush1.msra.mxu0 %v1180
        %1306 = vmatprep.subr.mxu0 %v1187
        %1307 = vmatpush1.msra.mxu0 %v1186
        %1308 = vmatprep.subr.mxu0 %v1193
        %1309 = vmatpush1.msra.mxu0 %v1192
        %1310 = vmatprep.subr.mxu0 %v1199
        %1311 = vmatpush1.msra.mxu0 %v1198
        %1312 = vmatprep.subr.mxu0 %v1205
        %1313 = vmatpush1.msra.mxu0 %v1204
        %1314 = vmatprep.subr.mxu0 %v1211
        %1315 = vmatpush1.msra.mxu0 %v1210
        %1316 = vmatprep.subr.mxu0 %v1217
        %1317 = vmatpush1.msra.mxu0 %v1216
        %1318 = vmatprep.subr.mxu0 %v1223
        %1319 = vmatpush1.msra.mxu0 %v1222
        %1320 = vmatprep.subr.mxu0 %v1229
        %1321 = vmatpush1.msra.mxu0 %v1228
        %1322 = vmatprep.subr.mxu0 %v1235
        %1323 = vmatpush1.msra.mxu0 %v1234
        %1324 = vmatprep.subr.mxu0 %v1241
        %1325 = vmatpush1.msra.mxu0 %v1240
        %1326 = vmatprep.subr.mxu0 %v1247
        %1327 = vmatpush1.msra.mxu0 %v1246
        %1328 = vmatprep.subr.mxu0 %v1253
        %1329 = vmatpush1.msra.mxu0 %v1252
        %1330 = vmatprep.subr.mxu0 %v1259
        %1331 = vmatpush1.msra.mxu0 %v1258
        %1332 = vmatprep.subr.mxu0 %v1265
        %1333 = vmatpush1.msra.mxu0 %v1264
        %1334 = vmatprep.subr.mxu0 0.0
        %1335 = vmatpush1.msra.mxu0 0.0
        %1336 = vmatprep.subr.mxu0 0.0
        %1337 = vmatpush1.msra.mxu0 0.0
        %1338 = vmatprep.subr.mxu0 0.0
        %1339 = vmatpush1.msra.mxu0 0.0
        %1340 = vmatprep.subr.mxu0 0.0
        %1341 = vmatpush1.msra.mxu0 0.0
        %1342 = vmatprep.subr.mxu0 0.0
        %1343 = vmatpush1.msra.mxu0 0.0
        %1344 = vmatprep.subr.mxu0 0.0
        %1345 = vmatpush1.msra.mxu0 0.0
        %1346 = vmatprep.subr.mxu0 0.0
        %1347 = vmatpush1.msra.mxu0 0.0
        %1348 = vmatprep.subr.mxu0 0.0
        %1349 = vmatpush1.msra.mxu0 0.0
        %1350 = vmatprep.subr.mxu0 0.0
        %1351 = vmatpush1.msra.mxu0 0.0
        %1352 = vmatprep.subr.mxu0 0.0
        %1353 = vmatpush1.msra.mxu0 0.0
        %1354 = vmatprep.subr.mxu0 0.0
        %1355 = vmatpush1.msra.mxu0 0.0
        %1356 = vmatprep.subr.mxu0 0.0
        %1357 = vmatpush1.msra.mxu0 0.0
        %1358 = vmatprep.subr.mxu0 0.0
        %1359 = vmatpush1.msra.mxu0 0.0
        %1360 = vmatprep.subr.mxu0 0.0
        %1361 = vmatpush1.msra.mxu0 0.0
        %1362 = vmatprep.subr.mxu0 0.0
        %1363 = vmatpush1.msra.mxu0 0.0
        %1364 = vmatprep.subr.mxu0 0.0
        %1365 = vmatpush1.msra.mxu0 0.0
        %1366 = vmatprep.mubr.f32.mxu0 0.0
        %1367 = vmatmul.mubr.f32.gmra.mrb[0].mxu0 %v1173
        %v1368 = vpop.f32.mrb[0].mxu0
        %v1369 = vadd.f32 %v1275, %v1368
        %v1370 = vpop.f32.mrb[0].mxu0
        %v1371 = vadd.f32 %v1279, %v1370
        %1372 = vdwg.mxu0
        %1373 = vmatprep.subr.mxu0 %v1177
        %1374 = vmatpush1.msra.mxu0 %v1176
        %1375 = vmatprep.subr.mxu0 %v1183
        %1376 = vmatpush1.msra.mxu0 %v1182
        %1377 = vmatprep.subr.mxu0 %v1189
        %1378 = vmatpush1.msra.mxu0 %v1188
        %1379 = vmatprep.subr.mxu0 %v1195
        %1380 = vmatpush1.msra.mxu0 %v1194
        %1381 = vmatprep.subr.mxu0 %v1201
        %1382 = vmatpush1.msra.mxu0 %v1200
        %1383 = vmatprep.subr.mxu0 %v1207
        %1384 = vmatpush1.msra.mxu0 %v1206
        %1385 = vmatprep.subr.mxu0 %v1213
        %1386 = vmatpush1.msra.mxu0 %v1212
        %1387 = vmatprep.subr.mxu0 %v1219
        %1388 = vmatpush1.msra.mxu0 %v1218
        %1389 = vmatprep.subr.mxu0 %v1225
        %1390 = vmatpush1.msra.mxu0 %v1224
        %1391 = vmatprep.subr.mxu0 %v1231
        %1392 = vmatpush1.msra.mxu0 %v1230
        %1393 = vmatprep.subr.mxu0 %v1237
        %1394 = vmatpush1.msra.mxu0 %v1236
        %1395 = vmatprep.subr.mxu0 %v1243
        %1396 = vmatpush1.msra.mxu0 %v1242
        %1397 = vmatprep.subr.mxu0 %v1249
        %1398 = vmatpush1.msra.mxu0 %v1248
        %1399 = vmatprep.subr.mxu0 %v1255
        %1400 = vmatpush1.msra.mxu0 %v1254
        %1401 = vmatprep.subr.mxu0 %v1261
        %1402 = vmatpush1.msra.mxu0 %v1260
        %1403 = vmatprep.subr.mxu0 %v1267
        %1404 = vmatpush1.msra.mxu0 %v1266
        %1405 = vmatprep.subr.mxu0 0.0
        %1406 = vmatpush1.msra.mxu0 0.0
        %1407 = vmatprep.subr.mxu0 0.0
        %1408 = vmatpush1.msra.mxu0 0.0
        %1409 = vmatprep.subr.mxu0 0.0
        %1410 = vmatpush1.msra.mxu0 0.0
        %1411 = vmatprep.subr.mxu0 0.0
        %1412 = vmatpush1.msra.mxu0 0.0
        %1413 = vmatprep.subr.mxu0 0.0
        %1414 = vmatpush1.msra.mxu0 0.0
        %1415 = vmatprep.subr.mxu0 0.0
        %1416 = vmatpush1.msra.mxu0 0.0
        %1417 = vmatprep.subr.mxu0 0.0
        %1418 = vmatpush1.msra.mxu0 0.0
        %1419 = vmatprep.subr.mxu0 0.0
        %1420 = vmatpush1.msra.mxu0 0.0
        %1421 = vmatprep.subr.mxu0 0.0
        %1422 = vmatpush1.msra.mxu0 0.0
        %1423 = vmatprep.subr.mxu0 0.0
        %1424 = vmatpush1.msra.mxu0 0.0
        %1425 = vmatprep.subr.mxu0 0.0
        %1426 = vmatpush1.msra.mxu0 0.0
        %1427 = vmatprep.subr.mxu0 0.0
        %1428 = vmatpush1.msra.mxu0 0.0
        %1429 = vmatprep.subr.mxu0 0.0
        %1430 = vmatpush1.msra.mxu0 0.0
        %1431 = vmatprep.subr.mxu0 0.0
        %1432 = vmatpush1.msra.mxu0 0.0
        %1433 = vmatprep.subr.mxu0 0.0
        %1434 = vmatpush1.msra.mxu0 0.0
        %1435 = vmatprep.subr.mxu0 0.0
        %1436 = vmatpush1.msra.mxu0 0.0
        %1437 = vmatprep.mubr.f32.mxu0 0.0
        %1438 = vmatmul.mubr.f32.gmra.mrb[0].mxu0 %v1173
        %v1439 = vpop.f32.mrb[0].mxu0
        %v1440 = vadd.f32 %v1283, %v1439
        %v1441 = vpop.f32.mrb[0].mxu0
        %v1442 = vadd.f32 %v1287, %v1441
        %1443 = vdwg.mxu0
        %1444 = vmatprep.subr.mxu0 %v1179
        %1445 = vmatpush1.msra.mxu0 %v1178
        %1446 = vmatprep.subr.mxu0 %v1185
        %1447 = vmatpush1.msra.mxu0 %v1184
        %1448 = vmatprep.subr.mxu0 %v1191
        %1449 = vmatpush1.msra.mxu0 %v1190
        %1450 = vmatprep.subr.mxu0 %v1197
        %1451 = vmatpush1.msra.mxu0 %v1196
        %1452 = vmatprep.subr.mxu0 %v1203
        %1453 = vmatpush1.msra.mxu0 %v1202
        %1454 = vmatprep.subr.mxu0 %v1209
        %1455 = vmatpush1.msra.mxu0 %v1208
        %1456 = vmatprep.subr.mxu0 %v1215
        %1457 = vmatpush1.msra.mxu0 %v1214
        %1458 = vmatprep.subr.mxu0 %v1221
        %1459 = vmatpush1.msra.mxu0 %v1220
        %1460 = vmatprep.subr.mxu0 %v1227
        %1461 = vmatpush1.msra.mxu0 %v1226
        %1462 = vmatprep.subr.mxu0 %v1233
        %1463 = vmatpush1.msra.mxu0 %v1232
        %1464 = vmatprep.subr.mxu0 %v1239
        %1465 = vmatpush1.msra.mxu0 %v1238
        %1466 = vmatprep.subr.mxu0 %v1245
        %1467 = vmatpush1.msra.mxu0 %v1244
        %1468 = vmatprep.subr.mxu0 %v1251
        %1469 = vmatpush1.msra.mxu0 %v1250
        %1470 = vmatprep.subr.mxu0 %v1257
        %1471 = vmatpush1.msra.mxu0 %v1256
        %1472 = vmatprep.subr.mxu0 %v1263
        %1473 = vmatpush1.msra.mxu0 %v1262
        %1474 = vmatprep.subr.mxu0 %v1269
        %1475 = vmatpush1.msra.mxu0 %v1268
        %1476 = vmatprep.subr.mxu0 0.0
        %1477 = vmatpush1.msra.mxu0 0.0
        %1478 = vmatprep.subr.mxu0 0.0
        %1479 = vmatpush1.msra.mxu0 0.0
        %1480 = vmatprep.subr.mxu0 0.0
        %1481 = vmatpush1.msra.mxu0 0.0
        %1482 = vmatprep.subr.mxu0 0.0
        %1483 = vmatpush1.msra.mxu0 0.0
        %1484 = vmatprep.subr.mxu0 0.0
        %1485 = vmatpush1.msra.mxu0 0.0
        %1486 = vmatprep.subr.mxu0 0.0
        %1487 = vmatpush1.msra.mxu0 0.0
        %1488 = vmatprep.subr.mxu0 0.0
        %1489 = vmatpush1.msra.mxu0 0.0
        %1490 = vmatprep.subr.mxu0 0.0
        %1491 = vmatpush1.msra.mxu0 0.0
        %1492 = vmatprep.subr.mxu0 0.0
        %1493 = vmatpush1.msra.mxu0 0.0
        %1494 = vmatprep.subr.mxu0 0.0
        %1495 = vmatpush1.msra.mxu0 0.0
        %1496 = vmatprep.subr.mxu0 0.0
        %1497 = vmatpush1.msra.mxu0 0.0
        %1498 = vmatprep.subr.mxu0 0.0
        %1499 = vmatpush1.msra.mxu0 0.0
        %1500 = vmatprep.subr.mxu0 0.0
        %1501 = vmatpush1.msra.mxu0 0.0
        %1502 = vmatprep.subr.mxu0 0.0
        %1503 = vmatpush1.msra.mxu0 0.0
        %1504 = vmatprep.subr.mxu0 0.0
        %1505 = vmatpush1.msra.mxu0 0.0
        %1506 = vmatprep.subr.mxu0 0.0
        %1507 = vmatpush1.msra.mxu0 0.0
        %1508 = vmatprep.mubr.f32.mxu0 0.0
        %1509 = vmatmul.mubr.f32.gmra.mrb[0].mxu0 %v1173
        %v1510 = vpop.f32.mrb[0].mxu0
        %v1511 = vadd.f32 %v1291, %v1510
        %v1512 = vpop.f32.mrb[0].mxu0
        %v1513 = vadd.f32 %v1295, %v1512
        %1514 = vdwg.mxu0
        %v1515 = vld [vmem:[#allocation7] sm:$0xff]
        %v1516 = vld [vmem:[#allocation7 + $0x8] sm:$0xff]
        %v1517 = vld [vmem:[#allocation7 + $0x10] sm:$0xff]
        %v1518 = vld [vmem:[#allocation7 + $0x18] sm:$0xff]
        %v1519 = vld [vmem:[#allocation7 + $0x20] sm:$0xff]
        %v1520 = vld [vmem:[#allocation7 + $0x28] sm:$0xff]
        %v1521 = vld [vmem:[#allocation7 + $0x30] sm:$0xff]
        %v1522 = vld [vmem:[#allocation7 + $0x38] sm:$0xff]
        %v1523 = vld [vmem:[#allocation7 + $0x40] sm:$0xff]
        %v1524 = vld [vmem:[#allocation7 + $0x48] sm:$0xff]
        %v1525 = vld [vmem:[#allocation7 + $0x50] sm:$0xff]
        %v1526 = vld [vmem:[#allocation7 + $0x58] sm:$0xff]
        %v1527 = vld [vmem:[#allocation7 + $0x60] sm:$0xff]
        %v1528 = vld [vmem:[#allocation7 + $0x68] sm:$0xff]
        %v1529 = vld [vmem:[#allocation7 + $0x70] sm:$0xff]
        %v1530 = vld [vmem:[#allocation7 + $0x78] sm:$0xff]
        %v1531 = vld [vmem:[#allocation7 + $0x80] sm:$0xff]
        %v1532 = vld [vmem:[#allocation7 + $0x88] sm:$0xff]
        %v1533 = vld [vmem:[#allocation7 + $0x90] sm:$0xff]
        %v1534 = vld [vmem:[#allocation7 + $0x98] sm:$0xff]
        %v1535 = vld [vmem:[#allocation7 + $0xa0] sm:$0xff]
        %v1536 = vld [vmem:[#allocation7 + $0xa8] sm:$0xff]
        %v1537 = vld [vmem:[#allocation7 + $0xb0] sm:$0xff]
        %v1538 = vld [vmem:[#allocation7 + $0xb8] sm:$0xff]
        %v1539 = vld [vmem:[#allocation7 + $0xc0] sm:$0xff]
        %v1540 = vld [vmem:[#allocation7 + $0xc8] sm:$0xff]
        %v1541 = vld [vmem:[#allocation7 + $0xd0] sm:$0xff]
        %v1542 = vld [vmem:[#allocation7 + $0xd8] sm:$0xff]
        %v1543 = vld [vmem:[#allocation7 + $0xe0] sm:$0xff]
        %v1544 = vld [vmem:[#allocation7 + $0xe8] sm:$0xff]
        %v1545 = vld [vmem:[#allocation7 + $0xf0] sm:$0xff]
        %v1546 = vld [vmem:[#allocation7 + $0xf8] sm:$0xff]
        %v1547 = vld [vmem:[#allocation7 + $0x100] sm:$0xff]
        %v1548 = vld [vmem:[#allocation7 + $0x108] sm:$0xff]
        %v1549 = vld [vmem:[#allocation7 + $0x110] sm:$0xff]
        %v1550 = vld [vmem:[#allocation7 + $0x118] sm:$0xff]
        %v1551 = vld [vmem:[#allocation7 + $0x120] sm:$0xff]
        %v1552 = vld [vmem:[#allocation7 + $0x128] sm:$0xff]
        %v1553 = vld [vmem:[#allocation7 + $0x130] sm:$0xff]
        %v1554 = vld [vmem:[#allocation7 + $0x138] sm:$0xff]
        %v1555 = vld [vmem:[#allocation7 + $0x140] sm:$0xff]
        %v1556 = vld [vmem:[#allocation7 + $0x148] sm:$0xff]
        %v1557 = vld [vmem:[#allocation7 + $0x150] sm:$0xff]
        %v1558 = vld [vmem:[#allocation7 + $0x158] sm:$0xff]
        %v1559 = vld [vmem:[#allocation7 + $0x160] sm:$0xff]
        %v1560 = vld [vmem:[#allocation7 + $0x168] sm:$0xff]
        %v1561 = vld [vmem:[#allocation7 + $0x170] sm:$0xff]
        %v1562 = vld [vmem:[#allocation7 + $0x178] sm:$0xff]
        %v1563 = vld [vmem:[%s9] sm:$0x7]
        %v1565 = vlaneseq
        %v1566 = vshrl.u32 %v1565, 7
        %v1567 = vsub.s32 0, %v1566
        %v1568 = vrot.slane %v1563, %v1567
        %v1569 = vlaneseq
        %v1570 = vshrl.u32 %v1569, 7
        %v1571 = vsub.s32 1, %v1570
        %v1572 = vrot.slane %v1563, %v1571
        %v1573 = vlaneseq
        %v1574 = vshrl.u32 %v1573, 7
        %v1575 = vsub.s32 2, %v1574
        %v1576 = vrot.slane %v1563, %v1575
        %1580 = vmatprep.subr.mxu0 %v1516
        %1581 = vmatpush1.msra.mxu0 %v1515
        %1582 = vmatprep.subr.mxu0 %v1519
        %1583 = vmatpush1.msra.mxu0 %v1518
        %1584 = vmatprep.subr.mxu0 %v1522
        %1585 = vmatpush1.msra.mxu0 %v1521
        %1586 = vmatprep.subr.mxu0 %v1525
        %1587 = vmatpush1.msra.mxu0 %v1524
        %1588 = vmatprep.subr.mxu0 %v1528
        %1589 = vmatpush1.msra.mxu0 %v1527
        %1590 = vmatprep.subr.mxu0 %v1531
        %1591 = vmatpush1.msra.mxu0 %v1530
        %1592 = vmatprep.subr.mxu0 %v1534
        %1593 = vmatpush1.msra.mxu0 %v1533
        %1594 = vmatprep.subr.mxu0 %v1537
        %1595 = vmatpush1.msra.mxu0 %v1536
        %1596 = vmatprep.subr.mxu0 %v1540
        %1597 = vmatpush1.msra.mxu0 %v1539
        %1598 = vmatprep.subr.mxu0 %v1543
        %1599 = vmatpush1.msra.mxu0 %v1542
        %1600 = vmatprep.subr.mxu0 %v1546
        %1601 = vmatpush1.msra.mxu0 %v1545
        %1602 = vmatprep.subr.mxu0 %v1549
        %1603 = vmatpush1.msra.mxu0 %v1548
        %1604 = vmatprep.subr.mxu0 %v1552
        %1605 = vmatpush1.msra.mxu0 %v1551
        %1606 = vmatprep.subr.mxu0 %v1555
        %1607 = vmatpush1.msra.mxu0 %v1554
        %1608 = vmatprep.subr.mxu0 %v1558
        %1609 = vmatpush1.msra.mxu0 %v1557
        %1610 = vmatprep.subr.mxu0 %v1561
        %1611 = vmatpush1.msra.mxu0 %v1560
        %1612 = vmatprep.subr.mxu0 0.0
        %1613 = vmatpush1.msra.mxu0 0.0
        %1614 = vmatprep.subr.mxu0 0.0
        %1615 = vmatpush1.msra.mxu0 0.0
        %1616 = vmatprep.subr.mxu0 0.0
        %1617 = vmatpush1.msra.mxu0 0.0
        %1618 = vmatprep.subr.mxu0 0.0
        %1619 = vmatpush1.msra.mxu0 0.0
        %1620 = vmatprep.subr.mxu0 0.0
        %1621 = vmatpush1.msra.mxu0 0.0
        %1622 = vmatprep.subr.mxu0 0.0
        %1623 = vmatpush1.msra.mxu0 0.0
        %1624 = vmatprep.subr.mxu0 0.0
        %1625 = vmatpush1.msra.mxu0 0.0
        %1626 = vmatprep.subr.mxu0 0.0
        %1627 = vmatpush1.msra.mxu0 0.0
        %1628 = vmatprep.subr.mxu0 0.0
        %1629 = vmatpush1.msra.mxu0 0.0
        %1630 = vmatprep.subr.mxu0 0.0
        %1631 = vmatpush1.msra.mxu0 0.0
        %1632 = vmatprep.subr.mxu0 0.0
        %1633 = vmatpush1.msra.mxu0 0.0
        %1634 = vmatprep.subr.mxu0 0.0
        %1635 = vmatpush1.msra.mxu0 0.0
        %1636 = vmatprep.subr.mxu0 0.0
        %1637 = vmatpush1.msra.mxu0 0.0
        %1638 = vmatprep.subr.mxu0 0.0
        %1639 = vmatpush1.msra.mxu0 0.0
        %1640 = vmatprep.subr.mxu0 0.0
        %1641 = vmatpush1.msra.mxu0 0.0
        %1642 = vmatprep.subr.mxu0 0.0
        %1643 = vmatpush1.msra.mxu0 0.0
        %1644 = vmatprep.mubr.f32.mxu0 0.0
        %1645 = vmatmul.mubr.f32.gmra.mrb[0].mxu0 %v1165
        %v1646 = vpop.f32.mrb[0].mxu0
        %v1647 = vadd.f32 %v1568, %v1646
        %v1648 = vpop.f32.mrb[0].mxu0
        %v1649 = vadd.f32 %v1572, %v1648
        %1650 = vdwg.mxu0
        %1651 = vmatprep.subr.mxu0 0.0
        %1652 = vmatpush1.msra.mxu0 %v1517
        %1653 = vmatprep.subr.mxu0 0.0
        %1654 = vmatpush1.msra.mxu0 %v1520
        %1655 = vmatprep.subr.mxu0 0.0
        %1656 = vmatpush1.msra.mxu0 %v1523
        %1657 = vmatprep.subr.mxu0 0.0
        %1658 = vmatpush1.msra.mxu0 %v1526
        %1659 = vmatprep.subr.mxu0 0.0
        %1660 = vmatpush1.msra.mxu0 %v1529
        %1661 = vmatprep.subr.mxu0 0.0
        %1662 = vmatpush1.msra.mxu0 %v1532
        %1663 = vmatprep.subr.mxu0 0.0
        %1664 = vmatpush1.msra.mxu0 %v1535
        %1665 = vmatprep.subr.mxu0 0.0
        %1666 = vmatpush1.msra.mxu0 %v1538
        %1667 = vmatprep.subr.mxu0 0.0
        %1668 = vmatpush1.msra.mxu0 %v1541
        %1669 = vmatprep.subr.mxu0 0.0
        %1670 = vmatpush1.msra.mxu0 %v1544
        %1671 = vmatprep.subr.mxu0 0.0
        %1672 = vmatpush1.msra.mxu0 %v1547
        %1673 = vmatprep.subr.mxu0 0.0
        %1674 = vmatpush1.msra.mxu0 %v1550
        %1675 = vmatprep.subr.mxu0 0.0
        %1676 = vmatpush1.msra.mxu0 %v1553
        %1677 = vmatprep.subr.mxu0 0.0
        %1678 = vmatpush1.msra.mxu0 %v1556
        %1679 = vmatprep.subr.mxu0 0.0
        %1680 = vmatpush1.msra.mxu0 %v1559
        %1681 = vmatprep.subr.mxu0 0.0
        %1682 = vmatpush1.msra.mxu0 %v1562
        %1683 = vmatprep.subr.mxu0 0.0
        %1684 = vmatpush1.msra.mxu0 0.0
        %1685 = vmatprep.subr.mxu0 0.0
        %1686 = vmatpush1.msra.mxu0 0.0
        %1687 = vmatprep.subr.mxu0 0.0
        %1688 = vmatpush1.msra.mxu0 0.0
        %1689 = vmatprep.subr.mxu0 0.0
        %1690 = vmatpush1.msra.mxu0 0.0
        %1691 = vmatprep.subr.mxu0 0.0
        %1692 = vmatpush1.msra.mxu0 0.0
        %1693 = vmatprep.subr.mxu0 0.0
        %1694 = vmatpush1.msra.mxu0 0.0
        %1695 = vmatprep.subr.mxu0 0.0
        %1696 = vmatpush1.msra.mxu0 0.0
        %1697 = vmatprep.subr.mxu0 0.0
        %1698 = vmatpush1.msra.mxu0 0.0
        %1699 = vmatprep.subr.mxu0 0.0
        %1700 = vmatpush1.msra.mxu0 0.0
        %1701 = vmatprep.subr.mxu0 0.0
        %1702 = vmatpush1.msra.mxu0 0.0
        %1703 = vmatprep.subr.mxu0 0.0
        %1704 = vmatpush1.msra.mxu0 0.0
        %1705 = vmatprep.subr.mxu0 0.0
        %1706 = vmatpush1.msra.mxu0 0.0
        %1707 = vmatprep.subr.mxu0 0.0
        %1708 = vmatpush1.msra.mxu0 0.0
        %1709 = vmatprep.subr.mxu0 0.0
        %1710 = vmatpush1.msra.mxu0 0.0
        %1711 = vmatprep.subr.mxu0 0.0
        %1712 = vmatpush1.msra.mxu0 0.0
        %1713 = vmatprep.subr.mxu0 0.0
        %1714 = vmatpush1.msra.mxu0 0.0
        %1715 = vmatprep.mubr.f32.mxu0 0.0
        %1716 = vmatmul.mubr.f32.gmra.mrb[0].mxu0 %v1165
        %v1717 = vpop.f32.mrb[0].mxu0
        %v1718 = vadd.f32 %v1576, %v1717
        %v1719 = vpop.f32.mrb[0].mxu0
        %1720 = vdwg.mxu0
        %v1721 = vadd.f32 %v1647, %v1369
        %v1722 = vxor.u32 %v1721, 2147483648
        %v1723 = vmul.f32 %v1722, 1.442695
        %v1724 = vpow.pop %v1723
        %v1725 = vadd.f32 %v1724, 1.0
        %v1726 = vrcp.pop %v1725
        %v1727 = vmul.f32 1.0, %v1726
        %v1728 = vadd.f32 %v1649, %v1371
        %v1729 = vxor.u32 %v1728, 2147483648
        %v1730 = vmul.f32 %v1729, 1.442695
        %v1731 = vpow.pop %v1730
        %v1732 = vadd.f32 %v1731, 1.0
        %v1733 = vrcp.pop %v1732
        %v1734 = vmul.f32 1.0, %v1733
        %v1735 = vmul.f32 %v1727, %v1440
        %v1736 = vadd.f32 %v1718, %v1735
        %v1737 = vtanh.pop %v1736
        %v1738 = vsub.f32 1.0, %v1734
        %v1739 = vmul.f32 %v1738, %v1737
        %v1740 = vmul.f32 %v1734, %v1173
        %v1741 = vadd.f32 %v1739, %v1740
        %v1742 = vld [vmem:[%s12] sm:$0xff]
        %v1743 = vld [vmem:[%s12 + $0x8] sm:$0xff]
        %v1744 = vld [vmem:[%s12 + $0x10] sm:$0xff]
        %v1745 = vld [vmem:[%s12 + $0x18] sm:$0xff]
        %v1746 = vld [vmem:[%s12 + $0x20] sm:$0xff]
        %v1747 = vld [vmem:[%s12 + $0x28] sm:$0xff]
        %v1748 = vld [vmem:[%s12 + $0x30] sm:$0xff]
        %v1749 = vld [vmem:[%s12 + $0x38] sm:$0xff]
        %v1750 = vld [vmem:[%s12 + $0x40] sm:$0xff]
        %v1751 = vld [vmem:[%s12 + $0x48] sm:$0xff]
        %v1752 = vld [vmem:[%s12 + $0x50] sm:$0xff]
        %v1753 = vld [vmem:[%s12 + $0x58] sm:$0xff]
        %v1754 = vld [vmem:[%s12 + $0x60] sm:$0xff]
        %v1755 = vld [vmem:[%s12 + $0x68] sm:$0xff]
        %v1756 = vld [vmem:[%s12 + $0x70] sm:$0xff]
        %v1757 = vld [vmem:[%s12 + $0x78] sm:$0xff]
        %v1758 = vld [vmem:[%s13] sm:$0x1]
        %v1760 = vlaneseq
        %v1761 = vshrl.u32 %v1760, 7
        %v1762 = vsub.s32 0, %v1761
        %v1763 = vrot.slane %v1758, %v1762
        %1765 = vmatprep.subr.mxu0 0.0
        %1766 = vmatpush1.msra.mxu0 %v1742
        %1767 = vmatprep.subr.mxu0 0.0
        %1768 = vmatpush1.msra.mxu0 %v1743
        %1769 = vmatprep.subr.mxu0 0.0
        %1770 = vmatpush1.msra.mxu0 %v1744
        %1771 = vmatprep.subr.mxu0 0.0
        %1772 = vmatpush1.msra.mxu0 %v1745
        %1773 = vmatprep.subr.mxu0 0.0
        %1774 = vmatpush1.msra.mxu0 %v1746
        %1775 = vmatprep.subr.mxu0 0.0
        %1776 = vmatpush1.msra.mxu0 %v1747
        %1777 = vmatprep.subr.mxu0 0.0
        %1778 = vmatpush1.msra.mxu0 %v1748
        %1779 = vmatprep.subr.mxu0 0.0
        %1780 = vmatpush1.msra.mxu0 %v1749
        %1781 = vmatprep.subr.mxu0 0.0
        %1782 = vmatpush1.msra.mxu0 %v1750
        %1783 = vmatprep.subr.mxu0 0.0
        %1784 = vmatpush1.msra.mxu0 %v1751
        %1785 = vmatprep.subr.mxu0 0.0
        %1786 = vmatpush1.msra.mxu0 %v1752
        %1787 = vmatprep.subr.mxu0 0.0
        %1788 = vmatpush1.msra.mxu0 %v1753
        %1789 = vmatprep.subr.mxu0 0.0
        %1790 = vmatpush1.msra.mxu0 %v1754
        %1791 = vmatprep.subr.mxu0 0.0
        %1792 = vmatpush1.msra.mxu0 %v1755
        %1793 = vmatprep.subr.mxu0 0.0
        %1794 = vmatpush1.msra.mxu0 %v1756
        %1795 = vmatprep.subr.mxu0 0.0
        %1796 = vmatpush1.msra.mxu0 %v1757
        %1797 = vmatprep.subr.mxu0 0.0
        %1798 = vmatpush1.msra.mxu0 0.0
        %1799 = vmatprep.subr.mxu0 0.0
        %1800 = vmatpush1.msra.mxu0 0.0
        %1801 = vmatprep.subr.mxu0 0.0
        %1802 = vmatpush1.msra.mxu0 0.0
        %1803 = vmatprep.subr.mxu0 0.0
        %1804 = vmatpush1.msra.mxu0 0.0
        %1805 = vmatprep.subr.mxu0 0.0
        %1806 = vmatpush1.msra.mxu0 0.0
        %1807 = vmatprep.subr.mxu0 0.0
        %1808 = vmatpush1.msra.mxu0 0.0
        %1809 = vmatprep.subr.mxu0 0.0
        %1810 = vmatpush1.msra.mxu0 0.0
        %1811 = vmatprep.subr.mxu0 0.0
        %1812 = vmatpush1.msra.mxu0 0.0
        %1813 = vmatprep.subr.mxu0 0.0
        %1814 = vmatpush1.msra.mxu0 0.0
        %1815 = vmatprep.subr.mxu0 0.0
        %1816 = vmatpush1.msra.mxu0 0.0
        %1817 = vmatprep.subr.mxu0 0.0
        %1818 = vmatpush1.msra.mxu0 0.0
        %1819 = vmatprep.subr.mxu0 0.0
        %1820 = vmatpush1.msra.mxu0 0.0
        %1821 = vmatprep.subr.mxu0 0.0
        %1822 = vmatpush1.msra.mxu0 0.0
        %1823 = vmatprep.subr.mxu0 0.0
        %1824 = vmatpush1.msra.mxu0 0.0
        %1825 = vmatprep.subr.mxu0 0.0
        %1826 = vmatpush1.msra.mxu0 0.0
        %1827 = vmatprep.subr.mxu0 0.0
        %1828 = vmatpush1.msra.mxu0 0.0
        %1829 = vmatprep.mubr.f32.mxu0 0.0
        %1830 = vmatmul.mubr.f32.gmra.mrb[0].mxu0 %v1741
        %v1831 = vpop.f32.mrb[0].mxu0
        %v1832 = vadd.f32 %v1763, %v1831
        %v1833 = vpop.f32.mrb[0].mxu0
        %1834 = vdwg.mxu0
        %v1835 = vlaneseq
        %v1836 = vand.u32 %v1835, 127
        %vm1837 = vcmask 31744
        %v1838 = vsel %vm1837, %v1832, -inf
        %1839 = vmax.xlane.f32.xlu0 %v1838
        %v1840 = vpop.xlane.xlu0 %1839
        %vm1841 = vcmp.ge.f32.partialorder %v1832, %v1840
        %v1842 = vsel %vm1841, %v1836, 4
        %v1843 = vsel %vm1837, %v1842, 2147483647
        %v1844 = vand.u32 %v1843, 65535
        %v1845 = vshra.s32 %v1843, 16
        %v1846 = vcvt.s32.f32 %v1844
        %v1847 = vcvt.s32.f32 %v1845
        %1848 = vmin.xlane.f32.xlu0 %v1847
        %v1849 = vpop.xlane.xlu0 %1848
        %vm1850 = vcmp.eq.f32.partialorder %v1847, %v1849
        %v1851 = vsel %vm1850, %v1846, inf
        %1852 = vmin.xlane.f32.xlu0 %v1851
        %v1853 = vpop.xlane.xlu0 %1852
        %v1854 = vcvt.f32.s32 %v1853
        %v1855 = vcvt.f32.s32 %v1849
        %v1856 = vshll.u32 %v1855, 16
        %v1857 = vadd.s32 %v1856, %v1854
        %v1858 = vsub.f32 %v1832, %v1840
        %v1859 = vmul.f32 %v1858, 1.442695
        %v1860 = vpow.pop %v1859
        %v1861 = vsel %vm1837, %v1860, 0.0
        %1862 = vadd.xlane.f32.xlu0 %v1861
        %v1863 = vpop.xlane.xlu0 %1862
        %v1864 = vlog2.pop %v1863
        %v1865 = vmul.f32 %v1864, 0.6931472
        %v1866 = vadd.f32 %v1840, %v1865
        %vm1867 = vcmp.eq.s32.totalorder %v1836, %v1857
        %v1868 = vsub.f32 %v1832, %v1866
        %v1869 = vsel %vm1867, %v1868, 0.0
        %v1870 = vsel %vm1837, %v1869, 0.0
        %1871 = vadd.xlane.f32.xlu0 %v1870
        %v1872 = vpop.xlane.xlu0 %1871
        %v1873 = vcvt.s32.f32 %v1857
        %s1874 = scalar_lea.vmem [#allocation7], 384
        %v1875 = vld [vmem:[%s1874] sm:$0xff]
        %v1876 = vld [vmem:[%s1874 + $0x8] sm:$0xff]
        %v1877 = vld [vmem:[%s1874 + $0x10] sm:$0xff]
        %v1878 = vld [vmem:[%s1874 + $0x18] sm:$0xff]
        %v1879 = vld [vmem:[%s1874 + $0x20] sm:$0xff]
        %v1880 = vld [vmem:[%s1874 + $0x28] sm:$0xff]
        %v1881 = vld [vmem:[%s1874 + $0x30] sm:$0xff]
        %v1882 = vld [vmem:[%s1874 + $0x38] sm:$0xff]
        %v1883 = vld [vmem:[%s1874 + $0x40] sm:$0xff]
        %v1884 = vld [vmem:[%s1874 + $0x48] sm:$0xff]
        %v1885 = vld [vmem:[%s1874 + $0x50] sm:$0xff]
        %v1886 = vld [vmem:[%s1874 + $0x58] sm:$0xff]
        %v1887 = vld [vmem:[%s1874 + $0x60] sm:$0xff]
        %v1888 = vld [vmem:[%s1874 + $0x68] sm:$0xff]
        %v1889 = vld [vmem:[%s1874 + $0x70] sm:$0xff]
        %v1890 = vld [vmem:[%s1874 + $0x78] sm:$0xff]
        %v1891 = vld [vmem:[%s1874 + $0x80] sm:$0xff]
        %v1892 = vld [vmem:[%s1874 + $0x88] sm:$0xff]
        %v1893 = vld [vmem:[%s1874 + $0x90] sm:$0xff]
        %v1894 = vld [vmem:[%s1874 + $0x98] sm:$0xff]
        %v1895 = vld [vmem:[%s1874 + $0xa0] sm:$0xff]
        %v1896 = vld [vmem:[%s1874 + $0xa8] sm:$0xff]
        %v1897 = vld [vmem:[%s1874 + $0xb0] sm:$0xff]
        %v1898 = vld [vmem:[%s1874 + $0xb8] sm:$0xff]
        %v1899 = vld [vmem:[%s1874 + $0xc0] sm:$0xff]
        %v1900 = vld [vmem:[%s1874 + $0xc8] sm:$0xff]
        %v1901 = vld [vmem:[%s1874 + $0xd0] sm:$0xff]
        %v1902 = vld [vmem:[%s1874 + $0xd8] sm:$0xff]
        %v1903 = vld [vmem:[%s1874 + $0xe0] sm:$0xff]
        %v1904 = vld [vmem:[%s1874 + $0xe8] sm:$0xff]
        %v1905 = vld [vmem:[%s1874 + $0xf0] sm:$0xff]
        %v1906 = vld [vmem:[%s1874 + $0xf8] sm:$0xff]
        %v1907 = vld [vmem:[%s1874 + $0x100] sm:$0xff]
        %v1908 = vld [vmem:[%s1874 + $0x108] sm:$0xff]
        %v1909 = vld [vmem:[%s1874 + $0x110] sm:$0xff]
        %v1910 = vld [vmem:[%s1874 + $0x118] sm:$0xff]
        %v1911 = vld [vmem:[%s1874 + $0x120] sm:$0xff]
        %v1912 = vld [vmem:[%s1874 + $0x128] sm:$0xff]
        %v1913 = vld [vmem:[%s1874 + $0x130] sm:$0xff]
        %v1914 = vld [vmem:[%s1874 + $0x138] sm:$0xff]
        %v1915 = vld [vmem:[%s1874 + $0x140] sm:$0xff]
        %v1916 = vld [vmem:[%s1874 + $0x148] sm:$0xff]
        %v1917 = vld [vmem:[%s1874 + $0x150] sm:$0xff]
        %v1918 = vld [vmem:[%s1874 + $0x158] sm:$0xff]
        %v1919 = vld [vmem:[%s1874 + $0x160] sm:$0xff]
        %v1920 = vld [vmem:[%s1874 + $0x168] sm:$0xff]
        %v1921 = vld [vmem:[%s1874 + $0x170] sm:$0xff]
        %v1922 = vld [vmem:[%s1874 + $0x178] sm:$0xff]
        %s1923 = scalar_lea.vmem %s9, 3
        %v1924 = vld [vmem:[%s1923] sm:$0x7]
        %v1926 = vlaneseq
        %v1927 = vshrl.u32 %v1926, 7
        %v1928 = vsub.s32 0, %v1927
        %v1929 = vrot.slane %v1924, %v1928
        %v1930 = vlaneseq
        %v1931 = vshrl.u32 %v1930, 7
        %v1932 = vsub.s32 1, %v1931
        %v1933 = vrot.slane %v1924, %v1932
        %v1934 = vlaneseq
        %v1935 = vshrl.u32 %v1934, 7
        %v1936 = vsub.s32 2, %v1935
        %v1937 = vrot.slane %v1924, %v1936
        %1941 = vmatprep.subr.mxu0 %v1876
        %1942 = vmatpush1.msra.mxu0 %v1875
        %1943 = vmatprep.subr.mxu0 %v1879
        %1944 = vmatpush1.msra.mxu0 %v1878
        %1945 = vmatprep.subr.mxu0 %v1882
        %1946 = vmatpush1.msra.mxu0 %v1881
        %1947 = vmatprep.subr.mxu0 %v1885
        %1948 = vmatpush1.msra.mxu0 %v1884
        %1949 = vmatprep.subr.mxu0 %v1888
        %1950 = vmatpush1.msra.mxu0 %v1887
        %1951 = vmatprep.subr.mxu0 %v1891
        %1952 = vmatpush1.msra.mxu0 %v1890
        %1953 = vmatprep.subr.mxu0 %v1894
        %1954 = vmatpush1.msra.mxu0 %v1893
        %1955 = vmatprep.subr.mxu0 %v1897
        %1956 = vmatpush1.msra.mxu0 %v1896
        %1957 = vmatprep.subr.mxu0 %v1900
        %1958 = vmatpush1.msra.mxu0 %v1899
        %1959 = vmatprep.subr.mxu0 %v1903
        %1960 = vmatpush1.msra.mxu0 %v1902
        %1961 = vmatprep.subr.mxu0 %v1906
        %1962 = vmatpush1.msra.mxu0 %v1905
        %1963 = vmatprep.subr.mxu0 %v1909
        %1964 = vmatpush1.msra.mxu0 %v1908
        %1965 = vmatprep.subr.mxu0 %v1912
        %1966 = vmatpush1.msra.mxu0 %v1911
        %1967 = vmatprep.subr.mxu0 %v1915
        %1968 = vmatpush1.msra.mxu0 %v1914
        %1969 = vmatprep.subr.mxu0 %v1918
        %1970 = vmatpush1.msra.mxu0 %v1917
        %1971 = vmatprep.subr.mxu0 %v1921
        %1972 = vmatpush1.msra.mxu0 %v1920
        %1973 = vmatprep.subr.mxu0 0.0
        %1974 = vmatpush1.msra.mxu0 0.0
        %1975 = vmatprep.subr.mxu0 0.0
        %1976 = vmatpush1.msra.mxu0 0.0
        %1977 = vmatprep.subr.mxu0 0.0
        %1978 = vmatpush1.msra.mxu0 0.0
        %1979 = vmatprep.subr.mxu0 0.0
        %1980 = vmatpush1.msra.mxu0 0.0
        %1981 = vmatprep.subr.mxu0 0.0
        %1982 = vmatpush1.msra.mxu0 0.0
        %1983 = vmatprep.subr.mxu0 0.0
        %1984 = vmatpush1.msra.mxu0 0.0
        %1985 = vmatprep.subr.mxu0 0.0
        %1986 = vmatpush1.msra.mxu0 0.0
        %1987 = vmatprep.subr.mxu0 0.0
        %1988 = vmatpush1.msra.mxu0 0.0
        %1989 = vmatprep.subr.mxu0 0.0
        %1990 = vmatpush1.msra.mxu0 0.0
        %1991 = vmatprep.subr.mxu0 0.0
        %1992 = vmatpush1.msra.mxu0 0.0
        %1993 = vmatprep.subr.mxu0 0.0
        %1994 = vmatpush1.msra.mxu0 0.0
        %1995 = vmatprep.subr.mxu0 0.0
        %1996 = vmatpush1.msra.mxu0 0.0
        %1997 = vmatprep.subr.mxu0 0.0
        %1998 = vmatpush1.msra.mxu0 0.0
        %1999 = vmatprep.subr.mxu0 0.0
        %2000 = vmatpush1.msra.mxu0 0.0
        %2001 = vmatprep.subr.mxu0 0.0
        %2002 = vmatpush1.msra.mxu0 0.0
        %2003 = vmatprep.subr.mxu0 0.0
        %2004 = vmatpush1.msra.mxu0 0.0
        %2005 = vmatprep.mubr.f32.mxu0 0.0
        %2006 = vmatmul.mubr.f32.gmra.mrb[0].mxu0 %v1166
        %v2007 = vpop.f32.mrb[0].mxu0
        %v2008 = vadd.f32 %v1929, %v2007
        %v2009 = vpop.f32.mrb[0].mxu0
        %v2010 = vadd.f32 %v1933, %v2009
        %2011 = vdwg.mxu0
        %2012 = vmatprep.subr.mxu0 0.0
        %2013 = vmatpush1.msra.mxu0 %v1877
        %2014 = vmatprep.subr.mxu0 0.0
        %2015 = vmatpush1.msra.mxu0 %v1880
        %2016 = vmatprep.subr.mxu0 0.0
        %2017 = vmatpush1.msra.mxu0 %v1883
        %2018 = vmatprep.subr.mxu0 0.0
        %2019 = vmatpush1.msra.mxu0 %v1886
        %2020 = vmatprep.subr.mxu0 0.0
        %2021 = vmatpush1.msra.mxu0 %v1889
        %2022 = vmatprep.subr.mxu0 0.0
        %2023 = vmatpush1.msra.mxu0 %v1892
        %2024 = vmatprep.subr.mxu0 0.0
        %2025 = vmatpush1.msra.mxu0 %v1895
        %2026 = vmatprep.subr.mxu0 0.0
        %2027 = vmatpush1.msra.mxu0 %v1898
        %2028 = vmatprep.subr.mxu0 0.0
        %2029 = vmatpush1.msra.mxu0 %v1901
        %2030 = vmatprep.subr.mxu0 0.0
        %2031 = vmatpush1.msra.mxu0 %v1904
        %2032 = vmatprep.subr.mxu0 0.0
        %2033 = vmatpush1.msra.mxu0 %v1907
        %2034 = vmatprep.subr.mxu0 0.0
        %2035 = vmatpush1.msra.mxu0 %v1910
        %2036 = vmatprep.subr.mxu0 0.0
        %2037 = vmatpush1.msra.mxu0 %v1913
        %2038 = vmatprep.subr.mxu0 0.0
        %2039 = vmatpush1.msra.mxu0 %v1916
        %2040 = vmatprep.subr.mxu0 0.0
        %2041 = vmatpush1.msra.mxu0 %v1919
        %2042 = vmatprep.subr.mxu0 0.0
        %2043 = vmatpush1.msra.mxu0 %v1922
        %2044 = vmatprep.subr.mxu0 0.0
        %2045 = vmatpush1.msra.mxu0 0.0
        %2046 = vmatprep.subr.mxu0 0.0
        %2047 = vmatpush1.msra.mxu0 0.0
        %2048 = vmatprep.subr.mxu0 0.0
        %2049 = vmatpush1.msra.mxu0 0.0
        %2050 = vmatprep.subr.mxu0 0.0
        %2051 = vmatpush1.msra.mxu0 0.0
        %2052 = vmatprep.subr.mxu0 0.0
        %2053 = vmatpush1.msra.mxu0 0.0
        %2054 = vmatprep.subr.mxu0 0.0
        %2055 = vmatpush1.msra.mxu0 0.0
        %2056 = vmatprep.subr.mxu0 0.0
        %2057 = vmatpush1.msra.mxu0 0.0
        %2058 = vmatprep.subr.mxu0 0.0
        %2059 = vmatpush1.msra.mxu0 0.0
        %2060 = vmatprep.subr.mxu0 0.0
        %2061 = vmatpush1.msra.mxu0 0.0
        %2062 = vmatprep.subr.mxu0 0.0
        %2063 = vmatpush1.msra.mxu0 0.0
        %2064 = vmatprep.subr.mxu0 0.0
        %2065 = vmatpush1.msra.mxu0 0.0
        %2066 = vmatprep.subr.mxu0 0.0
        %2067 = vmatpush1.msra.mxu0 0.0
        %2068 = vmatprep.subr.mxu0 0.0
        %2069 = vmatpush1.msra.mxu0 0.0
        %2070 = vmatprep.subr.mxu0 0.0
        %2071 = vmatpush1.msra.mxu0 0.0
        %2072 = vmatprep.subr.mxu0 0.0
        %2073 = vmatpush1.msra.mxu0 0.0
        %2074 = vmatprep.subr.mxu0 0.0
        %2075 = vmatpush1.msra.mxu0 0.0
        %2076 = vmatprep.mubr.f32.mxu0 0.0
        %2077 = vmatmul.mubr.f32.gmra.mrb[0].mxu0 %v1166
        %v2078 = vpop.f32.mrb[0].mxu0
        %v2079 = vadd.f32 %v1937, %v2078
        %v2080 = vpop.f32.mrb[0].mxu0
        %2081 = vdwg.mxu0
        %v2082 = vadd.f32 %v2008, %v1442
        %v2083 = vxor.u32 %v2082, 2147483648
        %v2084 = vmul.f32 %v2083, 1.442695
        %v2085 = vpow.pop %v2084
        %v2086 = vadd.f32 %v2085, 1.0
        %v2087 = vrcp.pop %v2086
        %v2088 = vmul.f32 1.0, %v2087
        %v2089 = vadd.f32 %v2010, %v1511
        %v2090 = vxor.u32 %v2089, 2147483648
        %v2091 = vmul.f32 %v2090, 1.442695
        %v2092 = vpow.pop %v2091
        %v2093 = vadd.f32 %v2092, 1.0
        %v2094 = vrcp.pop %v2093
        %v2095 = vmul.f32 1.0, %v2094
        %v2096 = vmul.f32 %v2088, %v1513
        %v2097 = vadd.f32 %v2079, %v2096
        %v2098 = vtanh.pop %v2097
        %v2099 = vsub.f32 1.0, %v2095
        %v2100 = vmul.f32 %v2099, %v2098
        %v2101 = vmul.f32 %v2095, %v1173
        %v2102 = vadd.f32 %v2100, %v2101
        %s2103 = scalar_lea.vmem %s12, 128
        %v2104 = vld [vmem:[%s2103] sm:$0xff]
        %v2105 = vld [vmem:[%s2103 + $0x8] sm:$0xff]
        %v2106 = vld [vmem:[%s2103 + $0x10] sm:$0xff]
        %v2107 = vld [vmem:[%s2103 + $0x18] sm:$0xff]
        %v2108 = vld [vmem:[%s2103 + $0x20] sm:$0xff]
        %v2109 = vld [vmem:[%s2103 + $0x28] sm:$0xff]
        %v2110 = vld [vmem:[%s2103 + $0x30] sm:$0xff]
        %v2111 = vld [vmem:[%s2103 + $0x38] sm:$0xff]
        %v2112 = vld [vmem:[%s2103 + $0x40] sm:$0xff]
        %v2113 = vld [vmem:[%s2103 + $0x48] sm:$0xff]
        %v2114 = vld [vmem:[%s2103 + $0x50] sm:$0xff]
        %v2115 = vld [vmem:[%s2103 + $0x58] sm:$0xff]
        %v2116 = vld [vmem:[%s2103 + $0x60] sm:$0xff]
        %v2117 = vld [vmem:[%s2103 + $0x68] sm:$0xff]
        %v2118 = vld [vmem:[%s2103 + $0x70] sm:$0xff]
        %v2119 = vld [vmem:[%s2103 + $0x78] sm:$0xff]
        %s2120 = scalar_lea.vmem %s13, 1
        %v2121 = vld [vmem:[%s2120] sm:$0x1]
        %v2123 = vlaneseq
        %v2124 = vshrl.u32 %v2123, 7
        %v2125 = vsub.s32 0, %v2124
        %v2126 = vrot.slane %v2121, %v2125
        %2128 = vmatprep.subr.mxu0 0.0
        %2129 = vmatpush1.msra.mxu0 %v2104
        %2130 = vmatprep.subr.mxu0 0.0
        %2131 = vmatpush1.msra.mxu0 %v2105
        %2132 = vmatprep.subr.mxu0 0.0
        %2133 = vmatpush1.msra.mxu0 %v2106
        %2134 = vmatprep.subr.mxu0 0.0
        %2135 = vmatpush1.msra.mxu0 %v2107
        %2136 = vmatprep.subr.mxu0 0.0
        %2137 = vmatpush1.msra.mxu0 %v2108
        %2138 = vmatprep.subr.mxu0 0.0
        %2139 = vmatpush1.msra.mxu0 %v2109
        %2140 = vmatprep.subr.mxu0 0.0
        %2141 = vmatpush1.msra.mxu0 %v2110
        %2142 = vmatprep.subr.mxu0 0.0
        %2143 = vmatpush1.msra.mxu0 %v2111
        %2144 = vmatprep.subr.mxu0 0.0
        %2145 = vmatpush1.msra.mxu0 %v2112
        %2146 = vmatprep.subr.mxu0 0.0
        %2147 = vmatpush1.msra.mxu0 %v2113
        %2148 = vmatprep.subr.mxu0 0.0
        %2149 = vmatpush1.msra.mxu0 %v2114
        %2150 = vmatprep.subr.mxu0 0.0
        %2151 = vmatpush1.msra.mxu0 %v2115
        %2152 = vmatprep.subr.mxu0 0.0
        %2153 = vmatpush1.msra.mxu0 %v2116
        %2154 = vmatprep.subr.mxu0 0.0
        %2155 = vmatpush1.msra.mxu0 %v2117
        %2156 = vmatprep.subr.mxu0 0.0
        %2157 = vmatpush1.msra.mxu0 %v2118
        %2158 = vmatprep.subr.mxu0 0.0
        %2159 = vmatpush1.msra.mxu0 %v2119
        %2160 = vmatprep.subr.mxu0 0.0
        %2161 = vmatpush1.msra.mxu0 0.0
        %2162 = vmatprep.subr.mxu0 0.0
        %2163 = vmatpush1.msra.mxu0 0.0
        %2164 = vmatprep.subr.mxu0 0.0
        %2165 = vmatpush1.msra.mxu0 0.0
        %2166 = vmatprep.subr.mxu0 0.0
        %2167 = vmatpush1.msra.mxu0 0.0
        %2168 = vmatprep.subr.mxu0 0.0
        %2169 = vmatpush1.msra.mxu0 0.0
        %2170 = vmatprep.subr.mxu0 0.0
        %2171 = vmatpush1.msra.mxu0 0.0
        %2172 = vmatprep.subr.mxu0 0.0
        %2173 = vmatpush1.msra.mxu0 0.0
        %2174 = vmatprep.subr.mxu0 0.0
        %2175 = vmatpush1.msra.mxu0 0.0
        %2176 = vmatprep.subr.mxu0 0.0
        %2177 = vmatpush1.msra.mxu0 0.0
        %2178 = vmatprep.subr.mxu0 0.0
        %2179 = vmatpush1.msra.mxu0 0.0
        %2180 = vmatprep.subr.mxu0 0.0
        %2181 = vmatpush1.msra.mxu0 0.0
        %2182 = vmatprep.subr.mxu0 0.0
        %2183 = vmatpush1.msra.mxu0 0.0
        %2184 = vmatprep.subr.mxu0 0.0
        %2185 = vmatpush1.msra.mxu0 0.0
        %2186 = vmatprep.subr.mxu0 0.0
        %2187 = vmatpush1.msra.mxu0 0.0
        %2188 = vmatprep.subr.mxu0 0.0
        %2189 = vmatpush1.msra.mxu0 0.0
        %2190 = vmatprep.subr.mxu0 0.0
        %2191 = vmatpush1.msra.mxu0 0.0
        %2192 = vmatprep.mubr.f32.mxu0 0.0
        %2193 = vmatmul.mubr.f32.gmra.mrb[0].mxu0 %v2102
        %v2194 = vpop.f32.mrb[0].mxu0
        %v2195 = vadd.f32 %v2126, %v2194
        %v2196 = vpop.f32.mrb[0].mxu0
        %2197 = vdwg.mxu0
        %v2198 = vsel %vm1837, %v2195, -inf
        %2199 = vmax.xlane.f32.xlu0 %v2198
        %v2200 = vpop.xlane.xlu0 %2199
        %vm2201 = vcmp.ge.f32.partialorder %v2195, %v2200
        %v2202 = vsel %vm2201, %v1836, 4
        %v2203 = vsel %vm1837, %v2202, 2147483647
        %v2204 = vand.u32 %v2203, 65535
        %v2205 = vshra.s32 %v2203, 16
        %v2206 = vcvt.s32.f32 %v2204
        %v2207 = vcvt.s32.f32 %v2205
        %2208 = vmin.xlane.f32.xlu0 %v2207
        %v2209 = vpop.xlane.xlu0 %2208
        %vm2210 = vcmp.eq.f32.partialorder %v2207, %v2209
        %v2211 = vsel %vm2210, %v2206, inf
        %2212 = vmin.xlane.f32.xlu0 %v2211
        %v2213 = vpop.xlane.xlu0 %2212
        %v2214 = vcvt.f32.s32 %v2213
        %v2215 = vcvt.f32.s32 %v2209
        %v2216 = vshll.u32 %v2215, 16
        %v2217 = vadd.s32 %v2216, %v2214
        %v2218 = vsub.f32 %v2195, %v2200
        %v2219 = vmul.f32 %v2218, 1.442695
        %v2220 = vpow.pop %v2219
        %v2221 = vsel %vm1837, %v2220, 0.0
        %2222 = vadd.xlane.f32.xlu0 %v2221
        %v2223 = vpop.xlane.xlu0 %2222
        %v2224 = vlog2.pop %v2223
        %v2225 = vmul.f32 %v2224, 0.6931472
        %v2226 = vadd.f32 %v2200, %v2225
        %vm2227 = vcmp.eq.s32.totalorder %v1836, %v2217
        %v2228 = vsub.f32 %v2195, %v2226
        %v2229 = vsel %vm2227, %v2228, 0.0
        %v2230 = vsel %vm1837, %v2229, 0.0
        %2231 = vadd.xlane.f32.xlu0 %v2230
        %v2232 = vpop.xlane.xlu0 %2231
        %v2233 = vcvt.s32.f32 %v2217
        %vm2234 = vcmp.eq.s32.totalorder %v635, 0
        %2236 = vrot.lane.b32.xlu0 %v1832, 124
        %v2237 = vpop.permute.xlu0 %2236
        %2240 = vrot.lane.b32.xlu0 %v2195, 124
        %v2241 = vpop.permute.xlu0 %2240
        %v2243 = vsel %vm2234, %v2237, %v2241
        %v2244 = vsel %vm2234, %v1873, %v2233
        %v2245 = vsel %vm2234, %v1872, %v2232
        %v2246 = vsel %vm2234, 1, 0
        %2247 = vset.pattern.permute.xlu0 0
        %2248 = vperm.xlu0 %2247, %v2246
        %v2249 = vpop.permute.xlu0 %2248
        %vm2250 = vcmp.eq.s32.totalorder %v2249, 1
        %v2251 = vsel %vm2250, %v1741, %v2102
        %2252 = vst [vmem:[%s617] sm:$0xff] %v2251
        %vm2253 = vcmp.eq.s32.totalorder %v1836, 0
        %v2254 = vsel %vm2253, 1, 0
        %v2255 = vcvt.s32.f32 %v2254
        %2257 = vset.pattern.permute.xlu0 0
        %2258 = vperm.xlu0 %2257, %v2243
        %v2259 = vpop.permute.xlu0 %2258
        %v2261 = vmul.f32 %v2259, %v2255
        %vm2262 = vcmp.eq.s32.totalorder %v1836, 1
        %v2263 = vsel %vm2262, 1, 0
        %v2264 = vcvt.s32.f32 %v2263
        %2266 = vset.pattern.permute.xlu0 0
        %2267 = vperm.xlu0 %2266, %v2245
        %v2268 = vpop.permute.xlu0 %2267
        %v2270 = vmul.f32 %v2268, %v2264
        %v2271 = vadd.f32 %v2261, %v2270
        %vm2272 = vcmp.eq.s32.totalorder %v1836, 2
        %v2273 = vsel %vm2272, 1, 0
        %v2274 = vcvt.s32.f32 %v2273
        %2276 = vset.pattern.permute.xlu0 0
        %2277 = vperm.xlu0 %2276, %v2244
        %v2278 = vpop.permute.xlu0 %2277
        %v2280 = vmul.f32 %v2278, %v2274
        %v2281 = vadd.f32 %v2271, %v2280
        %2282 = vst [vmem:[%s610] sm:$0xff] %v2281
        %s2283 = sand.u32 %s365, 1
        %s2284 = scalar_lea.sflag [#allocation4], %s2283
        %s2285 = sand.u32 %s365, 1
        %s2286 = smul.addr %s2285, 8
        %s2287 = scalar_lea.vmem [#allocation10], %s2286
        %s2288 = sand.u32 %s391, 1
        %s2289 = scalar_lea.sflag [#allocation12], %s2288
        %s2290 = sand.u32 %s391, 1
        %s2291 = smul.addr %s2290, 8
        %s2292 = scalar_lea.vmem [#allocation11], %s2291
        // Predicated region
        $region93: #{tpu_custom_call.1} parent=75 // pred_check
          %p2293 = pneg %p375
        $region94: #{tpu_custom_call.1} parent=75 // pred_check_branch
          %2295 = sbr.rel (%p2293) target = $region96
        $region95: #{tpu_custom_call.1} parent=75 // pred_region
          %s2297 = ssub.s32 128, 128
          %2298 = vsyncadd %s2284, %s2297
          %s2299 = smul.addr %s38, 128
          %s2300 = scalar_lea.hbm %s14, %s2299
          %s2302 = sshll.u32 %s2287, 4
          %s2303 = int_to_ptr.vmem [resolvable:$true] %s2302
          %2305 = dma.vmem_to_hbm [thread:$0]  %s2303, 128, %s2300, %s2284
        $region96: #{tpu_custom_call.1} parent=75 // pred_fallthru
          _
        // Predicated region
        $region97: #{tpu_custom_call.1} parent=75 // pred_check
          %p2306 = pneg %p401
        $region98: #{tpu_custom_call.1} parent=75 // pred_check_branch
          %2308 = sbr.rel (%p2306) target = $region100
        $region99: #{tpu_custom_call.1} parent=75 // pred_region
          %s2310 = ssub.s32 128, 128
          %2311 = vsyncadd %s2289, %s2310
          %s2312 = smul.addr %s38, 128
          %s2313 = scalar_lea.hbm %s15, %s2312
          %s2315 = sshll.u32 %s2292, 4
          %s2316 = int_to_ptr.vmem [resolvable:$true] %s2315
          %2318 = dma.vmem_to_hbm [thread:$0]  %s2316, 128, %s2313, %s2289
        $region100: #{tpu_custom_call.1} parent=75 // pred_fallthru
          _
      $region76: #{tpu_custom_call.1} parent=5 // pred_fallthru
        _
      %p2319 = scmp.le.s32.totalorder 2, %s33
      // Predicated region
      $region101: #{tpu_custom_call.1} parent=5 // pred_check
        %p2320 = pneg %p2319
      $region102: #{tpu_custom_call.1} parent=5 // pred_check_branch
        %2322 = sbr.rel (%p2320) target = $region104
      $region103: #{tpu_custom_call.1} parent=5 // pred_region
        %s2323 = ssub.s32 %s33, 2
        // Predicated region
        $region105: #{tpu_custom_call.1} parent=103 // pred_check
          %p2324 = pneg %p381
        $region106: #{tpu_custom_call.1} parent=103 // pred_check_branch
          %2326 = sbr.rel (%p2324) target = $region108
        $region107: #{tpu_custom_call.1} parent=103 // pred_region
          %s2327 = sand.u32 %s366, 1
          %s2328 = scalar_lea.sflag [#allocation4], %s2327
          %s2329 = sand.u32 %s366, 1
          %s2330 = smul.addr %s2329, 8
          %s2331 = scalar_lea.vmem [#allocation10], %s2330
          %2332 = dma.done %s2328, 128
        $region108: #{tpu_custom_call.1} parent=103 // pred_fallthru
          _
        // Predicated region
        $region109: #{tpu_custom_call.1} parent=103 // pred_check
          %p2333 = pneg %p407
        $region110: #{tpu_custom_call.1} parent=103 // pred_check_branch
          %2335 = sbr.rel (%p2333) target = $region112
        $region111: #{tpu_custom_call.1} parent=103 // pred_region
          %s2336 = sand.u32 %s392, 1
          %s2337 = scalar_lea.sflag [#allocation12], %s2336
          %s2338 = sand.u32 %s392, 1
          %s2339 = smul.addr %s2338, 8
          %s2340 = scalar_lea.vmem [#allocation11], %s2339
          %2341 = dma.done %s2337, 128
        $region112: #{tpu_custom_call.1} parent=103 // pred_fallthru
          _
      $region104: #{tpu_custom_call.1} parent=5 // pred_fallthru
        _
    $region6: #{tpu_custom_call.1} parent=1 // loop_footer
      %s37 = sadd.s32 1, %s33
    $region7: #{tpu_custom_call.1} parent=1 // loop_footer_branch
      %32 = sbr.rel target = $region3
    $region8: #{tpu_custom_call.1} parent=1 // loop_exit
      _
    %2342 = vsyncpa [#allocation3], 1
    %s2343 = scalar_lea.sflag [#allocation3], 1
    %2344 = vsyncpa %s2343, 1
    %2345 = vsyncpa [#allocation6], 1
    %2346 = vsyncpa [#allocation9], 1
    %2347 = vsyncpa [#allocation4], 1
    %s2348 = scalar_lea.sflag [#allocation4], 1
    %2349 = vsyncpa %s2348, 1
    %2350 = vsyncpa [#allocation12], 1
    %s2351 = scalar_lea.sflag [#allocation12], 1
    %2352 = vsyncpa %s2351, 1

</llo_original>
